<compile_context>
chip_gen: v6e
topology: v6e:2x2x1
jax: 0.10.0
libtpu: 0.0.40
codegen_flags: <defaults>
</compile_context>

<pallas_src>
import functools

import jax
import jax.numpy as jnp
from jax import lax
from jax.experimental import pallas as pl
from jax.experimental.pallas import tpu as pltpu


def _varnet_block_kernel(C, H, W,
                         x_ref, r_ref, mask_ref, dcw_ref,
                         qiwr_ref, qiwi_ref,
                         mihr_ref, mihi_ref, mihs_ref,
                         mfhr_ref, mfhi_ref, mfhs_ref,
                         pfwr_ref, pfwi_ref,
                         w1_ref, b1_ref, w2_ref, b2_ref,
                         out_ref):
    f32 = jnp.float32
    bf16 = jnp.bfloat16

    def dot(a, b):                       # 2-D MXU matmul: bf16 in, f32 accumulate
        return jnp.dot(a, b, preferred_element_type=f32)

    def bmm(a, b):                       # coil-batched (C, m, k) @ (C, k, n) -> (C, m, n)
        return lax.dot_general(a, b,
                               dimension_numbers=(((2,), (1,)), ((0,), (0,))),
                               preferred_element_type=f32)

    x = x_ref[0]                         # (C*H, 2W) f32, (re, im) interleaved on lanes
    r = r_ref[0]

    # ---- soft data consistency (elementwise, interleaved layout) ----
    dcw = dcw_ref[0]                     # scalar from SMEM
    scaled_mask = mask_ref[...] * dcw    # (1, 2W); mask value repeated for re/im
    sdc = (x - r) * scaled_mask          # broadcasts to (C*H, 2W)

    # ---- ifft2c, W axis: inverse DFT fused with the (re, im) de-interleave ----
    xb = x.astype(bf16)
    tr = dot(xb, qiwr_ref[...]).reshape(C, H, W)      # Re(X @ MiW^T)
    ti = dot(xb, qiwi_ref[...]).reshape(C, H, W)      # Im(X @ MiW^T)

    # ---- ifft2c, H axis: coil-batched complex matmul (3 real matmuls) ----
    mihr = jnp.broadcast_to(mihr_ref[...], (C, H, H))
    mihi = jnp.broadcast_to(mihi_ref[...], (C, H, H))
    mihs = jnp.broadcast_to(mihs_ref[...], (C, H, H))
    p1 = bmm(mihr, tr.astype(bf16))
    p2 = bmm(mihi, ti.astype(bf16))
    p3 = bmm(mihs, (tr + ti).astype(bf16))
    img_r = p1 - p2                                   # (C, H, W)
    img_i = p3 - p1 - p2

    # ---- regularizer: 2-layer 1x1 conv over the (re||im) coil channels ----
    feat = jnp.concatenate([img_r, img_i], axis=0).reshape(2 * C, H * W)
    h1 = jnp.maximum(dot(w1_ref[...], feat.astype(bf16)) + b1_ref[...], 0.0)
    y = dot(w2_ref[...], h1.astype(bf16)) + b2_ref[...]           # (2C, H*W)
    y = y.reshape(2 * C, H, W)
    yr = y[:C]
    yi = y[C:]

    # ---- fft2c, H axis: coil-batched complex matmul (3 real matmuls) ----
    mfhr = jnp.broadcast_to(mfhr_ref[...], (C, H, H))
    mfhi = jnp.broadcast_to(mfhi_ref[...], (C, H, H))
    mfhs = jnp.broadcast_to(mfhs_ref[...], (C, H, H))
    q1 = bmm(mfhr, yr.astype(bf16))
    q2 = bmm(mfhi, yi.astype(bf16))
    q3 = bmm(mfhs, (yr + yi).astype(bf16))
    u_r = (q1 - q2).reshape(C * H, W)
    u_i = (q3 - q1 - q2).reshape(C * H, W)

    # ---- fft2c, W axis: forward DFT fused with the (re, im) re-interleave ----
    k_int = dot(u_r.astype(bf16), pfwr_ref[...]) + dot(u_i.astype(bf16), pfwi_ref[...])

    # ---- out = current - soft_dc - fft2c(model(ifft2c(current))) ----
    out_ref[0] = (x - sdc - k_int).astype(out_ref.dtype)


def _centered_dft_matrix(n, inverse):
    """Matrix M s.t. M @ x = fftshift((i)fft(ifftshift(x), norm='ortho'))."""
    eye = jnp.eye(n, dtype=jnp.complex64)
    x = jnp.fft.ifftshift(eye, axes=0)
    x = (jnp.fft.ifft if inverse else jnp.fft.fft)(x, axis=0, norm="ortho")
    return jnp.fft.fftshift(x, axes=0)


def varnet_block(current_kspace, ref_kspace, mask, dc_weight, w1, b1, w2, b2):
    """Pallas implementation of VarNetBlock.forward (synthetic 1x1-conv regularizer).

    current_kspace, ref_kspace: (B, C, H, W, 2); mask: (W,) column sampling mask
    (broadcast over batch/coils/rows, as in fastMRI); dc_weight: (1,).
    """
    B, C, H, W, two = current_kspace.shape
    assert two == 2
    assert H % 8 == 0 and W % 8 == 0
    hidden = w1.shape[0]
    f32 = jnp.float32
    bf16 = jnp.bfloat16

    # Centered orthonormal (i)DFT matrices (glue, plain JAX).
    mih = _centered_dft_matrix(H, inverse=True)
    miw = _centered_dft_matrix(W, inverse=True)
    mfh = _centered_dft_matrix(H, inverse=False)
    mfw = _centered_dft_matrix(W, inverse=False)

    # W-axis right factors with the (re, im) interleave folded in:
    #   X_int @ qiw_r = Re(X @ MiW^T),   X_int @ qiw_i = Im(X @ MiW^T)
    niw = miw.T
    qiw_r = jnp.stack([niw.real, -niw.imag], axis=1).reshape(2 * W, W)
    qiw_i = jnp.stack([niw.imag, niw.real], axis=1).reshape(2 * W, W)
    #   U_r @ pfw_r + U_i @ pfw_i = interleave(Re(U @ MfW^T), Im(U @ MfW^T))
    nfw = mfw.T
    pfw_r = jnp.stack([nfw.real, nfw.imag], axis=2).reshape(W, 2 * W)
    pfw_i = jnp.stack([-nfw.imag, nfw.real], axis=2).reshape(W, 2 * W)

    # (B, C, H, W, 2) -> (B, C*H, 2W): pure metadata reshape, (re, im) on lanes.
    x_int = current_kspace.astype(f32).reshape(B, C * H, 2 * W)
    r_int = ref_kspace.astype(f32).reshape(B, C * H, 2 * W)
    mask2 = jnp.repeat(mask.astype(f32), 2)[None, :]              # (1, 2W)
    dcw = jnp.reshape(dc_weight.astype(f32), (1,))

    kspec = pl.BlockSpec((1, C * H, 2 * W), lambda b: (b, 0, 0))

    def const_spec(shape):
        # Constant operands: index map is constant across the grid (loaded once per
        # buffer).  They are only a few KB here, so default buffering is harmless.
        return pl.BlockSpec(shape, lambda b: (0,) * len(shape))

    in_specs = [
        kspec, kspec,
        const_spec((1, 2 * W)),
        pl.BlockSpec(memory_space=pltpu.MemorySpace.SMEM),        # dc_weight scalar
        const_spec((2 * W, W)), const_spec((2 * W, W)),
        const_spec((H, H)), const_spec((H, H)), const_spec((H, H)),
        const_spec((H, H)), const_spec((H, H)), const_spec((H, H)),
        const_spec((W, 2 * W)), const_spec((W, 2 * W)),
        const_spec((hidden, 2 * C)), const_spec((hidden, 1)),
        const_spec((2 * C, hidden)), const_spec((2 * C, 1)),
    ]

    cast = lambda a: a.astype(bf16)

    out = pl.pallas_call(
        functools.partial(_varnet_block_kernel, C, H, W),
        grid=(B,),
        in_specs=in_specs,
        out_specs=kspec,
        out_shape=jax.ShapeDtypeStruct((B, C * H, 2 * W), f32),
        compiler_params=pltpu.CompilerParams(
            dimension_semantics=("parallel",),
            vmem_limit_bytes=32 * 1024 * 1024),
    )(x_int, r_int, mask2, dcw,
      cast(qiw_r), cast(qiw_i),
      cast(mih.real), cast(mih.imag), cast(mih.real + mih.imag),
      cast(mfh.real), cast(mfh.imag), cast(mfh.real + mfh.imag),
      cast(pfw_r), cast(pfw_i),
      cast(w1), b1.astype(f32).reshape(hidden, 1),
      cast(w2), b2.astype(f32).reshape(2 * C, 1))

    # (B, C*H, 2W) -> (B, C, H, W, 2): free metadata reshape (no extra HBM pass).
    return out.reshape(B, C, H, W, 2)


def _reference(cur, ref, mask_w, dc_weight, w1, b1, w2, b2):
    """Pure-JAX reference of the same forward pass (uses jnp.fft)."""
    def ifft2c(x):
        return jnp.fft.fftshift(
            jnp.fft.ifft2(jnp.fft.ifftshift(x, axes=(-2, -1)),
                          axes=(-2, -1), norm="ortho"), axes=(-2, -1))

    def fft2c(x):
        return jnp.fft.fftshift(
            jnp.fft.fft2(jnp.fft.ifftshift(x, axes=(-2, -1)),
                         axes=(-2, -1), norm="ortho"), axes=(-2, -1))

    C = cur.shape[1]
    curc = cur[..., 0] + 1j * cur[..., 1]
    mask_b = mask_w[None, None, None, :, None]
    soft_dc = jnp.where(mask_b, cur - ref, 0.0) * dc_weight
    img = ifft2c(curc)
    feat = jnp.concatenate([img.real, img.imag], axis=1)          # (B, 2C, H, W)
    h = jax.nn.relu(jnp.einsum("oc,bchw->bohw", w1, feat) + b1[None, :, None, None])
    y = jnp.einsum("oc,bchw->bohw", w2, h) + b2[None, :, None, None]
    mimg = y[:, :C] + 1j * y[:, C:]
    mk = fft2c(mimg)
    model_term = jnp.stack([mk.real, mk.imag], axis=-1)
    return cur - soft_dc - model_term


if __name__ == "__main__":
    B, C, H, W, hidden = 2, 4, 16, 16, 8

    key = jax.random.PRNGKey(0)
    k1, k2, k3, k4, k5, k6, k7 = jax.random.split(key, 7)

    current_kspace = jax.random.normal(k1, (B, C, H, W, 2), jnp.float32)
    ref_kspace = jax.random.normal(k2, (B, C, H, W, 2), jnp.float32)
    mask = jax.random.bernoulli(k3, 0.5, (W,))      # fastMRI column sampling mask

    # Deterministic synthetic parameters (module __init__: dc_weight = ones(1);
    # the regularizer model's weights are synthesized here).
    w1 = 0.1 * jax.random.normal(k4, (hidden, 2 * C), jnp.float32)
    b1 = 0.05 * jax.random.normal(k5, (hidden,), jnp.float32)
    w2 = 0.1 * jax.random.normal(k6, (2 * C, hidden), jnp.float32)
    b2 = 0.05 * jax.random.normal(k7, (2 * C,), jnp.float32)
    dc_weight = jnp.ones((1,), jnp.float32)

    out = varnet_block(current_kspace, ref_kspace, mask, dc_weight, w1, b1, w2, b2)
    out = jax.block_until_ready(out)

    ref_out = _reference(current_kspace, ref_kspace, mask, dc_weight, w1, b1, w2, b2)
    err = float(jnp.max(jnp.abs(out - ref_out)))

    assert out.shape == (B, C, H, W, 2)
    assert err < 0.1, f"max abs error {err}"
    print("KERNEL_OK")
</pallas_src>

<mosaic_0001>
module attributes {stable_mosaic.version = 11 : i64} {
  func.func @_varnet_block_kernel(%arg0: i32, %arg1: memref<1x64x32xf32, #tpu.memory_space<vmem>>, %arg2: memref<1x64x32xf32, #tpu.memory_space<vmem>>, %arg3: memref<1x32xf32, #tpu.memory_space<vmem>>, %arg4: memref<1xf32, #tpu.memory_space<smem>>, %arg5: memref<32x16xbf16, #tpu.memory_space<vmem>>, %arg6: memref<32x16xbf16, #tpu.memory_space<vmem>>, %arg7: memref<16x16xbf16, #tpu.memory_space<vmem>>, %arg8: memref<16x16xbf16, #tpu.memory_space<vmem>>, %arg9: memref<16x16xbf16, #tpu.memory_space<vmem>>, %arg10: memref<16x16xbf16, #tpu.memory_space<vmem>>, %arg11: memref<16x16xbf16, #tpu.memory_space<vmem>>, %arg12: memref<16x16xbf16, #tpu.memory_space<vmem>>, %arg13: memref<16x32xbf16, #tpu.memory_space<vmem>>, %arg14: memref<16x32xbf16, #tpu.memory_space<vmem>>, %arg15: memref<8x8xbf16, #tpu.memory_space<vmem>>, %arg16: memref<8x1xf32, #tpu.memory_space<vmem>>, %arg17: memref<8x8xbf16, #tpu.memory_space<vmem>>, %arg18: memref<8x1xf32, #tpu.memory_space<vmem>>, %arg19: memref<1x64x32xf32, #tpu.memory_space<vmem>>) attributes {dimension_semantics = [#tpu.dimension_semantics<parallel>], iteration_bounds = array<i64: 2>, scalar_prefetch = 0 : i64, scratch_operands = 0 : i64, tpu.core_type = #tpu.core_type<tc>, window_params = [{transform_indices = @transform_0, window_bounds = array<i64: 1, 64, 32>}, {transform_indices = @transform_1, window_bounds = array<i64: 1, 64, 32>}, {pipeline_mode = #tpu.pipeline_mode<synchronous>, transform_indices = @transform_2, window_bounds = array<i64: 1, 32>}, {transform_indices = @transform_3, window_bounds = array<i64: 1>}, {pipeline_mode = #tpu.pipeline_mode<synchronous>, transform_indices = @transform_4, window_bounds = array<i64: 32, 16>}, {pipeline_mode = #tpu.pipeline_mode<synchronous>, transform_indices = @transform_5, window_bounds = array<i64: 32, 16>}, {pipeline_mode = #tpu.pipeline_mode<synchronous>, transform_indices = @transform_6, window_bounds = array<i64: 16, 16>}, {pipeline_mode = #tpu.pipeline_mode<synchronous>, transform_indices = @transform_7, window_bounds = array<i64: 16, 16>}, {pipeline_mode = #tpu.pipeline_mode<synchronous>, transform_indices = @transform_8, window_bounds = array<i64: 16, 16>}, {pipeline_mode = #tpu.pipeline_mode<synchronous>, transform_indices = @transform_9, window_bounds = array<i64: 16, 16>}, {pipeline_mode = #tpu.pipeline_mode<synchronous>, transform_indices = @transform_10, window_bounds = array<i64: 16, 16>}, {pipeline_mode = #tpu.pipeline_mode<synchronous>, transform_indices = @transform_11, window_bounds = array<i64: 16, 16>}, {pipeline_mode = #tpu.pipeline_mode<synchronous>, transform_indices = @transform_12, window_bounds = array<i64: 16, 32>}, {pipeline_mode = #tpu.pipeline_mode<synchronous>, transform_indices = @transform_13, window_bounds = array<i64: 16, 32>}, {pipeline_mode = #tpu.pipeline_mode<synchronous>, transform_indices = @transform_14, window_bounds = array<i64: 8, 8>}, {pipeline_mode = #tpu.pipeline_mode<synchronous>, transform_indices = @transform_15, window_bounds = array<i64: 8, 1>}, {pipeline_mode = #tpu.pipeline_mode<synchronous>, transform_indices = @transform_16, window_bounds = array<i64: 8, 8>}, {pipeline_mode = #tpu.pipeline_mode<synchronous>, transform_indices = @transform_17, window_bounds = array<i64: 8, 1>}, {transform_indices = @transform_18, window_bounds = array<i64: 1, 64, 32>}]} {
    %c0 = arith.constant 0 : index
    %c0_0 = arith.constant 0 : index
    %c0_1 = arith.constant 0 : index
    %0 = vector.load %arg1[%c0, %c0_0, %c0_1] : memref<1x64x32xf32, #tpu.memory_space<vmem>>, vector<1x64x32xf32>
    %1 = vector.shape_cast %0 : vector<1x64x32xf32> to vector<64x32xf32>
    %c0_2 = arith.constant 0 : index
    %c0_3 = arith.constant 0 : index
    %c0_4 = arith.constant 0 : index
    %2 = vector.load %arg2[%c0_2, %c0_3, %c0_4] : memref<1x64x32xf32, #tpu.memory_space<vmem>>, vector<1x64x32xf32>
    %3 = vector.shape_cast %2 : vector<1x64x32xf32> to vector<64x32xf32>
    %c0_5 = arith.constant 0 : index
    %4 = memref.load %arg4[%c0_5] : memref<1xf32, #tpu.memory_space<smem>>
    %c0_6 = arith.constant 0 : index
    %c0_7 = arith.constant 0 : index
    %5 = vector.load %arg3[%c0_6, %c0_7] : memref<1x32xf32, #tpu.memory_space<vmem>>, vector<1x32xf32>
    %6 = vector.broadcast %4 : f32 to vector<1x32xf32>
    %7 = arith.mulf %5, %6 : vector<1x32xf32>
    %8 = arith.subf %1, %3 : vector<64x32xf32>
    %9 = vector.broadcast %7 : vector<1x32xf32> to vector<64x32xf32>
    %10 = arith.mulf %8, %9 : vector<64x32xf32>
    %11 = arith.truncf %1 : vector<64x32xf32> to vector<64x32xbf16>
    %c0_8 = arith.constant 0 : index
    %c0_9 = arith.constant 0 : index
    %12 = vector.load %arg5[%c0_8, %c0_9] : memref<32x16xbf16, #tpu.memory_space<vmem>>, vector<32x16xbf16>
    %cst = arith.constant dense<0.000000e+00> : vector<64x16xf32>
    %13 = tpu.matmul %11, %12, %cst {dimension_numbers = #tpu.dot_dimension_numbers<[1], [0], [0], [1], [0, 0, 1, 1], [], []>} : vector<64x32xbf16>, vector<32x16xbf16>, vector<64x16xf32> -> vector<64x16xf32>
    %14 = vector.shape_cast %13 : vector<64x16xf32> to vector<4x16x16xf32>
    %c0_10 = arith.constant 0 : index
    %c0_11 = arith.constant 0 : index
    %15 = vector.load %arg6[%c0_10, %c0_11] : memref<32x16xbf16, #tpu.memory_space<vmem>>, vector<32x16xbf16>
    %cst_12 = arith.constant dense<0.000000e+00> : vector<64x16xf32>
    %16 = tpu.matmul %11, %15, %cst_12 {dimension_numbers = #tpu.dot_dimension_numbers<[1], [0], [0], [1], [0, 0, 1, 1], [], []>} : vector<64x32xbf16>, vector<32x16xbf16>, vector<64x16xf32> -> vector<64x16xf32>
    %17 = vector.shape_cast %16 : vector<64x16xf32> to vector<4x16x16xf32>
    %c0_13 = arith.constant 0 : index
    %c0_14 = arith.constant 0 : index
    %18 = vector.load %arg7[%c0_13, %c0_14] : memref<16x16xbf16, #tpu.memory_space<vmem>>, vector<16x16xbf16>
    %19 = vector.shape_cast %18 : vector<16x16xbf16> to vector<1x16x16xbf16>
    %20 = vector.broadcast %19 : vector<1x16x16xbf16> to vector<4x16x16xbf16>
    %c0_15 = arith.constant 0 : index
    %c0_16 = arith.constant 0 : index
    %21 = vector.load %arg8[%c0_15, %c0_16] : memref<16x16xbf16, #tpu.memory_space<vmem>>, vector<16x16xbf16>
    %22 = vector.shape_cast %21 : vector<16x16xbf16> to vector<1x16x16xbf16>
    %23 = vector.broadcast %22 : vector<1x16x16xbf16> to vector<4x16x16xbf16>
    %c0_17 = arith.constant 0 : index
    %c0_18 = arith.constant 0 : index
    %24 = vector.load %arg9[%c0_17, %c0_18] : memref<16x16xbf16, #tpu.memory_space<vmem>>, vector<16x16xbf16>
    %25 = vector.shape_cast %24 : vector<16x16xbf16> to vector<1x16x16xbf16>
    %26 = vector.broadcast %25 : vector<1x16x16xbf16> to vector<4x16x16xbf16>
    %27 = arith.truncf %14 : vector<4x16x16xf32> to vector<4x16x16xbf16>
    %cst_19 = arith.constant dense<0.000000e+00> : vector<4x16x16xf32>
    %28 = tpu.matmul %20, %27, %cst_19 {dimension_numbers = #tpu.dot_dimension_numbers<[2], [1], [1], [2], [0, 0, 0, 1, 1, 2], [0], [0]>} : vector<4x16x16xbf16>, vector<4x16x16xbf16>, vector<4x16x16xf32> -> vector<4x16x16xf32>
    %29 = arith.truncf %17 : vector<4x16x16xf32> to vector<4x16x16xbf16>
    %cst_20 = arith.constant dense<0.000000e+00> : vector<4x16x16xf32>
    %30 = tpu.matmul %23, %29, %cst_20 {dimension_numbers = #tpu.dot_dimension_numbers<[2], [1], [1], [2], [0, 0, 0, 1, 1, 2], [0], [0]>} : vector<4x16x16xbf16>, vector<4x16x16xbf16>, vector<4x16x16xf32> -> vector<4x16x16xf32>
    %31 = arith.addf %14, %17 : vector<4x16x16xf32>
    %32 = arith.truncf %31 : vector<4x16x16xf32> to vector<4x16x16xbf16>
    %cst_21 = arith.constant dense<0.000000e+00> : vector<4x16x16xf32>
    %33 = tpu.matmul %26, %32, %cst_21 {dimension_numbers = #tpu.dot_dimension_numbers<[2], [1], [1], [2], [0, 0, 0, 1, 1, 2], [0], [0]>} : vector<4x16x16xbf16>, vector<4x16x16xbf16>, vector<4x16x16xf32> -> vector<4x16x16xf32>
    %34 = arith.subf %28, %30 : vector<4x16x16xf32>
    %35 = arith.subf %33, %28 : vector<4x16x16xf32>
    %36 = arith.subf %35, %30 : vector<4x16x16xf32>
    %37 = tpu.concatenate %34, %36 in 0 : vector<4x16x16xf32>, vector<4x16x16xf32> -> vector<8x16x16xf32>
    %38 = vector.shape_cast %37 : vector<8x16x16xf32> to vector<8x256xf32>
    %c0_22 = arith.constant 0 : index
    %c0_23 = arith.constant 0 : index
    %39 = vector.load %arg15[%c0_22, %c0_23] : memref<8x8xbf16, #tpu.memory_space<vmem>>, vector<8x8xbf16>
    %40 = arith.truncf %38 : vector<8x256xf32> to vector<8x256xbf16>
    %cst_24 = arith.constant dense<0.000000e+00> : vector<8x256xf32>
    %41 = tpu.matmul %39, %40, %cst_24 {dimension_numbers = #tpu.dot_dimension_numbers<[1], [0], [0], [1], [0, 0, 1, 1], [], []>} : vector<8x8xbf16>, vector<8x256xbf16>, vector<8x256xf32> -> vector<8x256xf32>
    %c0_25 = arith.constant 0 : index
    %c0_26 = arith.constant 0 : index
    %42 = vector.load %arg16[%c0_25, %c0_26] : memref<8x1xf32, #tpu.memory_space<vmem>>, vector<8x1xf32>
    %43 = vector.broadcast %42 : vector<8x1xf32> to vector<8x256xf32>
    %44 = arith.addf %41, %43 : vector<8x256xf32>
    %cst_27 = arith.constant 0.000000e+00 : f32
    %45 = vector.broadcast %cst_27 : f32 to vector<8x256xf32>
    %46 = arith.maximumf %44, %45 : vector<8x256xf32>
    %c0_28 = arith.constant 0 : index
    %c0_29 = arith.constant 0 : index
    %47 = vector.load %arg17[%c0_28, %c0_29] : memref<8x8xbf16, #tpu.memory_space<vmem>>, vector<8x8xbf16>
    %48 = arith.truncf %46 : vector<8x256xf32> to vector<8x256xbf16>
    %cst_30 = arith.constant dense<0.000000e+00> : vector<8x256xf32>
    %49 = tpu.matmul %47, %48, %cst_30 {dimension_numbers = #tpu.dot_dimension_numbers<[1], [0], [0], [1], [0, 0, 1, 1], [], []>} : vector<8x8xbf16>, vector<8x256xbf16>, vector<8x256xf32> -> vector<8x256xf32>
    %c0_31 = arith.constant 0 : index
    %c0_32 = arith.constant 0 : index
    %50 = vector.load %arg18[%c0_31, %c0_32] : memref<8x1xf32, #tpu.memory_space<vmem>>, vector<8x1xf32>
    %51 = vector.broadcast %50 : vector<8x1xf32> to vector<8x256xf32>
    %52 = arith.addf %49, %51 : vector<8x256xf32>
    %53 = vector.shape_cast %52 : vector<8x256xf32> to vector<8x16x16xf32>
    %54 = vector.extract_strided_slice %53 {offsets = [0, 0, 0], sizes = [4, 16, 16], strides = [1, 1, 1]} : vector<8x16x16xf32> to vector<4x16x16xf32>
    %55 = vector.extract_strided_slice %53 {offsets = [4, 0, 0], sizes = [4, 16, 16], strides = [1, 1, 1]} : vector<8x16x16xf32> to vector<4x16x16xf32>
    %c0_33 = arith.constant 0 : index
    %c0_34 = arith.constant 0 : index
    %56 = vector.load %arg10[%c0_33, %c0_34] : memref<16x16xbf16, #tpu.memory_space<vmem>>, vector<16x16xbf16>
    %57 = vector.shape_cast %56 : vector<16x16xbf16> to vector<1x16x16xbf16>
    %58 = vector.broadcast %57 : vector<1x16x16xbf16> to vector<4x16x16xbf16>
    %c0_35 = arith.constant 0 : index
    %c0_36 = arith.constant 0 : index
    %59 = vector.load %arg11[%c0_35, %c0_36] : memref<16x16xbf16, #tpu.memory_space<vmem>>, vector<16x16xbf16>
    %60 = vector.shape_cast %59 : vector<16x16xbf16> to vector<1x16x16xbf16>
    %61 = vector.broadcast %60 : vector<1x16x16xbf16> to vector<4x16x16xbf16>
    %c0_37 = arith.constant 0 : index
    %c0_38 = arith.constant 0 : index
    %62 = vector.load %arg12[%c0_37, %c0_38] : memref<16x16xbf16, #tpu.memory_space<vmem>>, vector<16x16xbf16>
    %63 = vector.shape_cast %62 : vector<16x16xbf16> to vector<1x16x16xbf16>
    %64 = vector.broadcast %63 : vector<1x16x16xbf16> to vector<4x16x16xbf16>
    %65 = arith.truncf %54 : vector<4x16x16xf32> to vector<4x16x16xbf16>
    %cst_39 = arith.constant dense<0.000000e+00> : vector<4x16x16xf32>
    %66 = tpu.matmul %58, %65, %cst_39 {dimension_numbers = #tpu.dot_dimension_numbers<[2], [1], [1], [2], [0, 0, 0, 1, 1, 2], [0], [0]>} : vector<4x16x16xbf16>, vector<4x16x16xbf16>, vector<4x16x16xf32> -> vector<4x16x16xf32>
    %67 = arith.truncf %55 : vector<4x16x16xf32> to vector<4x16x16xbf16>
    %cst_40 = arith.constant dense<0.000000e+00> : vector<4x16x16xf32>
    %68 = tpu.matmul %61, %67, %cst_40 {dimension_numbers = #tpu.dot_dimension_numbers<[2], [1], [1], [2], [0, 0, 0, 1, 1, 2], [0], [0]>} : vector<4x16x16xbf16>, vector<4x16x16xbf16>, vector<4x16x16xf32> -> vector<4x16x16xf32>
    %69 = arith.addf %54, %55 : vector<4x16x16xf32>
    %70 = arith.truncf %69 : vector<4x16x16xf32> to vector<4x16x16xbf16>
    %cst_41 = arith.constant dense<0.000000e+00> : vector<4x16x16xf32>
    %71 = tpu.matmul %64, %70, %cst_41 {dimension_numbers = #tpu.dot_dimension_numbers<[2], [1], [1], [2], [0, 0, 0, 1, 1, 2], [0], [0]>} : vector<4x16x16xbf16>, vector<4x16x16xbf16>, vector<4x16x16xf32> -> vector<4x16x16xf32>
    %72 = arith.subf %66, %68 : vector<4x16x16xf32>
    %73 = vector.shape_cast %72 : vector<4x16x16xf32> to vector<64x16xf32>
    %74 = arith.subf %71, %66 : vector<4x16x16xf32>
    %75 = arith.subf %74, %68 : vector<4x16x16xf32>
    %76 = vector.shape_cast %75 : vector<4x16x16xf32> to vector<64x16xf32>
    %77 = arith.truncf %73 : vector<64x16xf32> to vector<64x16xbf16>
    %c0_42 = arith.constant 0 : index
    %c0_43 = arith.constant 0 : index
    %78 = vector.load %arg13[%c0_42, %c0_43] : memref<16x32xbf16, #tpu.memory_space<vmem>>, vector<16x32xbf16>
    %cst_44 = arith.constant dense<0.000000e+00> : vector<64x32xf32>
    %79 = tpu.matmul %77, %78, %cst_44 {dimension_numbers = #tpu.dot_dimension_numbers<[1], [0], [0], [1], [0, 0, 1, 1], [], []>} : vector<64x16xbf16>, vector<16x32xbf16>, vector<64x32xf32> -> vector<64x32xf32>
    %80 = arith.truncf %76 : vector<64x16xf32> to vector<64x16xbf16>
    %c0_45 = arith.constant 0 : index
    %c0_46 = arith.constant 0 : index
    %81 = vector.load %arg14[%c0_45, %c0_46] : memref<16x32xbf16, #tpu.memory_space<vmem>>, vector<16x32xbf16>
    %cst_47 = arith.constant dense<0.000000e+00> : vector<64x32xf32>
    %82 = tpu.matmul %80, %81, %cst_47 {dimension_numbers = #tpu.dot_dimension_numbers<[1], [0], [0], [1], [0, 0, 1, 1], [], []>} : vector<64x16xbf16>, vector<16x32xbf16>, vector<64x32xf32> -> vector<64x32xf32>
    %83 = arith.addf %79, %82 : vector<64x32xf32>
    %84 = arith.subf %1, %10 : vector<64x32xf32>
    %85 = arith.subf %84, %83 : vector<64x32xf32>
    %c0_48 = arith.constant 0 : index
    %c0_49 = arith.constant 0 : index
    %c0_50 = arith.constant 0 : index
    %86 = vector.load %arg19[%c0_48, %c0_49, %c0_50] : memref<1x64x32xf32, #tpu.memory_space<vmem>>, vector<1x64x32xf32>
    %87 = vector.shape_cast %86 : vector<1x64x32xf32> to vector<64x32xf32>
    %88 = vector.shape_cast %85 : vector<64x32xf32> to vector<1x64x32xf32>
    tpu.vector_store %arg19[%c0_48, %c0_49, %c0_50], %88 {strides = array<i32>} : memref<1x64x32xf32, #tpu.memory_space<vmem>>, vector<1x64x32xf32>,
    return
  }
  func.func @transform_0(%arg0: i32) -> (i32, i32, i32) {
    %c0_i32 = arith.constant 0 : i32
    %c0_i32_0 = arith.constant 0 : i32
    %c0_i32_1 = arith.constant 0 : i32
    return %arg0, %c0_i32, %c0_i32_0 : i32, i32, i32
  }
  func.func @transform_1(%arg0: i32) -> (i32, i32, i32) {
    %c0_i32 = arith.constant 0 : i32
    %c0_i32_0 = arith.constant 0 : i32
    %c0_i32_1 = arith.constant 0 : i32
    return %arg0, %c0_i32, %c0_i32_0 : i32, i32, i32
  }
  func.func @transform_2(%arg0: i32) -> (i32, i32) {
    %c0_i32 = arith.constant 0 : i32
    %c0_i32_0 = arith.constant 0 : i32
    %c0_i32_1 = arith.constant 0 : i32
    return %c0_i32, %c0_i32_0 : i32, i32
  }
  func.func @transform_3(%arg0: i32) -> i32 {
    %c0_i32 = arith.constant 0 : i32
    %c0_i32_0 = arith.constant 0 : i32
    return %c0_i32 : i32
  }
  func.func @transform_4(%arg0: i32) -> (i32, i32) {
    %c0_i32 = arith.constant 0 : i32
    %c0_i32_0 = arith.constant 0 : i32
    %c0_i32_1 = arith.constant 0 : i32
    return %c0_i32, %c0_i32_0 : i32, i32
  }
  func.func @transform_5(%arg0: i32) -> (i32, i32) {
    %c0_i32 = arith.constant 0 : i32
    %c0_i32_0 = arith.constant 0 : i32
    %c0_i32_1 = arith.constant 0 : i32
    return %c0_i32, %c0_i32_0 : i32, i32
  }
  func.func @transform_6(%arg0: i32) -> (i32, i32) {
    %c0_i32 = arith.constant 0 : i32
    %c0_i32_0 = arith.constant 0 : i32
    %c0_i32_1 = arith.constant 0 : i32
    return %c0_i32, %c0_i32_0 : i32, i32
  }
  func.func @transform_7(%arg0: i32) -> (i32, i32) {
    %c0_i32 = arith.constant 0 : i32
    %c0_i32_0 = arith.constant 0 : i32
    %c0_i32_1 = arith.constant 0 : i32
    return %c0_i32, %c0_i32_0 : i32, i32
  }
  func.func @transform_8(%arg0: i32) -> (i32, i32) {
    %c0_i32 = arith.constant 0 : i32
    %c0_i32_0 = arith.constant 0 : i32
    %c0_i32_1 = arith.constant 0 : i32
    return %c0_i32, %c0_i32_0 : i32, i32
  }
  func.func @transform_9(%arg0: i32) -> (i32, i32) {
    %c0_i32 = arith.constant 0 : i32
    %c0_i32_0 = arith.constant 0 : i32
    %c0_i32_1 = arith.constant 0 : i32
    return %c0_i32, %c0_i32_0 : i32, i32
  }
  func.func @transform_10(%arg0: i32) -> (i32, i32) {
    %c0_i32 = arith.constant 0 : i32
    %c0_i32_0 = arith.constant 0 : i32
    %c0_i32_1 = arith.constant 0 : i32
    return %c0_i32, %c0_i32_0 : i32, i32
  }
  func.func @transform_11(%arg0: i32) -> (i32, i32) {
    %c0_i32 = arith.constant 0 : i32
    %c0_i32_0 = arith.constant 0 : i32
    %c0_i32_1 = arith.constant 0 : i32
    return %c0_i32, %c0_i32_0 : i32, i32
  }
  func.func @transform_12(%arg0: i32) -> (i32, i32) {
    %c0_i32 = arith.constant 0 : i32
    %c0_i32_0 = arith.constant 0 : i32
    %c0_i32_1 = arith.constant 0 : i32
    return %c0_i32, %c0_i32_0 : i32, i32
  }
  func.func @transform_13(%arg0: i32) -> (i32, i32) {
    %c0_i32 = arith.constant 0 : i32
    %c0_i32_0 = arith.constant 0 : i32
    %c0_i32_1 = arith.constant 0 : i32
    return %c0_i32, %c0_i32_0 : i32, i32
  }
  func.func @transform_14(%arg0: i32) -> (i32, i32) {
    %c0_i32 = arith.constant 0 : i32
    %c0_i32_0 = arith.constant 0 : i32
    %c0_i32_1 = arith.constant 0 : i32
    return %c0_i32, %c0_i32_0 : i32, i32
  }
  func.func @transform_15(%arg0: i32) -> (i32, i32) {
    %c0_i32 = arith.constant 0 : i32
    %c0_i32_0 = arith.constant 0 : i32
    %c0_i32_1 = arith.constant 0 : i32
    return %c0_i32, %c0_i32_0 : i32, i32
  }
  func.func @transform_16(%arg0: i32) -> (i32, i32) {
    %c0_i32 = arith.constant 0 : i32
    %c0_i32_0 = arith.constant 0 : i32
    %c0_i32_1 = arith.constant 0 : i32
    return %c0_i32, %c0_i32_0 : i32, i32
  }
  func.func @transform_17(%arg0: i32) -> (i32, i32) {
    %c0_i32 = arith.constant 0 : i32
    %c0_i32_0 = arith.constant 0 : i32
    %c0_i32_1 = arith.constant 0 : i32
    return %c0_i32, %c0_i32_0 : i32, i32
  }
  func.func @transform_18(%arg0: i32) -> (i32, i32, i32) {
    %c0_i32 = arith.constant 0 : i32
    %c0_i32_0 = arith.constant 0 : i32
    %c0_i32_1 = arith.constant 0 : i32
    return %arg0, %c0_i32, %c0_i32_0 : i32, i32, i32
  }
}

</mosaic_0001>

<llo_original>
// kernel: tpu_custom_call.1
$region0: #{tpu_custom_call.1}
  #allocation0 [shape = 'u32[]', space=smem, size = 0x4, offset = 0x4, fixed_abs, tag = 'smem constant byte address 0x4 - core index']
  #allocation1 [shape = 'u32[144,128]{1,0:T(1,128)}', space=vmem, size = 0x12000, scoped, tag = 'internal scratch']
  #allocation2 [shape = 'f32[1]{0:T(128)S(6)}', space=smem, size = 0x200, scoped, tag = 'scoped memory for tpu_custom_call.1']
  %s0 = inlined_call_operand.vmem [shape: f32[2,64,32], index: 0, kind: input, shape index: {}]
  %s1 = inlined_call_operand.vmem [shape: f32[2,64,32], index: 1, kind: input, shape index: {}]
  %s2 = inlined_call_operand.vmem [shape: f32[1,32], index: 2, kind: input, shape index: {}]
  %s3 = inlined_call_operand.<no memory space> [shape: f32[1], index: 3, kind: input, shape index: {}]
  %s4 = inlined_call_operand.vmem [shape: bf16[32,16], index: 4, kind: input, shape index: {}]
  %s5 = inlined_call_operand.vmem [shape: bf16[32,16], index: 5, kind: input, shape index: {}]
  %s6 = inlined_call_operand.vmem [shape: bf16[16,16], index: 6, kind: input, shape index: {}]
  %s7 = inlined_call_operand.vmem [shape: bf16[16,16], index: 7, kind: input, shape index: {}]
  %s8 = inlined_call_operand.vmem [shape: bf16[16,16], index: 8, kind: input, shape index: {}]
  %s9 = inlined_call_operand.vmem [shape: bf16[16,16], index: 9, kind: input, shape index: {}]
  %s10 = inlined_call_operand.vmem [shape: bf16[16,16], index: 10, kind: input, shape index: {}]
  %s11 = inlined_call_operand.vmem [shape: bf16[16,16], index: 11, kind: input, shape index: {}]
  %s12 = inlined_call_operand.vmem [shape: bf16[16,32], index: 12, kind: input, shape index: {}]
  %s13 = inlined_call_operand.vmem [shape: bf16[16,32], index: 13, kind: input, shape index: {}]
  %s14 = inlined_call_operand.vmem [shape: bf16[8,8], index: 14, kind: input, shape index: {}]
  %s15 = inlined_call_operand.vmem [shape: f32[8,1], index: 15, kind: input, shape index: {}]
  %s16 = inlined_call_operand.vmem [shape: bf16[8,8], index: 16, kind: input, shape index: {}]
  %s17 = inlined_call_operand.vmem [shape: f32[8,1], index: 17, kind: input, shape index: {}]
  %s18 = inlined_call_operand.vmem [shape: f32[2,64,32], index: 18, kind: output, shape index: {}]
  %s19 = sld [smem:[#allocation0]]
  $region105: #{tpu_custom_call.1} parent=0
    _
  %s21 = ssub.s32 1, %s19
  %s22 = scalar_select 0, %s21, %s19
  %23 = sst [smem:[#allocation2]] %s3
  loop: start=0, step=1, limit=4
  $region2: #{tpu_custom_call.1} parent=0 // loop_pre_header
    _
  $region3: #{tpu_custom_call.1} parent=0 // loop_header
    %s25 = sphi 0, %s29
    %p26 = scmp.ge.s32.totalorder %s25, 4
    %s35 = sphi 0, %s37
    %s38 = sphi 0, %s35
    %s39 = sphi 0, %s38
    %s55 = sphi 0, %s39
    %s61 = sphi 0, %s63
    %s64 = sphi 0, %s61
    %s65 = sphi 0, %s64
    %s81 = sphi 0, %s65
    %s85 = sphi 0, %s85
    %s87 = sphi 0, %s85
    %s88 = sphi 0, %s87
    %s102 = sphi 0, %s88
    %s106 = sphi 0, %s106
    %s108 = sphi 0, %s106
    %s109 = sphi 0, %s108
    %s123 = sphi 0, %s109
    %s127 = sphi 0, %s127
    %s129 = sphi 0, %s127
    %s130 = sphi 0, %s129
    %s144 = sphi 0, %s130
    %s148 = sphi 0, %s148
    %s150 = sphi 0, %s148
    %s151 = sphi 0, %s150
    %s165 = sphi 0, %s151
    %s169 = sphi 0, %s169
    %s171 = sphi 0, %s169
    %s172 = sphi 0, %s171
    %s186 = sphi 0, %s172
    %s190 = sphi 0, %s190
    %s192 = sphi 0, %s190
    %s193 = sphi 0, %s192
    %s207 = sphi 0, %s193
    %s211 = sphi 0, %s211
    %s213 = sphi 0, %s211
    %s214 = sphi 0, %s213
    %s228 = sphi 0, %s214
    %s232 = sphi 0, %s232
    %s234 = sphi 0, %s232
    %s235 = sphi 0, %s234
    %s249 = sphi 0, %s235
    %s253 = sphi 0, %s253
    %s255 = sphi 0, %s253
    %s256 = sphi 0, %s255
    %s270 = sphi 0, %s256
    %s274 = sphi 0, %s274
    %s276 = sphi 0, %s274
    %s277 = sphi 0, %s276
    %s291 = sphi 0, %s277
    %s295 = sphi 0, %s295
    %s297 = sphi 0, %s295
    %s298 = sphi 0, %s297
    %s312 = sphi 0, %s298
    %s316 = sphi 0, %s316
    %s318 = sphi 0, %s316
    %s319 = sphi 0, %s318
    %s333 = sphi 0, %s319
    %s337 = sphi 0, %s337
    %s339 = sphi 0, %s337
    %s340 = sphi 0, %s339
    %s354 = sphi 0, %s340
    %s358 = sphi 0, %s358
    %s360 = sphi 0, %s358
    %s361 = sphi 0, %s360
    %s375 = sphi 0, %s361
    %s379 = sphi 0, %s379
    %s381 = sphi 0, %s379
    %s382 = sphi 0, %s381
    %s396 = sphi 0, %s382
    %s400 = sphi 0, %s400
    %s402 = sphi 0, %s400
    %s403 = sphi 0, %s402
    %s417 = sphi 0, %s403
    %s423 = sphi 0, %s425
    %s426 = sphi 0, %s423
    %s427 = sphi 0, %s426
    %s443 = sphi 0, %s427
  $region4: #{tpu_custom_call.1} parent=0 // loop_header_branch
    %28 = sbr.rel (%p26) target = $region8
  $region5: #{tpu_custom_call.1} parent=0 // loop_body
    %s30 = ssub.s32 %s25, 1
    %s31 = ssub.s32 %s25, 2
    %s32 = sadd.s32 %s25, 1
    %s33 = ssub.s32 %s25, %s32
    %p34 = scmp.eq.s32.totalorder %s33, 0
    %s36 = sadd.s32 %s35, 1
    %s37 = scalar_select %p34, %s35, %s36
    %p40 = pneg %p34
    %p41 = scmp.eq.s32.totalorder %s25, 1
    %p42 = por %p40, %p41
    %p43 = scmp.ne.s32.totalorder %s35, %s38
    %p44 = scmp.eq.s32.totalorder %s25, 0
    %p45 = por %p43, %p44
    %p46 = scmp.ne.s32.totalorder %s35, %s38
    %p47 = scmp.eq.s32.totalorder %s30, 1
    %p48 = por %p46, %p47
    %p49 = scmp.ne.s32.totalorder %s38, %s39
    %p50 = scmp.eq.s32.totalorder %s30, 0
    %p51 = por %p49, %p50
    %p52 = scmp.ne.s32.totalorder %s38, %s39
    %p53 = scmp.eq.s32.totalorder %s31, 1
    %p54 = por %p52, %p53
    %p56 = scmp.ne.s32.totalorder %s39, %s55
    %p57 = scmp.eq.s32.totalorder %s31, 0
    %p58 = por %p56, %p57
    %s59 = ssub.s32 %s25, %s32
    %p60 = scmp.eq.s32.totalorder %s59, 0
    %s62 = sadd.s32 %s61, 1
    %s63 = scalar_select %p60, %s61, %s62
    %p66 = pneg %p60
    %p67 = scmp.eq.s32.totalorder %s25, 1
    %p68 = por %p66, %p67
    %p69 = scmp.ne.s32.totalorder %s61, %s64
    %p70 = scmp.eq.s32.totalorder %s25, 0
    %p71 = por %p69, %p70
    %p72 = scmp.ne.s32.totalorder %s61, %s64
    %p73 = scmp.eq.s32.totalorder %s30, 1
    %p74 = por %p72, %p73
    %p75 = scmp.ne.s32.totalorder %s64, %s65
    %p76 = scmp.eq.s32.totalorder %s30, 0
    %p77 = por %p75, %p76
    %p78 = scmp.ne.s32.totalorder %s64, %s65
    %p79 = scmp.eq.s32.totalorder %s31, 1
    %p80 = por %p78, %p79
    %p82 = scmp.ne.s32.totalorder %s65, %s81
    %p83 = scmp.eq.s32.totalorder %s31, 0
    %p84 = por %p82, %p83
    %s86 = sadd.s32 %s85, 1
    %p89 = scmp.eq.s32.totalorder %s25, 1
    %p90 = scmp.ne.s32.totalorder %s85, %s87
    %p91 = scmp.eq.s32.totalorder %s25, 0
    %p92 = por %p90, %p91
    %p93 = scmp.ne.s32.totalorder %s85, %s87
    %p94 = scmp.eq.s32.totalorder %s30, 1
    %p95 = por %p93, %p94
    %p96 = scmp.ne.s32.totalorder %s87, %s88
    %p97 = scmp.eq.s32.totalorder %s30, 0
    %p98 = por %p96, %p97
    %p99 = scmp.ne.s32.totalorder %s87, %s88
    %p100 = scmp.eq.s32.totalorder %s31, 1
    %p101 = por %p99, %p100
    %p103 = scmp.ne.s32.totalorder %s88, %s102
    %p104 = scmp.eq.s32.totalorder %s31, 0
    %p105 = por %p103, %p104
    %s107 = sadd.s32 %s106, 1
    %p110 = scmp.eq.s32.totalorder %s25, 1
    %p111 = scmp.ne.s32.totalorder %s106, %s108
    %p112 = scmp.eq.s32.totalorder %s25, 0
    %p113 = por %p111, %p112
    %p114 = scmp.ne.s32.totalorder %s106, %s108
    %p115 = scmp.eq.s32.totalorder %s30, 1
    %p116 = por %p114, %p115
    %p117 = scmp.ne.s32.totalorder %s108, %s109
    %p118 = scmp.eq.s32.totalorder %s30, 0
    %p119 = por %p117, %p118
    %p120 = scmp.ne.s32.totalorder %s108, %s109
    %p121 = scmp.eq.s32.totalorder %s31, 1
    %p122 = por %p120, %p121
    %p124 = scmp.ne.s32.totalorder %s109, %s123
    %p125 = scmp.eq.s32.totalorder %s31, 0
    %p126 = por %p124, %p125
    %s128 = sadd.s32 %s127, 1
    %p131 = scmp.eq.s32.totalorder %s25, 1
    %p132 = scmp.ne.s32.totalorder %s127, %s129
    %p133 = scmp.eq.s32.totalorder %s25, 0
    %p134 = por %p132, %p133
    %p135 = scmp.ne.s32.totalorder %s127, %s129
    %p136 = scmp.eq.s32.totalorder %s30, 1
    %p137 = por %p135, %p136
    %p138 = scmp.ne.s32.totalorder %s129, %s130
    %p139 = scmp.eq.s32.totalorder %s30, 0
    %p140 = por %p138, %p139
    %p141 = scmp.ne.s32.totalorder %s129, %s130
    %p142 = scmp.eq.s32.totalorder %s31, 1
    %p143 = por %p141, %p142
    %p145 = scmp.ne.s32.totalorder %s130, %s144
    %p146 = scmp.eq.s32.totalorder %s31, 0
    %p147 = por %p145, %p146
    %s149 = sadd.s32 %s148, 1
    %p152 = scmp.eq.s32.totalorder %s25, 1
    %p153 = scmp.ne.s32.totalorder %s148, %s150
    %p154 = scmp.eq.s32.totalorder %s25, 0
    %p155 = por %p153, %p154
    %p156 = scmp.ne.s32.totalorder %s148, %s150
    %p157 = scmp.eq.s32.totalorder %s30, 1
    %p158 = por %p156, %p157
    %p159 = scmp.ne.s32.totalorder %s150, %s151
    %p160 = scmp.eq.s32.totalorder %s30, 0
    %p161 = por %p159, %p160
    %p162 = scmp.ne.s32.totalorder %s150, %s151
    %p163 = scmp.eq.s32.totalorder %s31, 1
    %p164 = por %p162, %p163
    %p166 = scmp.ne.s32.totalorder %s151, %s165
    %p167 = scmp.eq.s32.totalorder %s31, 0
    %p168 = por %p166, %p167
    %s170 = sadd.s32 %s169, 1
    %p173 = scmp.eq.s32.totalorder %s25, 1
    %p174 = scmp.ne.s32.totalorder %s169, %s171
    %p175 = scmp.eq.s32.totalorder %s25, 0
    %p176 = por %p174, %p175
    %p177 = scmp.ne.s32.totalorder %s169, %s171
    %p178 = scmp.eq.s32.totalorder %s30, 1
    %p179 = por %p177, %p178
    %p180 = scmp.ne.s32.totalorder %s171, %s172
    %p181 = scmp.eq.s32.totalorder %s30, 0
    %p182 = por %p180, %p181
    %p183 = scmp.ne.s32.totalorder %s171, %s172
    %p184 = scmp.eq.s32.totalorder %s31, 1
    %p185 = por %p183, %p184
    %p187 = scmp.ne.s32.totalorder %s172, %s186
    %p188 = scmp.eq.s32.totalorder %s31, 0
    %p189 = por %p187, %p188
    %s191 = sadd.s32 %s190, 1
    %p194 = scmp.eq.s32.totalorder %s25, 1
    %p195 = scmp.ne.s32.totalorder %s190, %s192
    %p196 = scmp.eq.s32.totalorder %s25, 0
    %p197 = por %p195, %p196
    %p198 = scmp.ne.s32.totalorder %s190, %s192
    %p199 = scmp.eq.s32.totalorder %s30, 1
    %p200 = por %p198, %p199
    %p201 = scmp.ne.s32.totalorder %s192, %s193
    %p202 = scmp.eq.s32.totalorder %s30, 0
    %p203 = por %p201, %p202
    %p204 = scmp.ne.s32.totalorder %s192, %s193
    %p205 = scmp.eq.s32.totalorder %s31, 1
    %p206 = por %p204, %p205
    %p208 = scmp.ne.s32.totalorder %s193, %s207
    %p209 = scmp.eq.s32.totalorder %s31, 0
    %p210 = por %p208, %p209
    %s212 = sadd.s32 %s211, 1
    %p215 = scmp.eq.s32.totalorder %s25, 1
    %p216 = scmp.ne.s32.totalorder %s211, %s213
    %p217 = scmp.eq.s32.totalorder %s25, 0
    %p218 = por %p216, %p217
    %p219 = scmp.ne.s32.totalorder %s211, %s213
    %p220 = scmp.eq.s32.totalorder %s30, 1
    %p221 = por %p219, %p220
    %p222 = scmp.ne.s32.totalorder %s213, %s214
    %p223 = scmp.eq.s32.totalorder %s30, 0
    %p224 = por %p222, %p223
    %p225 = scmp.ne.s32.totalorder %s213, %s214
    %p226 = scmp.eq.s32.totalorder %s31, 1
    %p227 = por %p225, %p226
    %p229 = scmp.ne.s32.totalorder %s214, %s228
    %p230 = scmp.eq.s32.totalorder %s31, 0
    %p231 = por %p229, %p230
    %s233 = sadd.s32 %s232, 1
    %p236 = scmp.eq.s32.totalorder %s25, 1
    %p237 = scmp.ne.s32.totalorder %s232, %s234
    %p238 = scmp.eq.s32.totalorder %s25, 0
    %p239 = por %p237, %p238
    %p240 = scmp.ne.s32.totalorder %s232, %s234
    %p241 = scmp.eq.s32.totalorder %s30, 1
    %p242 = por %p240, %p241
    %p243 = scmp.ne.s32.totalorder %s234, %s235
    %p244 = scmp.eq.s32.totalorder %s30, 0
    %p245 = por %p243, %p244
    %p246 = scmp.ne.s32.totalorder %s234, %s235
    %p247 = scmp.eq.s32.totalorder %s31, 1
    %p248 = por %p246, %p247
    %p250 = scmp.ne.s32.totalorder %s235, %s249
    %p251 = scmp.eq.s32.totalorder %s31, 0
    %p252 = por %p250, %p251
    %s254 = sadd.s32 %s253, 1
    %p257 = scmp.eq.s32.totalorder %s25, 1
    %p258 = scmp.ne.s32.totalorder %s253, %s255
    %p259 = scmp.eq.s32.totalorder %s25, 0
    %p260 = por %p258, %p259
    %p261 = scmp.ne.s32.totalorder %s253, %s255
    %p262 = scmp.eq.s32.totalorder %s30, 1
    %p263 = por %p261, %p262
    %p264 = scmp.ne.s32.totalorder %s255, %s256
    %p265 = scmp.eq.s32.totalorder %s30, 0
    %p266 = por %p264, %p265
    %p267 = scmp.ne.s32.totalorder %s255, %s256
    %p268 = scmp.eq.s32.totalorder %s31, 1
    %p269 = por %p267, %p268
    %p271 = scmp.ne.s32.totalorder %s256, %s270
    %p272 = scmp.eq.s32.totalorder %s31, 0
    %p273 = por %p271, %p272
    %s275 = sadd.s32 %s274, 1
    %p278 = scmp.eq.s32.totalorder %s25, 1
    %p279 = scmp.ne.s32.totalorder %s274, %s276
    %p280 = scmp.eq.s32.totalorder %s25, 0
    %p281 = por %p279, %p280
    %p282 = scmp.ne.s32.totalorder %s274, %s276
    %p283 = scmp.eq.s32.totalorder %s30, 1
    %p284 = por %p282, %p283
    %p285 = scmp.ne.s32.totalorder %s276, %s277
    %p286 = scmp.eq.s32.totalorder %s30, 0
    %p287 = por %p285, %p286
    %p288 = scmp.ne.s32.totalorder %s276, %s277
    %p289 = scmp.eq.s32.totalorder %s31, 1
    %p290 = por %p288, %p289
    %p292 = scmp.ne.s32.totalorder %s277, %s291
    %p293 = scmp.eq.s32.totalorder %s31, 0
    %p294 = por %p292, %p293
    %s296 = sadd.s32 %s295, 1
    %p299 = scmp.eq.s32.totalorder %s25, 1
    %p300 = scmp.ne.s32.totalorder %s295, %s297
    %p301 = scmp.eq.s32.totalorder %s25, 0
    %p302 = por %p300, %p301
    %p303 = scmp.ne.s32.totalorder %s295, %s297
    %p304 = scmp.eq.s32.totalorder %s30, 1
    %p305 = por %p303, %p304
    %p306 = scmp.ne.s32.totalorder %s297, %s298
    %p307 = scmp.eq.s32.totalorder %s30, 0
    %p308 = por %p306, %p307
    %p309 = scmp.ne.s32.totalorder %s297, %s298
    %p310 = scmp.eq.s32.totalorder %s31, 1
    %p311 = por %p309, %p310
    %p313 = scmp.ne.s32.totalorder %s298, %s312
    %p314 = scmp.eq.s32.totalorder %s31, 0
    %p315 = por %p313, %p314
    %s317 = sadd.s32 %s316, 1
    %p320 = scmp.eq.s32.totalorder %s25, 1
    %p321 = scmp.ne.s32.totalorder %s316, %s318
    %p322 = scmp.eq.s32.totalorder %s25, 0
    %p323 = por %p321, %p322
    %p324 = scmp.ne.s32.totalorder %s316, %s318
    %p325 = scmp.eq.s32.totalorder %s30, 1
    %p326 = por %p324, %p325
    %p327 = scmp.ne.s32.totalorder %s318, %s319
    %p328 = scmp.eq.s32.totalorder %s30, 0
    %p329 = por %p327, %p328
    %p330 = scmp.ne.s32.totalorder %s318, %s319
    %p331 = scmp.eq.s32.totalorder %s31, 1
    %p332 = por %p330, %p331
    %p334 = scmp.ne.s32.totalorder %s319, %s333
    %p335 = scmp.eq.s32.totalorder %s31, 0
    %p336 = por %p334, %p335
    %s338 = sadd.s32 %s337, 1
    %p341 = scmp.eq.s32.totalorder %s25, 1
    %p342 = scmp.ne.s32.totalorder %s337, %s339
    %p343 = scmp.eq.s32.totalorder %s25, 0
    %p344 = por %p342, %p343
    %p345 = scmp.ne.s32.totalorder %s337, %s339
    %p346 = scmp.eq.s32.totalorder %s30, 1
    %p347 = por %p345, %p346
    %p348 = scmp.ne.s32.totalorder %s339, %s340
    %p349 = scmp.eq.s32.totalorder %s30, 0
    %p350 = por %p348, %p349
    %p351 = scmp.ne.s32.totalorder %s339, %s340
    %p352 = scmp.eq.s32.totalorder %s31, 1
    %p353 = por %p351, %p352
    %p355 = scmp.ne.s32.totalorder %s340, %s354
    %p356 = scmp.eq.s32.totalorder %s31, 0
    %p357 = por %p355, %p356
    %s359 = sadd.s32 %s358, 1
    %p362 = scmp.eq.s32.totalorder %s25, 1
    %p363 = scmp.ne.s32.totalorder %s358, %s360
    %p364 = scmp.eq.s32.totalorder %s25, 0
    %p365 = por %p363, %p364
    %p366 = scmp.ne.s32.totalorder %s358, %s360
    %p367 = scmp.eq.s32.totalorder %s30, 1
    %p368 = por %p366, %p367
    %p369 = scmp.ne.s32.totalorder %s360, %s361
    %p370 = scmp.eq.s32.totalorder %s30, 0
    %p371 = por %p369, %p370
    %p372 = scmp.ne.s32.totalorder %s360, %s361
    %p373 = scmp.eq.s32.totalorder %s31, 1
    %p374 = por %p372, %p373
    %p376 = scmp.ne.s32.totalorder %s361, %s375
    %p377 = scmp.eq.s32.totalorder %s31, 0
    %p378 = por %p376, %p377
    %s380 = sadd.s32 %s379, 1
    %p383 = scmp.eq.s32.totalorder %s25, 1
    %p384 = scmp.ne.s32.totalorder %s379, %s381
    %p385 = scmp.eq.s32.totalorder %s25, 0
    %p386 = por %p384, %p385
    %p387 = scmp.ne.s32.totalorder %s379, %s381
    %p388 = scmp.eq.s32.totalorder %s30, 1
    %p389 = por %p387, %p388
    %p390 = scmp.ne.s32.totalorder %s381, %s382
    %p391 = scmp.eq.s32.totalorder %s30, 0
    %p392 = por %p390, %p391
    %p393 = scmp.ne.s32.totalorder %s381, %s382
    %p394 = scmp.eq.s32.totalorder %s31, 1
    %p395 = por %p393, %p394
    %p397 = scmp.ne.s32.totalorder %s382, %s396
    %p398 = scmp.eq.s32.totalorder %s31, 0
    %p399 = por %p397, %p398
    %s401 = sadd.s32 %s400, 1
    %p404 = scmp.eq.s32.totalorder %s25, 1
    %p405 = scmp.ne.s32.totalorder %s400, %s402
    %p406 = scmp.eq.s32.totalorder %s25, 0
    %p407 = por %p405, %p406
    %p408 = scmp.ne.s32.totalorder %s400, %s402
    %p409 = scmp.eq.s32.totalorder %s30, 1
    %p410 = por %p408, %p409
    %p411 = scmp.ne.s32.totalorder %s402, %s403
    %p412 = scmp.eq.s32.totalorder %s30, 0
    %p413 = por %p411, %p412
    %p414 = scmp.ne.s32.totalorder %s402, %s403
    %p415 = scmp.eq.s32.totalorder %s31, 1
    %p416 = por %p414, %p415
    %p418 = scmp.ne.s32.totalorder %s403, %s417
    %p419 = scmp.eq.s32.totalorder %s31, 0
    %p420 = por %p418, %p419
    %s421 = ssub.s32 %s25, %s32
    %p422 = scmp.eq.s32.totalorder %s421, 0
    %s424 = sadd.s32 %s423, 1
    %s425 = scalar_select %p422, %s423, %s424
    %p428 = pneg %p422
    %p429 = scmp.eq.s32.totalorder %s25, 1
    %p430 = por %p428, %p429
    %p431 = scmp.ne.s32.totalorder %s423, %s426
    %p432 = scmp.eq.s32.totalorder %s25, 0
    %p433 = por %p431, %p432
    %p434 = scmp.ne.s32.totalorder %s423, %s426
    %p435 = scmp.eq.s32.totalorder %s30, 1
    %p436 = por %p434, %p435
    %p437 = scmp.ne.s32.totalorder %s426, %s427
    %p438 = scmp.eq.s32.totalorder %s30, 0
    %p439 = por %p437, %p438
    %p440 = scmp.ne.s32.totalorder %s426, %s427
    %p441 = scmp.eq.s32.totalorder %s31, 1
    %p442 = por %p440, %p441
    %p444 = scmp.ne.s32.totalorder %s427, %s443
    %p445 = scmp.eq.s32.totalorder %s31, 0
    %p446 = por %p444, %p445
    %p447 = scmp.le.s32.totalorder 1, %s25
    %p448 = scmp.lt.s32.totalorder %s25, 3
    %p449 = pnand %p447, %p448
    %p450 = pneg %p449
    // Predicated region
    $region9: #{tpu_custom_call.1} parent=5 // pred_check
      _
    $region10: #{tpu_custom_call.1} parent=5 // pred_check_branch
      %452 = sbr.rel (%p449) target = $region12
    $region11: #{tpu_custom_call.1} parent=5 // pred_region
      %s453 = ssub.s32 %s25, 1
      // Predicated region
      $region13: #{tpu_custom_call.1} parent=11 // pred_check
        %p454 = pneg %p98
      $region14: #{tpu_custom_call.1} parent=11 // pred_check_branch
        %456 = sbr.rel (%p454) target = $region16
      $region15: #{tpu_custom_call.1} parent=11 // pred_region
        _
      $region16: #{tpu_custom_call.1} parent=11 // pred_fallthru
        _
      // Predicated region
      $region17: #{tpu_custom_call.1} parent=11 // pred_check
        %p457 = pneg %p119
      $region18: #{tpu_custom_call.1} parent=11 // pred_check_branch
        %459 = sbr.rel (%p457) target = $region20
      $region19: #{tpu_custom_call.1} parent=11 // pred_region
        _
      $region20: #{tpu_custom_call.1} parent=11 // pred_fallthru
        _
      // Predicated region
      $region21: #{tpu_custom_call.1} parent=11 // pred_check
        %p460 = pneg %p140
      $region22: #{tpu_custom_call.1} parent=11 // pred_check_branch
        %462 = sbr.rel (%p460) target = $region24
      $region23: #{tpu_custom_call.1} parent=11 // pred_region
        _
      $region24: #{tpu_custom_call.1} parent=11 // pred_fallthru
        _
      // Predicated region
      $region25: #{tpu_custom_call.1} parent=11 // pred_check
        %p463 = pneg %p161
      $region26: #{tpu_custom_call.1} parent=11 // pred_check_branch
        %465 = sbr.rel (%p463) target = $region28
      $region27: #{tpu_custom_call.1} parent=11 // pred_region
        _
      $region28: #{tpu_custom_call.1} parent=11 // pred_fallthru
        _
      // Predicated region
      $region29: #{tpu_custom_call.1} parent=11 // pred_check
        %p466 = pneg %p182
      $region30: #{tpu_custom_call.1} parent=11 // pred_check_branch
        %468 = sbr.rel (%p466) target = $region32
      $region31: #{tpu_custom_call.1} parent=11 // pred_region
        _
      $region32: #{tpu_custom_call.1} parent=11 // pred_fallthru
        _
      // Predicated region
      $region33: #{tpu_custom_call.1} parent=11 // pred_check
        %p469 = pneg %p203
      $region34: #{tpu_custom_call.1} parent=11 // pred_check_branch
        %471 = sbr.rel (%p469) target = $region36
      $region35: #{tpu_custom_call.1} parent=11 // pred_region
        _
      $region36: #{tpu_custom_call.1} parent=11 // pred_fallthru
        _
      // Predicated region
      $region37: #{tpu_custom_call.1} parent=11 // pred_check
        %p472 = pneg %p224
      $region38: #{tpu_custom_call.1} parent=11 // pred_check_branch
        %474 = sbr.rel (%p472) target = $region40
      $region39: #{tpu_custom_call.1} parent=11 // pred_region
        _
      $region40: #{tpu_custom_call.1} parent=11 // pred_fallthru
        _
      // Predicated region
      $region41: #{tpu_custom_call.1} parent=11 // pred_check
        %p475 = pneg %p245
      $region42: #{tpu_custom_call.1} parent=11 // pred_check_branch
        %477 = sbr.rel (%p475) target = $region44
      $region43: #{tpu_custom_call.1} parent=11 // pred_region
        _
      $region44: #{tpu_custom_call.1} parent=11 // pred_fallthru
        _
      // Predicated region
      $region45: #{tpu_custom_call.1} parent=11 // pred_check
        %p478 = pneg %p266
      $region46: #{tpu_custom_call.1} parent=11 // pred_check_branch
        %480 = sbr.rel (%p478) target = $region48
      $region47: #{tpu_custom_call.1} parent=11 // pred_region
        _
      $region48: #{tpu_custom_call.1} parent=11 // pred_fallthru
        _
      // Predicated region
      $region49: #{tpu_custom_call.1} parent=11 // pred_check
        %p481 = pneg %p287
      $region50: #{tpu_custom_call.1} parent=11 // pred_check_branch
        %483 = sbr.rel (%p481) target = $region52
      $region51: #{tpu_custom_call.1} parent=11 // pred_region
        _
      $region52: #{tpu_custom_call.1} parent=11 // pred_fallthru
        _
      // Predicated region
      $region53: #{tpu_custom_call.1} parent=11 // pred_check
        %p484 = pneg %p308
      $region54: #{tpu_custom_call.1} parent=11 // pred_check_branch
        %486 = sbr.rel (%p484) target = $region56
      $region55: #{tpu_custom_call.1} parent=11 // pred_region
        _
      $region56: #{tpu_custom_call.1} parent=11 // pred_fallthru
        _
      // Predicated region
      $region57: #{tpu_custom_call.1} parent=11 // pred_check
        %p487 = pneg %p329
      $region58: #{tpu_custom_call.1} parent=11 // pred_check_branch
        %489 = sbr.rel (%p487) target = $region60
      $region59: #{tpu_custom_call.1} parent=11 // pred_region
        _
      $region60: #{tpu_custom_call.1} parent=11 // pred_fallthru
        _
      // Predicated region
      $region61: #{tpu_custom_call.1} parent=11 // pred_check
        %p490 = pneg %p350
      $region62: #{tpu_custom_call.1} parent=11 // pred_check_branch
        %492 = sbr.rel (%p490) target = $region64
      $region63: #{tpu_custom_call.1} parent=11 // pred_region
        _
      $region64: #{tpu_custom_call.1} parent=11 // pred_fallthru
        _
      // Predicated region
      $region65: #{tpu_custom_call.1} parent=11 // pred_check
        %p493 = pneg %p371
      $region66: #{tpu_custom_call.1} parent=11 // pred_check_branch
        %495 = sbr.rel (%p493) target = $region68
      $region67: #{tpu_custom_call.1} parent=11 // pred_region
        _
      $region68: #{tpu_custom_call.1} parent=11 // pred_fallthru
        _
      // Predicated region
      $region69: #{tpu_custom_call.1} parent=11 // pred_check
        %p496 = pneg %p392
      $region70: #{tpu_custom_call.1} parent=11 // pred_check_branch
        %498 = sbr.rel (%p496) target = $region72
      $region71: #{tpu_custom_call.1} parent=11 // pred_region
        _
      $region72: #{tpu_custom_call.1} parent=11 // pred_fallthru
        _
      // Predicated region
      $region73: #{tpu_custom_call.1} parent=11 // pred_check
        %p499 = pneg %p413
      $region74: #{tpu_custom_call.1} parent=11 // pred_check_branch
        %501 = sbr.rel (%p499) target = $region76
      $region75: #{tpu_custom_call.1} parent=11 // pred_region
        _
      $region76: #{tpu_custom_call.1} parent=11 // pred_fallthru
        _
    $region12: #{tpu_custom_call.1} parent=5 // pred_fallthru
      _
    %p502 = scmp.lt.s32.totalorder %s25, 2
    // Predicated region
    $region77: #{tpu_custom_call.1} parent=5 // pred_check
      %p503 = pneg %p502
    $region78: #{tpu_custom_call.1} parent=5 // pred_check_branch
      %505 = sbr.rel (%p503) target = $region80
    $region79: #{tpu_custom_call.1} parent=5 // pred_region
      // Predicated region
      $region81: #{tpu_custom_call.1} parent=79 // pred_check
        %p506 = pneg %p45
      $region82: #{tpu_custom_call.1} parent=79 // pred_check_branch
        %508 = sbr.rel (%p506) target = $region84
      $region83: #{tpu_custom_call.1} parent=79 // pred_region
        %p509 = scmp.lt.s32.totalorder %s25, 1
        %s510 = scalar_select %p509, %s25, 1
        %s511 = smul.addr %s510, 8
        %s512 = smul.addr %s511, 8
        %s513 = scalar_lea.vmem %s0, %s512
      $region84: #{tpu_custom_call.1} parent=79 // pred_fallthru
        _
      // Predicated region
      $region85: #{tpu_custom_call.1} parent=79 // pred_check
        %p514 = pneg %p71
      $region86: #{tpu_custom_call.1} parent=79 // pred_check_branch
        %516 = sbr.rel (%p514) target = $region88
      $region87: #{tpu_custom_call.1} parent=79 // pred_region
        %p517 = scmp.lt.s32.totalorder %s25, 1
        %s518 = scalar_select %p517, %s25, 1
        %s519 = smul.addr %s518, 8
        %s520 = smul.addr %s519, 8
        %s521 = scalar_lea.vmem %s1, %s520
      $region88: #{tpu_custom_call.1} parent=79 // pred_fallthru
        _
    $region80: #{tpu_custom_call.1} parent=5 // pred_fallthru
      _
    %p522 = scmp.le.s32.totalorder 1, %s25
    %p523 = scmp.lt.s32.totalorder %s25, 3
    %p524 = pnand %p522, %p523
    %p525 = pneg %p524
    // Predicated region
    $region89: #{tpu_custom_call.1} parent=5 // pred_check
      _
    $region90: #{tpu_custom_call.1} parent=5 // pred_check_branch
      %527 = sbr.rel (%p524) target = $region92
    $region91: #{tpu_custom_call.1} parent=5 // pred_region
      %s528 = ssub.s32 %s25, 1
      %p529 = scmp.lt.s32.totalorder %s30, 1
      %s530 = scalar_select %p529, %s30, 1
      %s531 = smul.addr %s530, 8
      %s532 = smul.addr %s531, 8
      %s533 = scalar_lea.vmem %s0, %s532
      %p534 = pneg %p51
      %p535 = pneg %p48
      %p536 = scmp.lt.s32.totalorder %s30, 1
      %s537 = scalar_select %p536, %s30, 1
      %s538 = smul.addr %s537, 8
      %s539 = smul.addr %s538, 8
      %s540 = scalar_lea.vmem %s1, %s539
      %p541 = pneg %p77
      %p542 = pneg %p74
      %p543 = pneg %p98
      %p544 = pneg %p95
      %p545 = pneg %p119
      %p546 = pneg %p116
      %p547 = pneg %p140
      %p548 = pneg %p137
      %p549 = pneg %p161
      %p550 = pneg %p158
      %p551 = pneg %p182
      %p552 = pneg %p179
      %p553 = pneg %p203
      %p554 = pneg %p200
      %p555 = pneg %p224
      %p556 = pneg %p221
      %p557 = pneg %p245
      %p558 = pneg %p242
      %p559 = pneg %p266
      %p560 = pneg %p263
      %p561 = pneg %p287
      %p562 = pneg %p284
      %p563 = pneg %p308
      %p564 = pneg %p305
      %p565 = pneg %p329
      %p566 = pneg %p326
      %p567 = pneg %p350
      %p568 = pneg %p347
      %p569 = pneg %p371
      %p570 = pneg %p368
      %p571 = pneg %p392
      %p572 = pneg %p389
      %p573 = pneg %p413
      %p574 = pneg %p410
      %p575 = pneg %p439
      %p576 = pneg %p436
      %p577 = scmp.lt.s32.totalorder %s30, 1
      %s578 = scalar_select %p577, %s30, 1
      %s579 = smul.addr %s578, 8
      %s580 = smul.addr %s579, 8
      %s581 = scalar_lea.vmem %s18, %s580
      %p582 = scmp.lt.s32.totalorder %s30, 1
      %s583 = scalar_select %p582, %s30, 1
      %s584 = smul.addr %s583, 8
      %s585 = smul.addr %s584, 8
      %s586 = scalar_lea.vmem %s0, %s585
      %p587 = scmp.lt.s32.totalorder %s30, 1
      %s588 = scalar_select %p587, %s30, 1
      %s589 = smul.addr %s588, 8
      %s590 = smul.addr %s589, 8
      %s591 = scalar_lea.vmem %s1, %s590
      %p592 = scmp.lt.s32.totalorder %s30, 1
      %s593 = scalar_select %p592, %s30, 1
      %s594 = smul.addr %s593, 8
      %s595 = smul.addr %s594, 8
      %s596 = scalar_lea.vmem %s18, %s595
      %v598 = vld [vmem:[%s586] sm:$0xff]
      %v599 = vld [vmem:[%s586 + $0x8] sm:$0xff]
      %v600 = vld [vmem:[%s586 + $0x10] sm:$0xff]
      %v601 = vld [vmem:[%s586 + $0x18] sm:$0xff]
      %v602 = vld [vmem:[%s586 + $0x20] sm:$0xff]
      %v603 = vld [vmem:[%s586 + $0x28] sm:$0xff]
      %v604 = vld [vmem:[%s586 + $0x30] sm:$0xff]
      %v605 = vld [vmem:[%s586 + $0x38] sm:$0xff]
      %v606 = vld [vmem:[%s591] sm:$0xff]
      %v607 = vld [vmem:[%s591 + $0x8] sm:$0xff]
      %v608 = vld [vmem:[%s591 + $0x10] sm:$0xff]
      %v609 = vld [vmem:[%s591 + $0x18] sm:$0xff]
      %v610 = vld [vmem:[%s591 + $0x20] sm:$0xff]
      %v611 = vld [vmem:[%s591 + $0x28] sm:$0xff]
      %v612 = vld [vmem:[%s591 + $0x30] sm:$0xff]
      %v613 = vld [vmem:[%s591 + $0x38] sm:$0xff]
      %s614 = sld [smem:[#allocation2]]
      %v615 = vld [vmem:[%s2] sm:$0x1]
      %v616 = vstv %s614
      %v617 = vmul.f32 %v615, %v616
      %v618 = vsub.f32 %v598, %v606
      %v619 = vsub.f32 %v599, %v607
      %v620 = vsub.f32 %v600, %v608
      %v621 = vsub.f32 %v601, %v609
      %v622 = vsub.f32 %v602, %v610
      %v623 = vsub.f32 %v603, %v611
      %v624 = vsub.f32 %v604, %v612
      %v625 = vsub.f32 %v605, %v613
      %v627 = vlaneseq
      %v628 = vshrl.u32 %v627, 7
      %v629 = vsub.s32 0, %v628
      %v630 = vrot.slane %v617, %v629
      %v632 = vmul.f32 %v618, %v630
      %v633 = vmul.f32 %v619, %v630
      %v634 = vmul.f32 %v620, %v630
      %v635 = vmul.f32 %v621, %v630
      %v636 = vmul.f32 %v622, %v630
      %v637 = vmul.f32 %v623, %v630
      %v638 = vmul.f32 %v624, %v630
      %v639 = vmul.f32 %v625, %v630
      %v640 = vpack.c.bf16 %v599, %v598
      %v641 = vpack.c.bf16 %v601, %v600
      %v642 = vpack.c.bf16 %v603, %v602
      %v643 = vpack.c.bf16 %v605, %v604
      %v644 = vld [vmem:[%s4] sm:$0xf]
      %v645 = vld [vmem:[%s4 + $0x4] sm:$0xf]
      %v646 = vld [vmem:[%s4 + $0x8] sm:$0xf]
      %v647 = vld [vmem:[%s4 + $0xc] sm:$0xf]
      %v652 = vunpack.c.l.b16 %v644
      %v653 = vunpack.c.l.b16 %v645
      %v654 = vunpack.c.l.b16 %v646
      %v655 = vunpack.c.l.b16 %v647
      %v656 = vpack.c.b16 %v653, %v652
      %v657 = vpack.c.b16 %v655, %v654
      %vm660 = vcmask 261120
      %v662 = vsel %vm660, %v640, 0
      %v665 = vsel %vm660, %v641, 0
      %v668 = vsel %vm660, %v642, 0
      %v671 = vsel %vm660, %v643, 0
      %673 = vmatprep.subr.bf16.mxu0 0
      %674 = vmatpush1.bf16.msra.mxu0 0
      %675 = vmatprep.subr.bf16.mxu0 0
      %676 = vmatpush1.bf16.msra.mxu0 0
      %677 = vmatprep.subr.bf16.mxu0 0
      %678 = vmatpush1.bf16.msra.mxu0 0
      %679 = vmatprep.subr.bf16.mxu0 0
      %680 = vmatpush1.bf16.msra.mxu0 0
      %681 = vmatprep.subr.bf16.mxu0 0
      %682 = vmatpush1.bf16.msra.mxu0 0
      %683 = vmatprep.subr.bf16.mxu0 0
      %684 = vmatpush1.bf16.msra.mxu0 0
      %685 = vmatprep.subr.bf16.mxu0 0
      %686 = vmatpush1.bf16.msra.mxu0 %v657
      %687 = vmatprep.subr.bf16.mxu0 0
      %688 = vmatpush1.bf16.msra.mxu0 %v656
      %689 = vmatprep.subr.bf16.mxu0 0
      %690 = vmatpush2.bf16.msra.mxu0 0
      %691 = vmatprep.subr.bf16.mxu0 0
      %692 = vmatpush2.bf16.msra.mxu0 0
      %693 = vmatprep.subr.bf16.mxu0 0
      %694 = vmatpush2.bf16.msra.mxu0 0
      %695 = vmatprep.subr.bf16.mxu0 0
      %696 = vmatpush2.bf16.msra.mxu0 0
      %697 = vmatprep.subr.bf16.mxu0 0
      %698 = vmatpush2.bf16.msra.mxu0 0
      %699 = vmatprep.subr.bf16.mxu0 0
      %700 = vmatpush2.bf16.msra.mxu0 0
      %701 = vmatprep.subr.bf16.mxu0 0
      %702 = vmatpush2.bf16.msra.mxu0 0
      %703 = vmatprep.subr.bf16.mxu0 0
      %704 = vmatpush2.bf16.msra.mxu0 0
      %705 = vmatprep.mubr.bf16.mxu0 0
      %706 = vmatmul.mubr.bf16.gmra.mxu0 %v662
      %v707 = vpop.f32.mrf.mxu0
      %v708 = vadd.f32 0.0, %v707
      %v709 = vpop.f32.mrf.mxu0
      %v710 = vpop.f32.mrf.mxu0
      %v711 = vadd.f32 0.0, %v710
      %v712 = vpop.f32.mrf.mxu0
      %713 = vmatprep.mubr.bf16.mxu0 0
      %714 = vmatmul.mubr.bf16.gmra.mxu0 %v665
      %v715 = vpop.f32.mrf.mxu0
      %v716 = vadd.f32 0.0, %v715
      %v717 = vpop.f32.mrf.mxu0
      %v718 = vpop.f32.mrf.mxu0
      %v719 = vadd.f32 0.0, %v718
      %v720 = vpop.f32.mrf.mxu0
      %721 = vmatprep.mubr.bf16.mxu0 0
      %722 = vmatmul.mubr.bf16.gmra.mxu0 %v668
      %v723 = vpop.f32.mrf.mxu0
      %v724 = vadd.f32 0.0, %v723
      %v725 = vpop.f32.mrf.mxu0
      %v726 = vpop.f32.mrf.mxu0
      %v727 = vadd.f32 0.0, %v726
      %v728 = vpop.f32.mrf.mxu0
      %729 = vmatprep.mubr.bf16.mxu0 0
      %730 = vmatmul.mubr.bf16.gmra.mxu0 %v671
      %v731 = vpop.f32.mrf.mxu0
      %v732 = vadd.f32 0.0, %v731
      %v733 = vpop.f32.mrf.mxu0
      %v734 = vpop.f32.mrf.mxu0
      %v735 = vadd.f32 0.0, %v734
      %v736 = vpop.f32.mrf.mxu0
      %737 = vdwg.mxu0
      %v738 = vld [vmem:[%s5] sm:$0xf]
      %v739 = vld [vmem:[%s5 + $0x4] sm:$0xf]
      %v740 = vld [vmem:[%s5 + $0x8] sm:$0xf]
      %v741 = vld [vmem:[%s5 + $0xc] sm:$0xf]
      %v746 = vunpack.c.l.b16 %v738
      %v747 = vunpack.c.l.b16 %v739
      %v748 = vunpack.c.l.b16 %v740
      %v749 = vunpack.c.l.b16 %v741
      %v750 = vpack.c.b16 %v747, %v746
      %v751 = vpack.c.b16 %v749, %v748
      %754 = vmatprep.subr.bf16.mxu0 0
      %755 = vmatpush1.bf16.msra.mxu0 0
      %756 = vmatprep.subr.bf16.mxu0 0
      %757 = vmatpush1.bf16.msra.mxu0 0
      %758 = vmatprep.subr.bf16.mxu0 0
      %759 = vmatpush1.bf16.msra.mxu0 0
      %760 = vmatprep.subr.bf16.mxu0 0
      %761 = vmatpush1.bf16.msra.mxu0 0
      %762 = vmatprep.subr.bf16.mxu0 0
      %763 = vmatpush1.bf16.msra.mxu0 0
      %764 = vmatprep.subr.bf16.mxu0 0
      %765 = vmatpush1.bf16.msra.mxu0 0
      %766 = vmatprep.subr.bf16.mxu0 0
      %767 = vmatpush1.bf16.msra.mxu0 %v751
      %768 = vmatprep.subr.bf16.mxu0 0
      %769 = vmatpush1.bf16.msra.mxu0 %v750
      %770 = vmatprep.subr.bf16.mxu0 0
      %771 = vmatpush2.bf16.msra.mxu0 0
      %772 = vmatprep.subr.bf16.mxu0 0
      %773 = vmatpush2.bf16.msra.mxu0 0
      %774 = vmatprep.subr.bf16.mxu0 0
      %775 = vmatpush2.bf16.msra.mxu0 0
      %776 = vmatprep.subr.bf16.mxu0 0
      %777 = vmatpush2.bf16.msra.mxu0 0
      %778 = vmatprep.subr.bf16.mxu0 0
      %779 = vmatpush2.bf16.msra.mxu0 0
      %780 = vmatprep.subr.bf16.mxu0 0
      %781 = vmatpush2.bf16.msra.mxu0 0
      %782 = vmatprep.subr.bf16.mxu0 0
      %783 = vmatpush2.bf16.msra.mxu0 0
      %784 = vmatprep.subr.bf16.mxu0 0
      %785 = vmatpush2.bf16.msra.mxu0 0
      %786 = vmatprep.mubr.bf16.mxu0 0
      %787 = vmatmul.mubr.bf16.gmra.mxu0 %v662
      %v788 = vpop.f32.mrf.mxu0
      %v789 = vadd.f32 0.0, %v788
      %v790 = vpop.f32.mrf.mxu0
      %v791 = vpop.f32.mrf.mxu0
      %v792 = vadd.f32 0.0, %v791
      %v793 = vpop.f32.mrf.mxu0
      %794 = vmatprep.mubr.bf16.mxu0 0
      %795 = vmatmul.mubr.bf16.gmra.mxu0 %v665
      %v796 = vpop.f32.mrf.mxu0
      %v797 = vadd.f32 0.0, %v796
      %v798 = vpop.f32.mrf.mxu0
      %v799 = vpop.f32.mrf.mxu0
      %v800 = vadd.f32 0.0, %v799
      %v801 = vpop.f32.mrf.mxu0
      %802 = vmatprep.mubr.bf16.mxu0 0
      %803 = vmatmul.mubr.bf16.gmra.mxu0 %v668
      %v804 = vpop.f32.mrf.mxu0
      %v805 = vadd.f32 0.0, %v804
      %v806 = vpop.f32.mrf.mxu0
      %v807 = vpop.f32.mrf.mxu0
      %v808 = vadd.f32 0.0, %v807
      %v809 = vpop.f32.mrf.mxu0
      %810 = vmatprep.mubr.bf16.mxu0 0
      %811 = vmatmul.mubr.bf16.gmra.mxu0 %v671
      %v812 = vpop.f32.mrf.mxu0
      %v813 = vadd.f32 0.0, %v812
      %v814 = vpop.f32.mrf.mxu0
      %v815 = vpop.f32.mrf.mxu0
      %v816 = vadd.f32 0.0, %v815
      %v817 = vpop.f32.mrf.mxu0
      %818 = vdwg.mxu0
      %v819 = vld [vmem:[%s6] sm:$0xf]
      %v820 = vld [vmem:[%s6 + $0x4] sm:$0xf]
      %v821 = vld [vmem:[%s7] sm:$0xf]
      %v822 = vld [vmem:[%s7 + $0x4] sm:$0xf]
      %v823 = vld [vmem:[%s8] sm:$0xf]
      %v824 = vld [vmem:[%s8 + $0x4] sm:$0xf]
      %v825 = vpack.c.bf16 %v711, %v708
      %v826 = vpack.c.bf16 %v719, %v716
      %v827 = vpack.c.bf16 %v727, %v724
      %v828 = vpack.c.bf16 %v735, %v732
      %v831 = vunpack.c.l.b16 %v819
      %v832 = vunpack.c.l.b16 %v820
      %v833 = vpack.c.b16 %v832, %v831
      %vm834 = vcmask 130048
      %v836 = vsel %vm834, %v833, 0
      %838 = vmatprep.subr.bf16.mxu0 0
      %839 = vmatpush1.bf16.msra.mxu0 0
      %840 = vmatprep.subr.bf16.mxu0 0
      %841 = vmatpush1.bf16.msra.mxu0 0
      %842 = vmatprep.subr.bf16.mxu0 0
      %843 = vmatpush1.bf16.msra.mxu0 0
      %844 = vmatprep.subr.bf16.mxu0 0
      %845 = vmatpush1.bf16.msra.mxu0 0
      %846 = vmatprep.subr.bf16.mxu0 0
      %847 = vmatpush1.bf16.msra.mxu0 0
      %848 = vmatprep.subr.bf16.mxu0 0
      %849 = vmatpush1.bf16.msra.mxu0 0
      %850 = vmatprep.subr.bf16.mxu0 0
      %851 = vmatpush1.bf16.msra.mxu0 0
      %852 = vmatprep.subr.bf16.mxu0 0
      %853 = vmatpush1.bf16.msra.mxu0 %v825
      %854 = vmatprep.subr.bf16.mxu0 0
      %855 = vmatpush2.bf16.msra.mxu0 0
      %856 = vmatprep.subr.bf16.mxu0 0
      %857 = vmatpush2.bf16.msra.mxu0 0
      %858 = vmatprep.subr.bf16.mxu0 0
      %859 = vmatpush2.bf16.msra.mxu0 0
      %860 = vmatprep.subr.bf16.mxu0 0
      %861 = vmatpush2.bf16.msra.mxu0 0
      %862 = vmatprep.subr.bf16.mxu0 0
      %863 = vmatpush2.bf16.msra.mxu0 0
      %864 = vmatprep.subr.bf16.mxu0 0
      %865 = vmatpush2.bf16.msra.mxu0 0
      %866 = vmatprep.subr.bf16.mxu0 0
      %867 = vmatpush2.bf16.msra.mxu0 0
      %868 = vmatprep.subr.bf16.mxu0 0
      %869 = vmatpush2.bf16.msra.mxu0 0
      %870 = vmatprep.mubr.bf16.mxu0 0
      %871 = vmatmul.mubr.bf16.gmra.mxu0 %v836
      %v872 = vpop.f32.mrf.mxu0
      %v873 = vadd.f32 0.0, %v872
      %v874 = vpop.f32.mrf.mxu0
      %v875 = vpop.f32.mrf.mxu0
      %v876 = vadd.f32 0.0, %v875
      %v877 = vpop.f32.mrf.mxu0
      %878 = vdwg.mxu0
      %879 = vmatprep.subr.bf16.mxu0 0
      %880 = vmatpush1.bf16.msra.mxu0 0
      %881 = vmatprep.subr.bf16.mxu0 0
      %882 = vmatpush1.bf16.msra.mxu0 0
      %883 = vmatprep.subr.bf16.mxu0 0
      %884 = vmatpush1.bf16.msra.mxu0 0
      %885 = vmatprep.subr.bf16.mxu0 0
      %886 = vmatpush1.bf16.msra.mxu0 0
      %887 = vmatprep.subr.bf16.mxu0 0
      %888 = vmatpush1.bf16.msra.mxu0 0
      %889 = vmatprep.subr.bf16.mxu0 0
      %890 = vmatpush1.bf16.msra.mxu0 0
      %891 = vmatprep.subr.bf16.mxu0 0
      %892 = vmatpush1.bf16.msra.mxu0 0
      %893 = vmatprep.subr.bf16.mxu0 0
      %894 = vmatpush1.bf16.msra.mxu0 %v826
      %895 = vmatprep.subr.bf16.mxu0 0
      %896 = vmatpush2.bf16.msra.mxu0 0
      %897 = vmatprep.subr.bf16.mxu0 0
      %898 = vmatpush2.bf16.msra.mxu0 0
      %899 = vmatprep.subr.bf16.mxu0 0
      %900 = vmatpush2.bf16.msra.mxu0 0
      %901 = vmatprep.subr.bf16.mxu0 0
      %902 = vmatpush2.bf16.msra.mxu0 0
      %903 = vmatprep.subr.bf16.mxu0 0
      %904 = vmatpush2.bf16.msra.mxu0 0
      %905 = vmatprep.subr.bf16.mxu0 0
      %906 = vmatpush2.bf16.msra.mxu0 0
      %907 = vmatprep.subr.bf16.mxu0 0
      %908 = vmatpush2.bf16.msra.mxu0 0
      %909 = vmatprep.subr.bf16.mxu0 0
      %910 = vmatpush2.bf16.msra.mxu0 0
      %911 = vmatprep.mubr.bf16.mxu0 0
      %912 = vmatmul.mubr.bf16.gmra.mxu0 %v836
      %v913 = vpop.f32.mrf.mxu0
      %v914 = vadd.f32 0.0, %v913
      %v915 = vpop.f32.mrf.mxu0
      %v916 = vpop.f32.mrf.mxu0
      %v917 = vadd.f32 0.0, %v916
      %v918 = vpop.f32.mrf.mxu0
      %919 = vdwg.mxu0
      %920 = vmatprep.subr.bf16.mxu0 0
      %921 = vmatpush1.bf16.msra.mxu0 0
      %922 = vmatprep.subr.bf16.mxu0 0
      %923 = vmatpush1.bf16.msra.mxu0 0
      %924 = vmatprep.subr.bf16.mxu0 0
      %925 = vmatpush1.bf16.msra.mxu0 0
      %926 = vmatprep.subr.bf16.mxu0 0
      %927 = vmatpush1.bf16.msra.mxu0 0
      %928 = vmatprep.subr.bf16.mxu0 0
      %929 = vmatpush1.bf16.msra.mxu0 0
      %930 = vmatprep.subr.bf16.mxu0 0
      %931 = vmatpush1.bf16.msra.mxu0 0
      %932 = vmatprep.subr.bf16.mxu0 0
      %933 = vmatpush1.bf16.msra.mxu0 0
      %934 = vmatprep.subr.bf16.mxu0 0
      %935 = vmatpush1.bf16.msra.mxu0 %v827
      %936 = vmatprep.subr.bf16.mxu0 0
      %937 = vmatpush2.bf16.msra.mxu0 0
      %938 = vmatprep.subr.bf16.mxu0 0
      %939 = vmatpush2.bf16.msra.mxu0 0
      %940 = vmatprep.subr.bf16.mxu0 0
      %941 = vmatpush2.bf16.msra.mxu0 0
      %942 = vmatprep.subr.bf16.mxu0 0
      %943 = vmatpush2.bf16.msra.mxu0 0
      %944 = vmatprep.subr.bf16.mxu0 0
      %945 = vmatpush2.bf16.msra.mxu0 0
      %946 = vmatprep.subr.bf16.mxu0 0
      %947 = vmatpush2.bf16.msra.mxu0 0
      %948 = vmatprep.subr.bf16.mxu0 0
      %949 = vmatpush2.bf16.msra.mxu0 0
      %950 = vmatprep.subr.bf16.mxu0 0
      %951 = vmatpush2.bf16.msra.mxu0 0
      %952 = vmatprep.mubr.bf16.mxu0 0
      %953 = vmatmul.mubr.bf16.gmra.mxu0 %v836
      %v954 = vpop.f32.mrf.mxu0
      %v955 = vadd.f32 0.0, %v954
      %v956 = vpop.f32.mrf.mxu0
      %v957 = vpop.f32.mrf.mxu0
      %v958 = vadd.f32 0.0, %v957
      %v959 = vpop.f32.mrf.mxu0
      %960 = vdwg.mxu0
      %961 = vmatprep.subr.bf16.mxu0 0
      %962 = vmatpush1.bf16.msra.mxu0 0
      %963 = vmatprep.subr.bf16.mxu0 0
      %964 = vmatpush1.bf16.msra.mxu0 0
      %965 = vmatprep.subr.bf16.mxu0 0
      %966 = vmatpush1.bf16.msra.mxu0 0
      %967 = vmatprep.subr.bf16.mxu0 0
      %968 = vmatpush1.bf16.msra.mxu0 0
      %969 = vmatprep.subr.bf16.mxu0 0
      %970 = vmatpush1.bf16.msra.mxu0 0
      %971 = vmatprep.subr.bf16.mxu0 0
      %972 = vmatpush1.bf16.msra.mxu0 0
      %973 = vmatprep.subr.bf16.mxu0 0
      %974 = vmatpush1.bf16.msra.mxu0 0
      %975 = vmatprep.subr.bf16.mxu0 0
      %976 = vmatpush1.bf16.msra.mxu0 %v828
      %977 = vmatprep.subr.bf16.mxu0 0
      %978 = vmatpush2.bf16.msra.mxu0 0
      %979 = vmatprep.subr.bf16.mxu0 0
      %980 = vmatpush2.bf16.msra.mxu0 0
      %981 = vmatprep.subr.bf16.mxu0 0
      %982 = vmatpush2.bf16.msra.mxu0 0
      %983 = vmatprep.subr.bf16.mxu0 0
      %984 = vmatpush2.bf16.msra.mxu0 0
      %985 = vmatprep.subr.bf16.mxu0 0
      %986 = vmatpush2.bf16.msra.mxu0 0
      %987 = vmatprep.subr.bf16.mxu0 0
      %988 = vmatpush2.bf16.msra.mxu0 0
      %989 = vmatprep.subr.bf16.mxu0 0
      %990 = vmatpush2.bf16.msra.mxu0 0
      %991 = vmatprep.subr.bf16.mxu0 0
      %992 = vmatpush2.bf16.msra.mxu0 0
      %993 = vmatprep.mubr.bf16.mxu0 0
      %994 = vmatmul.mubr.bf16.gmra.mxu0 %v836
      %v995 = vpop.f32.mrf.mxu0
      %v996 = vadd.f32 0.0, %v995
      %v997 = vpop.f32.mrf.mxu0
      %v998 = vpop.f32.mrf.mxu0
      %v999 = vadd.f32 0.0, %v998
      %v1000 = vpop.f32.mrf.mxu0
      %1001 = vdwg.mxu0
      %v1002 = vpack.c.bf16 %v792, %v789
      %v1003 = vpack.c.bf16 %v800, %v797
      %v1004 = vpack.c.bf16 %v808, %v805
      %v1005 = vpack.c.bf16 %v816, %v813
      %v1008 = vunpack.c.l.b16 %v821
      %v1009 = vunpack.c.l.b16 %v822
      %v1010 = vpack.c.b16 %v1009, %v1008
      %v1012 = vsel %vm834, %v1010, 0
      %1014 = vmatprep.subr.bf16.mxu0 0
      %1015 = vmatpush1.bf16.msra.mxu0 0
      %1016 = vmatprep.subr.bf16.mxu0 0
      %1017 = vmatpush1.bf16.msra.mxu0 0
      %1018 = vmatprep.subr.bf16.mxu0 0
      %1019 = vmatpush1.bf16.msra.mxu0 0
      %1020 = vmatprep.subr.bf16.mxu0 0
      %1021 = vmatpush1.bf16.msra.mxu0 0
      %1022 = vmatprep.subr.bf16.mxu0 0
      %1023 = vmatpush1.bf16.msra.mxu0 0
      %1024 = vmatprep.subr.bf16.mxu0 0
      %1025 = vmatpush1.bf16.msra.mxu0 0
      %1026 = vmatprep.subr.bf16.mxu0 0
      %1027 = vmatpush1.bf16.msra.mxu0 0
      %1028 = vmatprep.subr.bf16.mxu0 0
      %1029 = vmatpush1.bf16.msra.mxu0 %v1002
      %1030 = vmatprep.subr.bf16.mxu0 0
      %1031 = vmatpush2.bf16.msra.mxu0 0
      %1032 = vmatprep.subr.bf16.mxu0 0
      %1033 = vmatpush2.bf16.msra.mxu0 0
      %1034 = vmatprep.subr.bf16.mxu0 0
      %1035 = vmatpush2.bf16.msra.mxu0 0
      %1036 = vmatprep.subr.bf16.mxu0 0
      %1037 = vmatpush2.bf16.msra.mxu0 0
      %1038 = vmatprep.subr.bf16.mxu0 0
      %1039 = vmatpush2.bf16.msra.mxu0 0
      %1040 = vmatprep.subr.bf16.mxu0 0
      %1041 = vmatpush2.bf16.msra.mxu0 0
      %1042 = vmatprep.subr.bf16.mxu0 0
      %1043 = vmatpush2.bf16.msra.mxu0 0
      %1044 = vmatprep.subr.bf16.mxu0 0
      %1045 = vmatpush2.bf16.msra.mxu0 0
      %1046 = vmatprep.mubr.bf16.mxu0 0
      %1047 = vmatmul.mubr.bf16.gmra.mxu0 %v1012
      %v1048 = vpop.f32.mrf.mxu0
      %v1049 = vadd.f32 0.0, %v1048
      %v1050 = vpop.f32.mrf.mxu0
      %v1051 = vpop.f32.mrf.mxu0
      %v1052 = vadd.f32 0.0, %v1051
      %v1053 = vpop.f32.mrf.mxu0
      %1054 = vdwg.mxu0
      %1055 = vmatprep.subr.bf16.mxu0 0
      %1056 = vmatpush1.bf16.msra.mxu0 0
      %1057 = vmatprep.subr.bf16.mxu0 0
      %1058 = vmatpush1.bf16.msra.mxu0 0
      %1059 = vmatprep.subr.bf16.mxu0 0
      %1060 = vmatpush1.bf16.msra.mxu0 0
      %1061 = vmatprep.subr.bf16.mxu0 0
      %1062 = vmatpush1.bf16.msra.mxu0 0
      %1063 = vmatprep.subr.bf16.mxu0 0
      %1064 = vmatpush1.bf16.msra.mxu0 0
      %1065 = vmatprep.subr.bf16.mxu0 0
      %1066 = vmatpush1.bf16.msra.mxu0 0
      %1067 = vmatprep.subr.bf16.mxu0 0
      %1068 = vmatpush1.bf16.msra.mxu0 0
      %1069 = vmatprep.subr.bf16.mxu0 0
      %1070 = vmatpush1.bf16.msra.mxu0 %v1003
      %1071 = vmatprep.subr.bf16.mxu0 0
      %1072 = vmatpush2.bf16.msra.mxu0 0
      %1073 = vmatprep.subr.bf16.mxu0 0
      %1074 = vmatpush2.bf16.msra.mxu0 0
      %1075 = vmatprep.subr.bf16.mxu0 0
      %1076 = vmatpush2.bf16.msra.mxu0 0
      %1077 = vmatprep.subr.bf16.mxu0 0
      %1078 = vmatpush2.bf16.msra.mxu0 0
      %1079 = vmatprep.subr.bf16.mxu0 0
      %1080 = vmatpush2.bf16.msra.mxu0 0
      %1081 = vmatprep.subr.bf16.mxu0 0
      %1082 = vmatpush2.bf16.msra.mxu0 0
      %1083 = vmatprep.subr.bf16.mxu0 0
      %1084 = vmatpush2.bf16.msra.mxu0 0
      %1085 = vmatprep.subr.bf16.mxu0 0
      %1086 = vmatpush2.bf16.msra.mxu0 0
      %1087 = vmatprep.mubr.bf16.mxu0 0
      %1088 = vmatmul.mubr.bf16.gmra.mxu0 %v1012
      %v1089 = vpop.f32.mrf.mxu0
      %v1090 = vadd.f32 0.0, %v1089
      %v1091 = vpop.f32.mrf.mxu0
      %v1092 = vpop.f32.mrf.mxu0
      %v1093 = vadd.f32 0.0, %v1092
      %v1094 = vpop.f32.mrf.mxu0
      %1095 = vdwg.mxu0
      %1096 = vmatprep.subr.bf16.mxu0 0
      %1097 = vmatpush1.bf16.msra.mxu0 0
      %1098 = vmatprep.subr.bf16.mxu0 0
      %1099 = vmatpush1.bf16.msra.mxu0 0
      %1100 = vmatprep.subr.bf16.mxu0 0
      %1101 = vmatpush1.bf16.msra.mxu0 0
      %1102 = vmatprep.subr.bf16.mxu0 0
      %1103 = vmatpush1.bf16.msra.mxu0 0
      %1104 = vmatprep.subr.bf16.mxu0 0
      %1105 = vmatpush1.bf16.msra.mxu0 0
      %1106 = vmatprep.subr.bf16.mxu0 0
      %1107 = vmatpush1.bf16.msra.mxu0 0
      %1108 = vmatprep.subr.bf16.mxu0 0
      %1109 = vmatpush1.bf16.msra.mxu0 0
      %1110 = vmatprep.subr.bf16.mxu0 0
      %1111 = vmatpush1.bf16.msra.mxu0 %v1004
      %1112 = vmatprep.subr.bf16.mxu0 0
      %1113 = vmatpush2.bf16.msra.mxu0 0
      %1114 = vmatprep.subr.bf16.mxu0 0
      %1115 = vmatpush2.bf16.msra.mxu0 0
      %1116 = vmatprep.subr.bf16.mxu0 0
      %1117 = vmatpush2.bf16.msra.mxu0 0
      %1118 = vmatprep.subr.bf16.mxu0 0
      %1119 = vmatpush2.bf16.msra.mxu0 0
      %1120 = vmatprep.subr.bf16.mxu0 0
      %1121 = vmatpush2.bf16.msra.mxu0 0
      %1122 = vmatprep.subr.bf16.mxu0 0
      %1123 = vmatpush2.bf16.msra.mxu0 0
      %1124 = vmatprep.subr.bf16.mxu0 0
      %1125 = vmatpush2.bf16.msra.mxu0 0
      %1126 = vmatprep.subr.bf16.mxu0 0
      %1127 = vmatpush2.bf16.msra.mxu0 0
      %1128 = vmatprep.mubr.bf16.mxu0 0
      %1129 = vmatmul.mubr.bf16.gmra.mxu0 %v1012
      %v1130 = vpop.f32.mrf.mxu0
      %v1131 = vadd.f32 0.0, %v1130
      %v1132 = vpop.f32.mrf.mxu0
      %v1133 = vpop.f32.mrf.mxu0
      %v1134 = vadd.f32 0.0, %v1133
      %v1135 = vpop.f32.mrf.mxu0
      %1136 = vdwg.mxu0
      %1137 = vmatprep.subr.bf16.mxu0 0
      %1138 = vmatpush1.bf16.msra.mxu0 0
      %1139 = vmatprep.subr.bf16.mxu0 0
      %1140 = vmatpush1.bf16.msra.mxu0 0
      %1141 = vmatprep.subr.bf16.mxu0 0
      %1142 = vmatpush1.bf16.msra.mxu0 0
      %1143 = vmatprep.subr.bf16.mxu0 0
      %1144 = vmatpush1.bf16.msra.mxu0 0
      %1145 = vmatprep.subr.bf16.mxu0 0
      %1146 = vmatpush1.bf16.msra.mxu0 0
      %1147 = vmatprep.subr.bf16.mxu0 0
      %1148 = vmatpush1.bf16.msra.mxu0 0
      %1149 = vmatprep.subr.bf16.mxu0 0
      %1150 = vmatpush1.bf16.msra.mxu0 0
      %1151 = vmatprep.subr.bf16.mxu0 0
      %1152 = vmatpush1.bf16.msra.mxu0 %v1005
      %1153 = vmatprep.subr.bf16.mxu0 0
      %1154 = vmatpush2.bf16.msra.mxu0 0
      %1155 = vmatprep.subr.bf16.mxu0 0
      %1156 = vmatpush2.bf16.msra.mxu0 0
      %1157 = vmatprep.subr.bf16.mxu0 0
      %1158 = vmatpush2.bf16.msra.mxu0 0
      %1159 = vmatprep.subr.bf16.mxu0 0
      %1160 = vmatpush2.bf16.msra.mxu0 0
      %1161 = vmatprep.subr.bf16.mxu0 0
      %1162 = vmatpush2.bf16.msra.mxu0 0
      %1163 = vmatprep.subr.bf16.mxu0 0
      %1164 = vmatpush2.bf16.msra.mxu0 0
      %1165 = vmatprep.subr.bf16.mxu0 0
      %1166 = vmatpush2.bf16.msra.mxu0 0
      %1167 = vmatprep.subr.bf16.mxu0 0
      %1168 = vmatpush2.bf16.msra.mxu0 0
      %1169 = vmatprep.mubr.bf16.mxu0 0
      %1170 = vmatmul.mubr.bf16.gmra.mxu0 %v1012
      %v1171 = vpop.f32.mrf.mxu0
      %v1172 = vadd.f32 0.0, %v1171
      %v1173 = vpop.f32.mrf.mxu0
      %v1174 = vpop.f32.mrf.mxu0
      %v1175 = vadd.f32 0.0, %v1174
      %v1176 = vpop.f32.mrf.mxu0
      %1177 = vdwg.mxu0
      %v1178 = vadd.f32 %v708, %v789
      %v1179 = vadd.f32 %v711, %v792
      %v1180 = vadd.f32 %v716, %v797
      %v1181 = vadd.f32 %v719, %v800
      %v1182 = vadd.f32 %v724, %v805
      %v1183 = vadd.f32 %v727, %v808
      %v1184 = vadd.f32 %v732, %v813
      %v1185 = vadd.f32 %v735, %v816
      %v1186 = vpack.c.bf16 %v1179, %v1178
      %v1187 = vpack.c.bf16 %v1181, %v1180
      %v1188 = vpack.c.bf16 %v1183, %v1182
      %v1189 = vpack.c.bf16 %v1185, %v1184
      %v1192 = vunpack.c.l.b16 %v823
      %v1193 = vunpack.c.l.b16 %v824
      %v1194 = vpack.c.b16 %v1193, %v1192
      %v1196 = vsel %vm834, %v1194, 0
      %1198 = vmatprep.subr.bf16.mxu0 0
      %1199 = vmatpush1.bf16.msra.mxu0 0
      %1200 = vmatprep.subr.bf16.mxu0 0
      %1201 = vmatpush1.bf16.msra.mxu0 0
      %1202 = vmatprep.subr.bf16.mxu0 0
      %1203 = vmatpush1.bf16.msra.mxu0 0
      %1204 = vmatprep.subr.bf16.mxu0 0
      %1205 = vmatpush1.bf16.msra.mxu0 0
      %1206 = vmatprep.subr.bf16.mxu0 0
      %1207 = vmatpush1.bf16.msra.mxu0 0
      %1208 = vmatprep.subr.bf16.mxu0 0
      %1209 = vmatpush1.bf16.msra.mxu0 0
      %1210 = vmatprep.subr.bf16.mxu0 0
      %1211 = vmatpush1.bf16.msra.mxu0 0
      %1212 = vmatprep.subr.bf16.mxu0 0
      %1213 = vmatpush1.bf16.msra.mxu0 %v1186
      %1214 = vmatprep.subr.bf16.mxu0 0
      %1215 = vmatpush2.bf16.msra.mxu0 0
      %1216 = vmatprep.subr.bf16.mxu0 0
      %1217 = vmatpush2.bf16.msra.mxu0 0
      %1218 = vmatprep.subr.bf16.mxu0 0
      %1219 = vmatpush2.bf16.msra.mxu0 0
      %1220 = vmatprep.subr.bf16.mxu0 0
      %1221 = vmatpush2.bf16.msra.mxu0 0
      %1222 = vmatprep.subr.bf16.mxu0 0
      %1223 = vmatpush2.bf16.msra.mxu0 0
      %1224 = vmatprep.subr.bf16.mxu0 0
      %1225 = vmatpush2.bf16.msra.mxu0 0
      %1226 = vmatprep.subr.bf16.mxu0 0
      %1227 = vmatpush2.bf16.msra.mxu0 0
      %1228 = vmatprep.subr.bf16.mxu0 0
      %1229 = vmatpush2.bf16.msra.mxu0 0
      %1230 = vmatprep.mubr.bf16.mxu0 0
      %1231 = vmatmul.mubr.bf16.gmra.mxu0 %v1196
      %v1232 = vpop.f32.mrf.mxu0
      %v1233 = vadd.f32 0.0, %v1232
      %v1234 = vpop.f32.mrf.mxu0
      %v1235 = vpop.f32.mrf.mxu0
      %v1236 = vadd.f32 0.0, %v1235
      %v1237 = vpop.f32.mrf.mxu0
      %1238 = vdwg.mxu0
      %1239 = vmatprep.subr.bf16.mxu0 0
      %1240 = vmatpush1.bf16.msra.mxu0 0
      %1241 = vmatprep.subr.bf16.mxu0 0
      %1242 = vmatpush1.bf16.msra.mxu0 0
      %1243 = vmatprep.subr.bf16.mxu0 0
      %1244 = vmatpush1.bf16.msra.mxu0 0
      %1245 = vmatprep.subr.bf16.mxu0 0
      %1246 = vmatpush1.bf16.msra.mxu0 0
      %1247 = vmatprep.subr.bf16.mxu0 0
      %1248 = vmatpush1.bf16.msra.mxu0 0
      %1249 = vmatprep.subr.bf16.mxu0 0
      %1250 = vmatpush1.bf16.msra.mxu0 0
      %1251 = vmatprep.subr.bf16.mxu0 0
      %1252 = vmatpush1.bf16.msra.mxu0 0
      %1253 = vmatprep.subr.bf16.mxu0 0
      %1254 = vmatpush1.bf16.msra.mxu0 %v1187
      %1255 = vmatprep.subr.bf16.mxu0 0
      %1256 = vmatpush2.bf16.msra.mxu0 0
      %1257 = vmatprep.subr.bf16.mxu0 0
      %1258 = vmatpush2.bf16.msra.mxu0 0
      %1259 = vmatprep.subr.bf16.mxu0 0
      %1260 = vmatpush2.bf16.msra.mxu0 0
      %1261 = vmatprep.subr.bf16.mxu0 0
      %1262 = vmatpush2.bf16.msra.mxu0 0
      %1263 = vmatprep.subr.bf16.mxu0 0
      %1264 = vmatpush2.bf16.msra.mxu0 0
      %1265 = vmatprep.subr.bf16.mxu0 0
      %1266 = vmatpush2.bf16.msra.mxu0 0
      %1267 = vmatprep.subr.bf16.mxu0 0
      %1268 = vmatpush2.bf16.msra.mxu0 0
      %1269 = vmatprep.subr.bf16.mxu0 0
      %1270 = vmatpush2.bf16.msra.mxu0 0
      %1271 = vmatprep.mubr.bf16.mxu0 0
      %1272 = vmatmul.mubr.bf16.gmra.mxu0 %v1196
      %v1273 = vpop.f32.mrf.mxu0
      %v1274 = vadd.f32 0.0, %v1273
      %v1275 = vpop.f32.mrf.mxu0
      %v1276 = vpop.f32.mrf.mxu0
      %v1277 = vadd.f32 0.0, %v1276
      %v1278 = vpop.f32.mrf.mxu0
      %1279 = vdwg.mxu0
      %1280 = vmatprep.subr.bf16.mxu0 0
      %1281 = vmatpush1.bf16.msra.mxu0 0
      %1282 = vmatprep.subr.bf16.mxu0 0
      %1283 = vmatpush1.bf16.msra.mxu0 0
      %1284 = vmatprep.subr.bf16.mxu0 0
      %1285 = vmatpush1.bf16.msra.mxu0 0
      %1286 = vmatprep.subr.bf16.mxu0 0
      %1287 = vmatpush1.bf16.msra.mxu0 0
      %1288 = vmatprep.subr.bf16.mxu0 0
      %1289 = vmatpush1.bf16.msra.mxu0 0
      %1290 = vmatprep.subr.bf16.mxu0 0
      %1291 = vmatpush1.bf16.msra.mxu0 0
      %1292 = vmatprep.subr.bf16.mxu0 0
      %1293 = vmatpush1.bf16.msra.mxu0 0
      %1294 = vmatprep.subr.bf16.mxu0 0
      %1295 = vmatpush1.bf16.msra.mxu0 %v1188
      %1296 = vmatprep.subr.bf16.mxu0 0
      %1297 = vmatpush2.bf16.msra.mxu0 0
      %1298 = vmatprep.subr.bf16.mxu0 0
      %1299 = vmatpush2.bf16.msra.mxu0 0
      %1300 = vmatprep.subr.bf16.mxu0 0
      %1301 = vmatpush2.bf16.msra.mxu0 0
      %1302 = vmatprep.subr.bf16.mxu0 0
      %1303 = vmatpush2.bf16.msra.mxu0 0
      %1304 = vmatprep.subr.bf16.mxu0 0
      %1305 = vmatpush2.bf16.msra.mxu0 0
      %1306 = vmatprep.subr.bf16.mxu0 0
      %1307 = vmatpush2.bf16.msra.mxu0 0
      %1308 = vmatprep.subr.bf16.mxu0 0
      %1309 = vmatpush2.bf16.msra.mxu0 0
      %1310 = vmatprep.subr.bf16.mxu0 0
      %1311 = vmatpush2.bf16.msra.mxu0 0
      %1312 = vmatprep.mubr.bf16.mxu0 0
      %1313 = vmatmul.mubr.bf16.gmra.mxu0 %v1196
      %v1314 = vpop.f32.mrf.mxu0
      %v1315 = vadd.f32 0.0, %v1314
      %v1316 = vpop.f32.mrf.mxu0
      %v1317 = vpop.f32.mrf.mxu0
      %v1318 = vadd.f32 0.0, %v1317
      %v1319 = vpop.f32.mrf.mxu0
      %1320 = vdwg.mxu0
      %1321 = vmatprep.subr.bf16.mxu0 0
      %1322 = vmatpush1.bf16.msra.mxu0 0
      %1323 = vmatprep.subr.bf16.mxu0 0
      %1324 = vmatpush1.bf16.msra.mxu0 0
      %1325 = vmatprep.subr.bf16.mxu0 0
      %1326 = vmatpush1.bf16.msra.mxu0 0
      %1327 = vmatprep.subr.bf16.mxu0 0
      %1328 = vmatpush1.bf16.msra.mxu0 0
      %1329 = vmatprep.subr.bf16.mxu0 0
      %1330 = vmatpush1.bf16.msra.mxu0 0
      %1331 = vmatprep.subr.bf16.mxu0 0
      %1332 = vmatpush1.bf16.msra.mxu0 0
      %1333 = vmatprep.subr.bf16.mxu0 0
      %1334 = vmatpush1.bf16.msra.mxu0 0
      %1335 = vmatprep.subr.bf16.mxu0 0
      %1336 = vmatpush1.bf16.msra.mxu0 %v1189
      %1337 = vmatprep.subr.bf16.mxu0 0
      %1338 = vmatpush2.bf16.msra.mxu0 0
      %1339 = vmatprep.subr.bf16.mxu0 0
      %1340 = vmatpush2.bf16.msra.mxu0 0
      %1341 = vmatprep.subr.bf16.mxu0 0
      %1342 = vmatpush2.bf16.msra.mxu0 0
      %1343 = vmatprep.subr.bf16.mxu0 0
      %1344 = vmatpush2.bf16.msra.mxu0 0
      %1345 = vmatprep.subr.bf16.mxu0 0
      %1346 = vmatpush2.bf16.msra.mxu0 0
      %1347 = vmatprep.subr.bf16.mxu0 0
      %1348 = vmatpush2.bf16.msra.mxu0 0
      %1349 = vmatprep.subr.bf16.mxu0 0
      %1350 = vmatpush2.bf16.msra.mxu0 0
      %1351 = vmatprep.subr.bf16.mxu0 0
      %1352 = vmatpush2.bf16.msra.mxu0 0
      %1353 = vmatprep.mubr.bf16.mxu0 0
      %1354 = vmatmul.mubr.bf16.gmra.mxu0 %v1196
      %v1355 = vpop.f32.mrf.mxu0
      %v1356 = vadd.f32 0.0, %v1355
      %v1357 = vpop.f32.mrf.mxu0
      %v1358 = vpop.f32.mrf.mxu0
      %v1359 = vadd.f32 0.0, %v1358
      %v1360 = vpop.f32.mrf.mxu0
      %1361 = vdwg.mxu0
      %v1362 = vsub.f32 %v873, %v1049
      %v1363 = vsub.f32 %v876, %v1052
      %v1364 = vsub.f32 %v914, %v1090
      %v1365 = vsub.f32 %v917, %v1093
      %v1366 = vsub.f32 %v955, %v1131
      %v1367 = vsub.f32 %v958, %v1134
      %v1368 = vsub.f32 %v996, %v1172
      %v1369 = vsub.f32 %v999, %v1175
      %v1370 = vsub.f32 %v1233, %v873
      %v1371 = vsub.f32 %v1236, %v876
      %v1372 = vsub.f32 %v1274, %v914
      %v1373 = vsub.f32 %v1277, %v917
      %v1374 = vsub.f32 %v1315, %v955
      %v1375 = vsub.f32 %v1318, %v958
      %v1376 = vsub.f32 %v1356, %v996
      %v1377 = vsub.f32 %v1359, %v999
      %v1378 = vsub.f32 %v1370, %v1049
      %v1379 = vsub.f32 %v1371, %v1052
      %v1380 = vsub.f32 %v1372, %v1090
      %v1381 = vsub.f32 %v1373, %v1093
      %v1382 = vsub.f32 %v1374, %v1131
      %v1383 = vsub.f32 %v1375, %v1134
      %v1384 = vsub.f32 %v1376, %v1172
      %v1385 = vsub.f32 %v1377, %v1175
      %v1386 = vcombine.low %v1362, %v1366
      %v1387 = vcombine.high %v1362, %v1366
      %v1389 = vunpack.c.l.s4 1983009808
      %v1390 = vunpack.c.0.s8 %v1389
      %v1391 = vlaneseq
      %v1392 = vshrl.u32 %v1391, 7
      %v1393 = vsub.s32 %v1390, %v1392
      %v1394 = vrot.slane %v1386, %v1393
      %v1396 = vunpack.c.l.s4 1983009808
      %v1397 = vunpack.c.0.s8 %v1396
      %v1398 = vlaneseq
      %v1399 = vshrl.u32 %v1398, 7
      %v1400 = vsub.s32 %v1397, %v1399
      %v1401 = vrot.slane %v1387, %v1400
      %v1402 = vcombine.low %v1364, %v1368
      %v1403 = vcombine.high %v1364, %v1368
      %v1405 = vunpack.c.l.s4 1983009808
      %v1406 = vunpack.c.0.s8 %v1405
      %v1407 = vlaneseq
      %v1408 = vshrl.u32 %v1407, 7
      %v1409 = vsub.s32 %v1406, %v1408
      %v1410 = vrot.slane %v1402, %v1409
      %v1412 = vunpack.c.l.s4 1983009808
      %v1413 = vunpack.c.0.s8 %v1412
      %v1414 = vlaneseq
      %v1415 = vshrl.u32 %v1414, 7
      %v1416 = vsub.s32 %v1413, %v1415
      %v1417 = vrot.slane %v1403, %v1416
      %v1418 = vcombine.low %v1378, %v1382
      %v1419 = vcombine.high %v1378, %v1382
      %v1421 = vunpack.c.l.s4 1983009808
      %v1422 = vunpack.c.0.s8 %v1421
      %v1423 = vlaneseq
      %v1424 = vshrl.u32 %v1423, 7
      %v1425 = vsub.s32 %v1422, %v1424
      %v1426 = vrot.slane %v1418, %v1425
      %v1428 = vunpack.c.l.s4 1983009808
      %v1429 = vunpack.c.0.s8 %v1428
      %v1430 = vlaneseq
      %v1431 = vshrl.u32 %v1430, 7
      %v1432 = vsub.s32 %v1429, %v1431
      %v1433 = vrot.slane %v1419, %v1432
      %v1434 = vcombine.low %v1380, %v1384
      %v1435 = vcombine.high %v1380, %v1384
      %v1437 = vunpack.c.l.s4 1983009808
      %v1438 = vunpack.c.0.s8 %v1437
      %v1439 = vlaneseq
      %v1440 = vshrl.u32 %v1439, 7
      %v1441 = vsub.s32 %v1438, %v1440
      %v1442 = vrot.slane %v1434, %v1441
      %v1444 = vunpack.c.l.s4 1983009808
      %v1445 = vunpack.c.0.s8 %v1444
      %v1446 = vlaneseq
      %v1447 = vshrl.u32 %v1446, 7
      %v1448 = vsub.s32 %v1445, %v1447
      %v1449 = vrot.slane %v1435, %v1448
      %v1450 = vcombine.low %v1394, %v1410
      %v1451 = vcombine.high %v1394, %v1410
      %v1453 = vunpack.c.l.s4 1934713408
      %v1454 = vunpack.c.0.s8 %v1453
      %v1455 = vlaneseq
      %v1456 = vshrl.u32 %v1455, 7
      %v1457 = vsub.s32 %v1454, %v1456
      %v1458 = vrot.slane %v1450, %v1457
      %v1460 = vunpack.c.l.s4 1934713408
      %v1461 = vunpack.c.0.s8 %v1460
      %v1462 = vlaneseq
      %v1463 = vshrl.u32 %v1462, 7
      %v1464 = vsub.s32 %v1461, %v1463
      %v1465 = vrot.slane %v1451, %v1464
      %v1466 = vcombine.low %v1401, %v1417
      %v1467 = vcombine.high %v1401, %v1417
      %v1469 = vunpack.c.l.s4 1934713408
      %v1470 = vunpack.c.0.s8 %v1469
      %v1471 = vlaneseq
      %v1472 = vshrl.u32 %v1471, 7
      %v1473 = vsub.s32 %v1470, %v1472
      %v1474 = vrot.slane %v1466, %v1473
      %v1476 = vunpack.c.l.s4 1934713408
      %v1477 = vunpack.c.0.s8 %v1476
      %v1478 = vlaneseq
      %v1479 = vshrl.u32 %v1478, 7
      %v1480 = vsub.s32 %v1477, %v1479
      %v1481 = vrot.slane %v1467, %v1480
      %v1482 = vcombine.low %v1426, %v1442
      %v1483 = vcombine.high %v1426, %v1442
      %v1485 = vunpack.c.l.s4 1934713408
      %v1486 = vunpack.c.0.s8 %v1485
      %v1487 = vlaneseq
      %v1488 = vshrl.u32 %v1487, 7
      %v1489 = vsub.s32 %v1486, %v1488
      %v1490 = vrot.slane %v1482, %v1489
      %v1492 = vunpack.c.l.s4 1934713408
      %v1493 = vunpack.c.0.s8 %v1492
      %v1494 = vlaneseq
      %v1495 = vshrl.u32 %v1494, 7
      %v1496 = vsub.s32 %v1493, %v1495
      %v1497 = vrot.slane %v1483, %v1496
      %v1498 = vcombine.low %v1433, %v1449
      %v1499 = vcombine.high %v1433, %v1449
      %v1501 = vunpack.c.l.s4 1934713408
      %v1502 = vunpack.c.0.s8 %v1501
      %v1503 = vlaneseq
      %v1504 = vshrl.u32 %v1503, 7
      %v1505 = vsub.s32 %v1502, %v1504
      %v1506 = vrot.slane %v1498, %v1505
      %v1508 = vunpack.c.l.s4 1934713408
      %v1509 = vunpack.c.0.s8 %v1508
      %v1510 = vlaneseq
      %v1511 = vshrl.u32 %v1510, 7
      %v1512 = vsub.s32 %v1509, %v1511
      %v1513 = vrot.slane %v1499, %v1512
      %v1514 = vcombine.low %v1458, %v1490
      %v1515 = vcombine.high %v1458, %v1490
      %v1516 = vcombine.low %v1465, %v1497
      %v1517 = vcombine.high %v1465, %v1497
      %v1518 = vcombine.low %v1474, %v1506
      %v1519 = vcombine.high %v1474, %v1506
      %v1520 = vcombine.low %v1481, %v1513
      %v1521 = vcombine.high %v1481, %v1513
      %v1522 = vcombine.low %v1363, %v1367
      %v1523 = vcombine.high %v1363, %v1367
      %v1525 = vunpack.c.l.s4 1983009808
      %v1526 = vunpack.c.0.s8 %v1525
      %v1527 = vlaneseq
      %v1528 = vshrl.u32 %v1527, 7
      %v1529 = vsub.s32 %v1526, %v1528
      %v1530 = vrot.slane %v1522, %v1529
      %v1532 = vunpack.c.l.s4 1983009808
      %v1533 = vunpack.c.0.s8 %v1532
      %v1534 = vlaneseq
      %v1535 = vshrl.u32 %v1534, 7
      %v1536 = vsub.s32 %v1533, %v1535
      %v1537 = vrot.slane %v1523, %v1536
      %v1538 = vcombine.low %v1365, %v1369
      %v1539 = vcombine.high %v1365, %v1369
      %v1541 = vunpack.c.l.s4 1983009808
      %v1542 = vunpack.c.0.s8 %v1541
      %v1543 = vlaneseq
      %v1544 = vshrl.u32 %v1543, 7
      %v1545 = vsub.s32 %v1542, %v1544
      %v1546 = vrot.slane %v1538, %v1545
      %v1548 = vunpack.c.l.s4 1983009808
      %v1549 = vunpack.c.0.s8 %v1548
      %v1550 = vlaneseq
      %v1551 = vshrl.u32 %v1550, 7
      %v1552 = vsub.s32 %v1549, %v1551
      %v1553 = vrot.slane %v1539, %v1552
      %v1554 = vcombine.low %v1379, %v1383
      %v1555 = vcombine.high %v1379, %v1383
      %v1557 = vunpack.c.l.s4 1983009808
      %v1558 = vunpack.c.0.s8 %v1557
      %v1559 = vlaneseq
      %v1560 = vshrl.u32 %v1559, 7
      %v1561 = vsub.s32 %v1558, %v1560
      %v1562 = vrot.slane %v1554, %v1561
      %v1564 = vunpack.c.l.s4 1983009808
      %v1565 = vunpack.c.0.s8 %v1564
      %v1566 = vlaneseq
      %v1567 = vshrl.u32 %v1566, 7
      %v1568 = vsub.s32 %v1565, %v1567
      %v1569 = vrot.slane %v1555, %v1568
      %v1570 = vcombine.low %v1381, %v1385
      %v1571 = vcombine.high %v1381, %v1385
      %v1573 = vunpack.c.l.s4 1983009808
      %v1574 = vunpack.c.0.s8 %v1573
      %v1575 = vlaneseq
      %v1576 = vshrl.u32 %v1575, 7
      %v1577 = vsub.s32 %v1574, %v1576
      %v1578 = vrot.slane %v1570, %v1577
      %v1580 = vunpack.c.l.s4 1983009808
      %v1581 = vunpack.c.0.s8 %v1580
      %v1582 = vlaneseq
      %v1583 = vshrl.u32 %v1582, 7
      %v1584 = vsub.s32 %v1581, %v1583
      %v1585 = vrot.slane %v1571, %v1584
      %v1586 = vcombine.low %v1530, %v1546
      %v1587 = vcombine.high %v1530, %v1546
      %v1589 = vunpack.c.l.s4 1934713408
      %v1590 = vunpack.c.0.s8 %v1589
      %v1591 = vlaneseq
      %v1592 = vshrl.u32 %v1591, 7
      %v1593 = vsub.s32 %v1590, %v1592
      %v1594 = vrot.slane %v1586, %v1593
      %v1596 = vunpack.c.l.s4 1934713408
      %v1597 = vunpack.c.0.s8 %v1596
      %v1598 = vlaneseq
      %v1599 = vshrl.u32 %v1598, 7
      %v1600 = vsub.s32 %v1597, %v1599
      %v1601 = vrot.slane %v1587, %v1600
      %v1602 = vcombine.low %v1537, %v1553
      %v1603 = vcombine.high %v1537, %v1553
      %v1605 = vunpack.c.l.s4 1934713408
      %v1606 = vunpack.c.0.s8 %v1605
      %v1607 = vlaneseq
      %v1608 = vshrl.u32 %v1607, 7
      %v1609 = vsub.s32 %v1606, %v1608
      %v1610 = vrot.slane %v1602, %v1609
      %v1612 = vunpack.c.l.s4 1934713408
      %v1613 = vunpack.c.0.s8 %v1612
      %v1614 = vlaneseq
      %v1615 = vshrl.u32 %v1614, 7
      %v1616 = vsub.s32 %v1613, %v1615
      %v1617 = vrot.slane %v1603, %v1616
      %v1618 = vcombine.low %v1562, %v1578
      %v1619 = vcombine.high %v1562, %v1578
      %v1621 = vunpack.c.l.s4 1934713408
      %v1622 = vunpack.c.0.s8 %v1621
      %v1623 = vlaneseq
      %v1624 = vshrl.u32 %v1623, 7
      %v1625 = vsub.s32 %v1622, %v1624
      %v1626 = vrot.slane %v1618, %v1625
      %v1628 = vunpack.c.l.s4 1934713408
      %v1629 = vunpack.c.0.s8 %v1628
      %v1630 = vlaneseq
      %v1631 = vshrl.u32 %v1630, 7
      %v1632 = vsub.s32 %v1629, %v1631
      %v1633 = vrot.slane %v1619, %v1632
      %v1634 = vcombine.low %v1569, %v1585
      %v1635 = vcombine.high %v1569, %v1585
      %v1637 = vunpack.c.l.s4 1934713408
      %v1638 = vunpack.c.0.s8 %v1637
      %v1639 = vlaneseq
      %v1640 = vshrl.u32 %v1639, 7
      %v1641 = vsub.s32 %v1638, %v1640
      %v1642 = vrot.slane %v1634, %v1641
      %v1644 = vunpack.c.l.s4 1934713408
      %v1645 = vunpack.c.0.s8 %v1644
      %v1646 = vlaneseq
      %v1647 = vshrl.u32 %v1646, 7
      %v1648 = vsub.s32 %v1645, %v1647
      %v1649 = vrot.slane %v1635, %v1648
      %v1650 = vcombine.low %v1594, %v1626
      %v1651 = vcombine.high %v1594, %v1626
      %v1652 = vcombine.low %v1601, %v1633
      %v1653 = vcombine.high %v1601, %v1633
      %v1654 = vcombine.low %v1610, %v1642
      %v1655 = vcombine.high %v1610, %v1642
      %v1656 = vcombine.low %v1617, %v1649
      %v1657 = vcombine.high %v1617, %v1649
      %1659 = vrot.lane.b32.xlu0 %v1515, 16
      %v1660 = vpop.permute.xlu0 %1659
      %1663 = vrot.lane.b32.xlu0 %v1516, 32
      %v1664 = vpop.permute.xlu0 %1663
      %1667 = vrot.lane.b32.xlu0 %v1517, 48
      %v1668 = vpop.permute.xlu0 %1667
      %1671 = vrot.lane.b32.xlu0 %v1518, 64
      %v1672 = vpop.permute.xlu0 %1671
      %1675 = vrot.lane.b32.xlu0 %v1519, 80
      %v1676 = vpop.permute.xlu0 %1675
      %1679 = vrot.lane.b32.xlu0 %v1520, 96
      %v1680 = vpop.permute.xlu0 %1679
      %1683 = vrot.lane.b32.xlu0 %v1521, 112
      %v1684 = vpop.permute.xlu0 %1683
      %1687 = vrot.lane.b32.xlu0 %v1651, 16
      %v1688 = vpop.permute.xlu0 %1687
      %1691 = vrot.lane.b32.xlu0 %v1652, 32
      %v1692 = vpop.permute.xlu0 %1691
      %1695 = vrot.lane.b32.xlu0 %v1653, 48
      %v1696 = vpop.permute.xlu0 %1695
      %1699 = vrot.lane.b32.xlu0 %v1654, 64
      %v1700 = vpop.permute.xlu0 %1699
      %1703 = vrot.lane.b32.xlu0 %v1655, 80
      %v1704 = vpop.permute.xlu0 %1703
      %1707 = vrot.lane.b32.xlu0 %v1656, 96
      %v1708 = vpop.permute.xlu0 %1707
      %1711 = vrot.lane.b32.xlu0 %v1657, 112
      %v1712 = vpop.permute.xlu0 %1711
      %v1714 = vsel %vm834, %v1514, %v1660
      %v1715 = vsel %vm660, %v1714, %v1664
      %vm1716 = vcmask 392192
      %v1717 = vsel %vm1716, %v1715, %v1668
      %vm1718 = vcmask 523264
      %v1719 = vsel %vm1718, %v1717, %v1672
      %vm1720 = vcmask 654336
      %v1721 = vsel %vm1720, %v1719, %v1676
      %vm1722 = vcmask 785408
      %v1723 = vsel %vm1722, %v1721, %v1680
      %vm1724 = vcmask 916480
      %v1725 = vsel %vm1724, %v1723, %v1684
      %v1726 = vsel %vm834, %v1650, %v1688
      %v1727 = vsel %vm660, %v1726, %v1692
      %v1728 = vsel %vm1716, %v1727, %v1696
      %v1729 = vsel %vm1718, %v1728, %v1700
      %v1730 = vsel %vm1720, %v1729, %v1704
      %v1731 = vsel %vm1722, %v1730, %v1708
      %v1732 = vsel %vm1724, %v1731, %v1712
      %v1733 = vld [vmem:[%s14] sm:$0xf]
      %v1734 = vpack.c.bf16 %v1725, %v1725
      %v1735 = vpack.c.bf16 %v1732, %v1732
      %v1736 = vld [vmem:[%s15] sm:$0xff]
      %1738 = vset.pattern.permute.xlu0 0
      %1739 = vperm.xlu0 %1738, %v1736
      %v1740 = vpop.permute.xlu0 %1739
      %vm1742 = vcmask 64512
      %v1744 = vsel %vm1742, %v1733, 0
      %vm1746 = vcmask 1043456
      %v1748 = vsel %vm1746, %v1734, 0
      %v1751 = vsel %vm1746, %v1735, 0
      %1753 = vmatprep.subr.bf16.mxu0 0
      %1754 = vmatpush1.bf16.msra.mxu0 0
      %1755 = vmatprep.subr.bf16.mxu0 0
      %1756 = vmatpush1.bf16.msra.mxu0 0
      %1757 = vmatprep.subr.bf16.mxu0 0
      %1758 = vmatpush1.bf16.msra.mxu0 0
      %1759 = vmatprep.subr.bf16.mxu0 0
      %1760 = vmatpush1.bf16.msra.mxu0 0
      %1761 = vmatprep.subr.bf16.mxu0 0
      %1762 = vmatpush1.bf16.msra.mxu0 0
      %1763 = vmatprep.subr.bf16.mxu0 0
      %1764 = vmatpush1.bf16.msra.mxu0 0
      %1765 = vmatprep.subr.bf16.mxu0 0
      %1766 = vmatpush1.bf16.msra.mxu0 0
      %1767 = vmatprep.subr.bf16.mxu0 %v1751
      %1768 = vmatpush1.bf16.msra.mxu0 %v1748
      %1769 = vmatprep.subr.bf16.mxu0 0
      %1770 = vmatpush2.bf16.msra.mxu0 0
      %1771 = vmatprep.subr.bf16.mxu0 0
      %1772 = vmatpush2.bf16.msra.mxu0 0
      %1773 = vmatprep.subr.bf16.mxu0 0
      %1774 = vmatpush2.bf16.msra.mxu0 0
      %1775 = vmatprep.subr.bf16.mxu0 0
      %1776 = vmatpush2.bf16.msra.mxu0 0
      %1777 = vmatprep.subr.bf16.mxu0 0
      %1778 = vmatpush2.bf16.msra.mxu0 0
      %1779 = vmatprep.subr.bf16.mxu0 0
      %1780 = vmatpush2.bf16.msra.mxu0 0
      %1781 = vmatprep.subr.bf16.mxu0 0
      %1782 = vmatpush2.bf16.msra.mxu0 0
      %1783 = vmatprep.subr.bf16.mxu0 0
      %1784 = vmatpush2.bf16.msra.mxu0 0
      %1785 = vmatprep.mubr.bf16.mxu0 0
      %1786 = vmatmul.mubr.bf16.gmra.mxu0 %v1744
      %v1787 = vpop.f32.mrf.mxu0
      %v1788 = vadd.f32 %v1740, %v1787
      %v1789 = vpop.f32.mrf.mxu0
      %v1790 = vadd.f32 %v1740, %v1789
      %v1791 = vpop.f32.mrf.mxu0
      %v1792 = vpop.f32.mrf.mxu0
      %1793 = vdwg.mxu0
      %v1794 = vmax.f32 %v1788, 0.0
      %v1795 = vmax.f32 %v1790, 0.0
      %v1796 = vld [vmem:[%s16] sm:$0xf]
      %v1797 = vpack.c.bf16 %v1794, %v1794
      %v1798 = vpack.c.bf16 %v1795, %v1795
      %v1799 = vld [vmem:[%s17] sm:$0xff]
      %1801 = vset.pattern.permute.xlu0 0
      %1802 = vperm.xlu0 %1801, %v1799
      %v1803 = vpop.permute.xlu0 %1802
      %v1806 = vsel %vm1742, %v1796, 0
      %v1809 = vsel %vm1746, %v1797, 0
      %v1812 = vsel %vm1746, %v1798, 0
      %1814 = vmatprep.subr.bf16.mxu0 0
      %1815 = vmatpush1.bf16.msra.mxu0 0
      %1816 = vmatprep.subr.bf16.mxu0 0
      %1817 = vmatpush1.bf16.msra.mxu0 0
      %1818 = vmatprep.subr.bf16.mxu0 0
      %1819 = vmatpush1.bf16.msra.mxu0 0
      %1820 = vmatprep.subr.bf16.mxu0 0
      %1821 = vmatpush1.bf16.msra.mxu0 0
      %1822 = vmatprep.subr.bf16.mxu0 0
      %1823 = vmatpush1.bf16.msra.mxu0 0
      %1824 = vmatprep.subr.bf16.mxu0 0
      %1825 = vmatpush1.bf16.msra.mxu0 0
      %1826 = vmatprep.subr.bf16.mxu0 0
      %1827 = vmatpush1.bf16.msra.mxu0 0
      %1828 = vmatprep.subr.bf16.mxu0 %v1812
      %1829 = vmatpush1.bf16.msra.mxu0 %v1809
      %1830 = vmatprep.subr.bf16.mxu0 0
      %1831 = vmatpush2.bf16.msra.mxu0 0
      %1832 = vmatprep.subr.bf16.mxu0 0
      %1833 = vmatpush2.bf16.msra.mxu0 0
      %1834 = vmatprep.subr.bf16.mxu0 0
      %1835 = vmatpush2.bf16.msra.mxu0 0
      %1836 = vmatprep.subr.bf16.mxu0 0
      %1837 = vmatpush2.bf16.msra.mxu0 0
      %1838 = vmatprep.subr.bf16.mxu0 0
      %1839 = vmatpush2.bf16.msra.mxu0 0
      %1840 = vmatprep.subr.bf16.mxu0 0
      %1841 = vmatpush2.bf16.msra.mxu0 0
      %1842 = vmatprep.subr.bf16.mxu0 0
      %1843 = vmatpush2.bf16.msra.mxu0 0
      %1844 = vmatprep.subr.bf16.mxu0 0
      %1845 = vmatpush2.bf16.msra.mxu0 0
      %1846 = vmatprep.mubr.bf16.mxu0 0
      %1847 = vmatmul.mubr.bf16.gmra.mxu0 %v1806
      %v1848 = vpop.f32.mrf.mxu0
      %v1849 = vadd.f32 %v1803, %v1848
      %v1850 = vpop.f32.mrf.mxu0
      %v1851 = vadd.f32 %v1803, %v1850
      %v1852 = vpop.f32.mrf.mxu0
      %v1853 = vpop.f32.mrf.mxu0
      %1854 = vdwg.mxu0
      %1856 = vrot.lane.b32.xlu0 %v1849, 112
      %v1857 = vpop.permute.xlu0 %1856
      %1859 = vrot.lane.b32.xlu0 %v1849, 96
      %v1860 = vpop.permute.xlu0 %1859
      %1862 = vrot.lane.b32.xlu0 %v1849, 80
      %v1863 = vpop.permute.xlu0 %1862
      %1865 = vrot.lane.b32.xlu0 %v1849, 64
      %v1866 = vpop.permute.xlu0 %1865
      %1868 = vrot.lane.b32.xlu0 %v1849, 48
      %v1869 = vpop.permute.xlu0 %1868
      %1871 = vrot.lane.b32.xlu0 %v1849, 32
      %v1872 = vpop.permute.xlu0 %1871
      %1874 = vrot.lane.b32.xlu0 %v1849, 16
      %v1875 = vpop.permute.xlu0 %1874
      %1878 = vrot.lane.b32.xlu0 %v1851, 112
      %v1879 = vpop.permute.xlu0 %1878
      %1881 = vrot.lane.b32.xlu0 %v1851, 96
      %v1882 = vpop.permute.xlu0 %1881
      %1884 = vrot.lane.b32.xlu0 %v1851, 80
      %v1885 = vpop.permute.xlu0 %1884
      %1887 = vrot.lane.b32.xlu0 %v1851, 64
      %v1888 = vpop.permute.xlu0 %1887
      %1890 = vrot.lane.b32.xlu0 %v1851, 48
      %v1891 = vpop.permute.xlu0 %1890
      %1893 = vrot.lane.b32.xlu0 %v1851, 32
      %v1894 = vpop.permute.xlu0 %1893
      %1896 = vrot.lane.b32.xlu0 %v1851, 16
      %v1897 = vpop.permute.xlu0 %1896
      %v1899 = vcombine.low %v1849, %v1860
      %v1900 = vcombine.high %v1849, %v1860
      %v1902 = vunpack.c.l.s4 1983009808
      %v1903 = vunpack.c.0.s8 %v1902
      %v1904 = vlaneseq
      %v1905 = vshrl.u32 %v1904, 7
      %v1906 = vsub.s32 %v1903, %v1905
      %v1907 = vrot.slane %v1899, %v1906
      %v1909 = vunpack.c.l.s4 1983009808
      %v1910 = vunpack.c.0.s8 %v1909
      %v1911 = vlaneseq
      %v1912 = vshrl.u32 %v1911, 7
      %v1913 = vsub.s32 %v1910, %v1912
      %v1914 = vrot.slane %v1900, %v1913
      %v1915 = vcombine.low %v1857, %v1863
      %v1916 = vcombine.high %v1857, %v1863
      %v1918 = vunpack.c.l.s4 1983009808
      %v1919 = vunpack.c.0.s8 %v1918
      %v1920 = vlaneseq
      %v1921 = vshrl.u32 %v1920, 7
      %v1922 = vsub.s32 %v1919, %v1921
      %v1923 = vrot.slane %v1915, %v1922
      %v1925 = vunpack.c.l.s4 1983009808
      %v1926 = vunpack.c.0.s8 %v1925
      %v1927 = vlaneseq
      %v1928 = vshrl.u32 %v1927, 7
      %v1929 = vsub.s32 %v1926, %v1928
      %v1930 = vrot.slane %v1916, %v1929
      %v1931 = vcombine.low %v1866, %v1872
      %v1932 = vcombine.high %v1866, %v1872
      %v1934 = vunpack.c.l.s4 1983009808
      %v1935 = vunpack.c.0.s8 %v1934
      %v1936 = vlaneseq
      %v1937 = vshrl.u32 %v1936, 7
      %v1938 = vsub.s32 %v1935, %v1937
      %v1939 = vrot.slane %v1931, %v1938
      %v1941 = vunpack.c.l.s4 1983009808
      %v1942 = vunpack.c.0.s8 %v1941
      %v1943 = vlaneseq
      %v1944 = vshrl.u32 %v1943, 7
      %v1945 = vsub.s32 %v1942, %v1944
      %v1946 = vrot.slane %v1932, %v1945
      %v1947 = vcombine.low %v1869, %v1875
      %v1948 = vcombine.high %v1869, %v1875
      %v1950 = vunpack.c.l.s4 1983009808
      %v1951 = vunpack.c.0.s8 %v1950
      %v1952 = vlaneseq
      %v1953 = vshrl.u32 %v1952, 7
      %v1954 = vsub.s32 %v1951, %v1953
      %v1955 = vrot.slane %v1947, %v1954
      %v1957 = vunpack.c.l.s4 1983009808
      %v1958 = vunpack.c.0.s8 %v1957
      %v1959 = vlaneseq
      %v1960 = vshrl.u32 %v1959, 7
      %v1961 = vsub.s32 %v1958, %v1960
      %v1962 = vrot.slane %v1948, %v1961
      %v1963 = vcombine.low %v1907, %v1923
      %v1964 = vcombine.high %v1907, %v1923
      %v1966 = vunpack.c.l.s4 1934713408
      %v1967 = vunpack.c.0.s8 %v1966
      %v1968 = vlaneseq
      %v1969 = vshrl.u32 %v1968, 7
      %v1970 = vsub.s32 %v1967, %v1969
      %v1971 = vrot.slane %v1963, %v1970
      %v1973 = vunpack.c.l.s4 1934713408
      %v1974 = vunpack.c.0.s8 %v1973
      %v1975 = vlaneseq
      %v1976 = vshrl.u32 %v1975, 7
      %v1977 = vsub.s32 %v1974, %v1976
      %v1978 = vrot.slane %v1964, %v1977
      %v1979 = vcombine.low %v1914, %v1930
      %v1980 = vcombine.high %v1914, %v1930
      %v1982 = vunpack.c.l.s4 1934713408
      %v1983 = vunpack.c.0.s8 %v1982
      %v1984 = vlaneseq
      %v1985 = vshrl.u32 %v1984, 7
      %v1986 = vsub.s32 %v1983, %v1985
      %v1987 = vrot.slane %v1979, %v1986
      %v1989 = vunpack.c.l.s4 1934713408
      %v1990 = vunpack.c.0.s8 %v1989
      %v1991 = vlaneseq
      %v1992 = vshrl.u32 %v1991, 7
      %v1993 = vsub.s32 %v1990, %v1992
      %v1994 = vrot.slane %v1980, %v1993
      %v1995 = vcombine.low %v1939, %v1955
      %v1996 = vcombine.high %v1939, %v1955
      %v1998 = vunpack.c.l.s4 1934713408
      %v1999 = vunpack.c.0.s8 %v1998
      %v2000 = vlaneseq
      %v2001 = vshrl.u32 %v2000, 7
      %v2002 = vsub.s32 %v1999, %v2001
      %v2003 = vrot.slane %v1995, %v2002
      %v2005 = vunpack.c.l.s4 1934713408
      %v2006 = vunpack.c.0.s8 %v2005
      %v2007 = vlaneseq
      %v2008 = vshrl.u32 %v2007, 7
      %v2009 = vsub.s32 %v2006, %v2008
      %v2010 = vrot.slane %v1996, %v2009
      %v2011 = vcombine.low %v1946, %v1962
      %v2012 = vcombine.high %v1946, %v1962
      %v2014 = vunpack.c.l.s4 1934713408
      %v2015 = vunpack.c.0.s8 %v2014
      %v2016 = vlaneseq
      %v2017 = vshrl.u32 %v2016, 7
      %v2018 = vsub.s32 %v2015, %v2017
      %v2019 = vrot.slane %v2011, %v2018
      %v2021 = vunpack.c.l.s4 1934713408
      %v2022 = vunpack.c.0.s8 %v2021
      %v2023 = vlaneseq
      %v2024 = vshrl.u32 %v2023, 7
      %v2025 = vsub.s32 %v2022, %v2024
      %v2026 = vrot.slane %v2012, %v2025
      %v2027 = vcombine.low %v1971, %v2003
      %v2028 = vcombine.high %v1971, %v2003
      %v2029 = vcombine.low %v1978, %v2010
      %v2030 = vcombine.high %v1978, %v2010
      %v2031 = vcombine.low %v1987, %v2019
      %v2032 = vcombine.high %v1987, %v2019
      %v2033 = vcombine.low %v1994, %v2026
      %v2034 = vcombine.high %v1994, %v2026
      %v2035 = vcombine.low %v1851, %v1882
      %v2036 = vcombine.high %v1851, %v1882
      %v2038 = vunpack.c.l.s4 1983009808
      %v2039 = vunpack.c.0.s8 %v2038
      %v2040 = vlaneseq
      %v2041 = vshrl.u32 %v2040, 7
      %v2042 = vsub.s32 %v2039, %v2041
      %v2043 = vrot.slane %v2035, %v2042
      %v2045 = vunpack.c.l.s4 1983009808
      %v2046 = vunpack.c.0.s8 %v2045
      %v2047 = vlaneseq
      %v2048 = vshrl.u32 %v2047, 7
      %v2049 = vsub.s32 %v2046, %v2048
      %v2050 = vrot.slane %v2036, %v2049
      %v2051 = vcombine.low %v1879, %v1885
      %v2052 = vcombine.high %v1879, %v1885
      %v2054 = vunpack.c.l.s4 1983009808
      %v2055 = vunpack.c.0.s8 %v2054
      %v2056 = vlaneseq
      %v2057 = vshrl.u32 %v2056, 7
      %v2058 = vsub.s32 %v2055, %v2057
      %v2059 = vrot.slane %v2051, %v2058
      %v2061 = vunpack.c.l.s4 1983009808
      %v2062 = vunpack.c.0.s8 %v2061
      %v2063 = vlaneseq
      %v2064 = vshrl.u32 %v2063, 7
      %v2065 = vsub.s32 %v2062, %v2064
      %v2066 = vrot.slane %v2052, %v2065
      %v2067 = vcombine.low %v1888, %v1894
      %v2068 = vcombine.high %v1888, %v1894
      %v2070 = vunpack.c.l.s4 1983009808
      %v2071 = vunpack.c.0.s8 %v2070
      %v2072 = vlaneseq
      %v2073 = vshrl.u32 %v2072, 7
      %v2074 = vsub.s32 %v2071, %v2073
      %v2075 = vrot.slane %v2067, %v2074
      %v2077 = vunpack.c.l.s4 1983009808
      %v2078 = vunpack.c.0.s8 %v2077
      %v2079 = vlaneseq
      %v2080 = vshrl.u32 %v2079, 7
      %v2081 = vsub.s32 %v2078, %v2080
      %v2082 = vrot.slane %v2068, %v2081
      %v2083 = vcombine.low %v1891, %v1897
      %v2084 = vcombine.high %v1891, %v1897
      %v2086 = vunpack.c.l.s4 1983009808
      %v2087 = vunpack.c.0.s8 %v2086
      %v2088 = vlaneseq
      %v2089 = vshrl.u32 %v2088, 7
      %v2090 = vsub.s32 %v2087, %v2089
      %v2091 = vrot.slane %v2083, %v2090
      %v2093 = vunpack.c.l.s4 1983009808
      %v2094 = vunpack.c.0.s8 %v2093
      %v2095 = vlaneseq
      %v2096 = vshrl.u32 %v2095, 7
      %v2097 = vsub.s32 %v2094, %v2096
      %v2098 = vrot.slane %v2084, %v2097
      %v2099 = vcombine.low %v2043, %v2059
      %v2100 = vcombine.high %v2043, %v2059
      %v2102 = vunpack.c.l.s4 1934713408
      %v2103 = vunpack.c.0.s8 %v2102
      %v2104 = vlaneseq
      %v2105 = vshrl.u32 %v2104, 7
      %v2106 = vsub.s32 %v2103, %v2105
      %v2107 = vrot.slane %v2099, %v2106
      %v2109 = vunpack.c.l.s4 1934713408
      %v2110 = vunpack.c.0.s8 %v2109
      %v2111 = vlaneseq
      %v2112 = vshrl.u32 %v2111, 7
      %v2113 = vsub.s32 %v2110, %v2112
      %v2114 = vrot.slane %v2100, %v2113
      %v2115 = vcombine.low %v2050, %v2066
      %v2116 = vcombine.high %v2050, %v2066
      %v2118 = vunpack.c.l.s4 1934713408
      %v2119 = vunpack.c.0.s8 %v2118
      %v2120 = vlaneseq
      %v2121 = vshrl.u32 %v2120, 7
      %v2122 = vsub.s32 %v2119, %v2121
      %v2123 = vrot.slane %v2115, %v2122
      %v2125 = vunpack.c.l.s4 1934713408
      %v2126 = vunpack.c.0.s8 %v2125
      %v2127 = vlaneseq
      %v2128 = vshrl.u32 %v2127, 7
      %v2129 = vsub.s32 %v2126, %v2128
      %v2130 = vrot.slane %v2116, %v2129
      %v2131 = vcombine.low %v2075, %v2091
      %v2132 = vcombine.high %v2075, %v2091
      %v2134 = vunpack.c.l.s4 1934713408
      %v2135 = vunpack.c.0.s8 %v2134
      %v2136 = vlaneseq
      %v2137 = vshrl.u32 %v2136, 7
      %v2138 = vsub.s32 %v2135, %v2137
      %v2139 = vrot.slane %v2131, %v2138
      %v2141 = vunpack.c.l.s4 1934713408
      %v2142 = vunpack.c.0.s8 %v2141
      %v2143 = vlaneseq
      %v2144 = vshrl.u32 %v2143, 7
      %v2145 = vsub.s32 %v2142, %v2144
      %v2146 = vrot.slane %v2132, %v2145
      %v2147 = vcombine.low %v2082, %v2098
      %v2148 = vcombine.high %v2082, %v2098
      %v2150 = vunpack.c.l.s4 1934713408
      %v2151 = vunpack.c.0.s8 %v2150
      %v2152 = vlaneseq
      %v2153 = vshrl.u32 %v2152, 7
      %v2154 = vsub.s32 %v2151, %v2153
      %v2155 = vrot.slane %v2147, %v2154
      %v2157 = vunpack.c.l.s4 1934713408
      %v2158 = vunpack.c.0.s8 %v2157
      %v2159 = vlaneseq
      %v2160 = vshrl.u32 %v2159, 7
      %v2161 = vsub.s32 %v2158, %v2160
      %v2162 = vrot.slane %v2148, %v2161
      %v2163 = vcombine.low %v2107, %v2139
      %v2164 = vcombine.high %v2107, %v2139
      %v2165 = vcombine.low %v2114, %v2146
      %v2166 = vcombine.high %v2114, %v2146
      %v2167 = vcombine.low %v2123, %v2155
      %v2168 = vcombine.high %v2123, %v2155
      %v2169 = vcombine.low %v2130, %v2162
      %v2170 = vcombine.high %v2130, %v2162
      %v2171 = vld [vmem:[%s9] sm:$0xf]
      %v2172 = vld [vmem:[%s9 + $0x4] sm:$0xf]
      %v2173 = vld [vmem:[%s10] sm:$0xf]
      %v2174 = vld [vmem:[%s10 + $0x4] sm:$0xf]
      %v2175 = vld [vmem:[%s11] sm:$0xf]
      %v2176 = vld [vmem:[%s11 + $0x4] sm:$0xf]
      %v2177 = vpack.c.bf16 %v2163, %v2027
      %v2178 = vpack.c.bf16 %v2164, %v2028
      %v2179 = vpack.c.bf16 %v2165, %v2029
      %v2180 = vpack.c.bf16 %v2166, %v2030
      %v2183 = vunpack.c.l.b16 %v2171
      %v2184 = vunpack.c.l.b16 %v2172
      %v2185 = vpack.c.b16 %v2184, %v2183
      %v2187 = vsel %vm834, %v2185, 0
      %2189 = vmatprep.subr.bf16.mxu0 0
      %2190 = vmatpush1.bf16.msra.mxu0 0
      %2191 = vmatprep.subr.bf16.mxu0 0
      %2192 = vmatpush1.bf16.msra.mxu0 0
      %2193 = vmatprep.subr.bf16.mxu0 0
      %2194 = vmatpush1.bf16.msra.mxu0 0
      %2195 = vmatprep.subr.bf16.mxu0 0
      %2196 = vmatpush1.bf16.msra.mxu0 0
      %2197 = vmatprep.subr.bf16.mxu0 0
      %2198 = vmatpush1.bf16.msra.mxu0 0
      %2199 = vmatprep.subr.bf16.mxu0 0
      %2200 = vmatpush1.bf16.msra.mxu0 0
      %2201 = vmatprep.subr.bf16.mxu0 0
      %2202 = vmatpush1.bf16.msra.mxu0 0
      %2203 = vmatprep.subr.bf16.mxu0 0
      %2204 = vmatpush1.bf16.msra.mxu0 %v2177
      %2205 = vmatprep.subr.bf16.mxu0 0
      %2206 = vmatpush2.bf16.msra.mxu0 0
      %2207 = vmatprep.subr.bf16.mxu0 0
      %2208 = vmatpush2.bf16.msra.mxu0 0
      %2209 = vmatprep.subr.bf16.mxu0 0
      %2210 = vmatpush2.bf16.msra.mxu0 0
      %2211 = vmatprep.subr.bf16.mxu0 0
      %2212 = vmatpush2.bf16.msra.mxu0 0
      %2213 = vmatprep.subr.bf16.mxu0 0
      %2214 = vmatpush2.bf16.msra.mxu0 0
      %2215 = vmatprep.subr.bf16.mxu0 0
      %2216 = vmatpush2.bf16.msra.mxu0 0
      %2217 = vmatprep.subr.bf16.mxu0 0
      %2218 = vmatpush2.bf16.msra.mxu0 0
      %2219 = vmatprep.subr.bf16.mxu0 0
      %2220 = vmatpush2.bf16.msra.mxu0 0
      %2221 = vmatprep.mubr.bf16.mxu0 0
      %2222 = vmatmul.mubr.bf16.gmra.mxu0 %v2187
      %v2223 = vpop.f32.mrf.mxu0
      %v2224 = vadd.f32 0.0, %v2223
      %v2225 = vpop.f32.mrf.mxu0
      %v2226 = vpop.f32.mrf.mxu0
      %v2227 = vadd.f32 0.0, %v2226
      %v2228 = vpop.f32.mrf.mxu0
      %2229 = vdwg.mxu0
      %2230 = vmatprep.subr.bf16.mxu0 0
      %2231 = vmatpush1.bf16.msra.mxu0 0
      %2232 = vmatprep.subr.bf16.mxu0 0
      %2233 = vmatpush1.bf16.msra.mxu0 0
      %2234 = vmatprep.subr.bf16.mxu0 0
      %2235 = vmatpush1.bf16.msra.mxu0 0
      %2236 = vmatprep.subr.bf16.mxu0 0
      %2237 = vmatpush1.bf16.msra.mxu0 0
      %2238 = vmatprep.subr.bf16.mxu0 0
      %2239 = vmatpush1.bf16.msra.mxu0 0
      %2240 = vmatprep.subr.bf16.mxu0 0
      %2241 = vmatpush1.bf16.msra.mxu0 0
      %2242 = vmatprep.subr.bf16.mxu0 0
      %2243 = vmatpush1.bf16.msra.mxu0 0
      %2244 = vmatprep.subr.bf16.mxu0 0
      %2245 = vmatpush1.bf16.msra.mxu0 %v2178
      %2246 = vmatprep.subr.bf16.mxu0 0
      %2247 = vmatpush2.bf16.msra.mxu0 0
      %2248 = vmatprep.subr.bf16.mxu0 0
      %2249 = vmatpush2.bf16.msra.mxu0 0
      %2250 = vmatprep.subr.bf16.mxu0 0
      %2251 = vmatpush2.bf16.msra.mxu0 0
      %2252 = vmatprep.subr.bf16.mxu0 0
      %2253 = vmatpush2.bf16.msra.mxu0 0
      %2254 = vmatprep.subr.bf16.mxu0 0
      %2255 = vmatpush2.bf16.msra.mxu0 0
      %2256 = vmatprep.subr.bf16.mxu0 0
      %2257 = vmatpush2.bf16.msra.mxu0 0
      %2258 = vmatprep.subr.bf16.mxu0 0
      %2259 = vmatpush2.bf16.msra.mxu0 0
      %2260 = vmatprep.subr.bf16.mxu0 0
      %2261 = vmatpush2.bf16.msra.mxu0 0
      %2262 = vmatprep.mubr.bf16.mxu0 0
      %2263 = vmatmul.mubr.bf16.gmra.mxu0 %v2187
      %v2264 = vpop.f32.mrf.mxu0
      %v2265 = vadd.f32 0.0, %v2264
      %v2266 = vpop.f32.mrf.mxu0
      %v2267 = vpop.f32.mrf.mxu0
      %v2268 = vadd.f32 0.0, %v2267
      %v2269 = vpop.f32.mrf.mxu0
      %2270 = vdwg.mxu0
      %2271 = vmatprep.subr.bf16.mxu0 0
      %2272 = vmatpush1.bf16.msra.mxu0 0
      %2273 = vmatprep.subr.bf16.mxu0 0
      %2274 = vmatpush1.bf16.msra.mxu0 0
      %2275 = vmatprep.subr.bf16.mxu0 0
      %2276 = vmatpush1.bf16.msra.mxu0 0
      %2277 = vmatprep.subr.bf16.mxu0 0
      %2278 = vmatpush1.bf16.msra.mxu0 0
      %2279 = vmatprep.subr.bf16.mxu0 0
      %2280 = vmatpush1.bf16.msra.mxu0 0
      %2281 = vmatprep.subr.bf16.mxu0 0
      %2282 = vmatpush1.bf16.msra.mxu0 0
      %2283 = vmatprep.subr.bf16.mxu0 0
      %2284 = vmatpush1.bf16.msra.mxu0 0
      %2285 = vmatprep.subr.bf16.mxu0 0
      %2286 = vmatpush1.bf16.msra.mxu0 %v2179
      %2287 = vmatprep.subr.bf16.mxu0 0
      %2288 = vmatpush2.bf16.msra.mxu0 0
      %2289 = vmatprep.subr.bf16.mxu0 0
      %2290 = vmatpush2.bf16.msra.mxu0 0
      %2291 = vmatprep.subr.bf16.mxu0 0
      %2292 = vmatpush2.bf16.msra.mxu0 0
      %2293 = vmatprep.subr.bf16.mxu0 0
      %2294 = vmatpush2.bf16.msra.mxu0 0
      %2295 = vmatprep.subr.bf16.mxu0 0
      %2296 = vmatpush2.bf16.msra.mxu0 0
      %2297 = vmatprep.subr.bf16.mxu0 0
      %2298 = vmatpush2.bf16.msra.mxu0 0
      %2299 = vmatprep.subr.bf16.mxu0 0
      %2300 = vmatpush2.bf16.msra.mxu0 0
      %2301 = vmatprep.subr.bf16.mxu0 0
      %2302 = vmatpush2.bf16.msra.mxu0 0
      %2303 = vmatprep.mubr.bf16.mxu0 0
      %2304 = vmatmul.mubr.bf16.gmra.mxu0 %v2187
      %v2305 = vpop.f32.mrf.mxu0
      %v2306 = vadd.f32 0.0, %v2305
      %v2307 = vpop.f32.mrf.mxu0
      %v2308 = vpop.f32.mrf.mxu0
      %v2309 = vadd.f32 0.0, %v2308
      %v2310 = vpop.f32.mrf.mxu0
      %2311 = vdwg.mxu0
      %2312 = vmatprep.subr.bf16.mxu0 0
      %2313 = vmatpush1.bf16.msra.mxu0 0
      %2314 = vmatprep.subr.bf16.mxu0 0
      %2315 = vmatpush1.bf16.msra.mxu0 0
      %2316 = vmatprep.subr.bf16.mxu0 0
      %2317 = vmatpush1.bf16.msra.mxu0 0
      %2318 = vmatprep.subr.bf16.mxu0 0
      %2319 = vmatpush1.bf16.msra.mxu0 0
      %2320 = vmatprep.subr.bf16.mxu0 0
      %2321 = vmatpush1.bf16.msra.mxu0 0
      %2322 = vmatprep.subr.bf16.mxu0 0
      %2323 = vmatpush1.bf16.msra.mxu0 0
      %2324 = vmatprep.subr.bf16.mxu0 0
      %2325 = vmatpush1.bf16.msra.mxu0 0
      %2326 = vmatprep.subr.bf16.mxu0 0
      %2327 = vmatpush1.bf16.msra.mxu0 %v2180
      %2328 = vmatprep.subr.bf16.mxu0 0
      %2329 = vmatpush2.bf16.msra.mxu0 0
      %2330 = vmatprep.subr.bf16.mxu0 0
      %2331 = vmatpush2.bf16.msra.mxu0 0
      %2332 = vmatprep.subr.bf16.mxu0 0
      %2333 = vmatpush2.bf16.msra.mxu0 0
      %2334 = vmatprep.subr.bf16.mxu0 0
      %2335 = vmatpush2.bf16.msra.mxu0 0
      %2336 = vmatprep.subr.bf16.mxu0 0
      %2337 = vmatpush2.bf16.msra.mxu0 0
      %2338 = vmatprep.subr.bf16.mxu0 0
      %2339 = vmatpush2.bf16.msra.mxu0 0
      %2340 = vmatprep.subr.bf16.mxu0 0
      %2341 = vmatpush2.bf16.msra.mxu0 0
      %2342 = vmatprep.subr.bf16.mxu0 0
      %2343 = vmatpush2.bf16.msra.mxu0 0
      %2344 = vmatprep.mubr.bf16.mxu0 0
      %2345 = vmatmul.mubr.bf16.gmra.mxu0 %v2187
      %v2346 = vpop.f32.mrf.mxu0
      %v2347 = vadd.f32 0.0, %v2346
      %v2348 = vpop.f32.mrf.mxu0
      %v2349 = vpop.f32.mrf.mxu0
      %v2350 = vadd.f32 0.0, %v2349
      %v2351 = vpop.f32.mrf.mxu0
      %2352 = vdwg.mxu0
      %v2353 = vpack.c.bf16 %v2167, %v2031
      %v2354 = vpack.c.bf16 %v2168, %v2032
      %v2355 = vpack.c.bf16 %v2169, %v2033
      %v2356 = vpack.c.bf16 %v2170, %v2034
      %v2359 = vunpack.c.l.b16 %v2173
      %v2360 = vunpack.c.l.b16 %v2174
      %v2361 = vpack.c.b16 %v2360, %v2359
      %v2363 = vsel %vm834, %v2361, 0
      %2365 = vmatprep.subr.bf16.mxu0 0
      %2366 = vmatpush1.bf16.msra.mxu0 0
      %2367 = vmatprep.subr.bf16.mxu0 0
      %2368 = vmatpush1.bf16.msra.mxu0 0
      %2369 = vmatprep.subr.bf16.mxu0 0
      %2370 = vmatpush1.bf16.msra.mxu0 0
      %2371 = vmatprep.subr.bf16.mxu0 0
      %2372 = vmatpush1.bf16.msra.mxu0 0
      %2373 = vmatprep.subr.bf16.mxu0 0
      %2374 = vmatpush1.bf16.msra.mxu0 0
      %2375 = vmatprep.subr.bf16.mxu0 0
      %2376 = vmatpush1.bf16.msra.mxu0 0
      %2377 = vmatprep.subr.bf16.mxu0 0
      %2378 = vmatpush1.bf16.msra.mxu0 0
      %2379 = vmatprep.subr.bf16.mxu0 0
      %2380 = vmatpush1.bf16.msra.mxu0 %v2353
      %2381 = vmatprep.subr.bf16.mxu0 0
      %2382 = vmatpush2.bf16.msra.mxu0 0
      %2383 = vmatprep.subr.bf16.mxu0 0
      %2384 = vmatpush2.bf16.msra.mxu0 0
      %2385 = vmatprep.subr.bf16.mxu0 0
      %2386 = vmatpush2.bf16.msra.mxu0 0
      %2387 = vmatprep.subr.bf16.mxu0 0
      %2388 = vmatpush2.bf16.msra.mxu0 0
      %2389 = vmatprep.subr.bf16.mxu0 0
      %2390 = vmatpush2.bf16.msra.mxu0 0
      %2391 = vmatprep.subr.bf16.mxu0 0
      %2392 = vmatpush2.bf16.msra.mxu0 0
      %2393 = vmatprep.subr.bf16.mxu0 0
      %2394 = vmatpush2.bf16.msra.mxu0 0
      %2395 = vmatprep.subr.bf16.mxu0 0
      %2396 = vmatpush2.bf16.msra.mxu0 0
      %2397 = vmatprep.mubr.bf16.mxu0 0
      %2398 = vmatmul.mubr.bf16.gmra.mxu0 %v2363
      %v2399 = vpop.f32.mrf.mxu0
      %v2400 = vadd.f32 0.0, %v2399
      %v2401 = vpop.f32.mrf.mxu0
      %v2402 = vpop.f32.mrf.mxu0
      %v2403 = vadd.f32 0.0, %v2402
      %v2404 = vpop.f32.mrf.mxu0
      %2405 = vdwg.mxu0
      %2406 = vmatprep.subr.bf16.mxu0 0
      %2407 = vmatpush1.bf16.msra.mxu0 0
      %2408 = vmatprep.subr.bf16.mxu0 0
      %2409 = vmatpush1.bf16.msra.mxu0 0
      %2410 = vmatprep.subr.bf16.mxu0 0
      %2411 = vmatpush1.bf16.msra.mxu0 0
      %2412 = vmatprep.subr.bf16.mxu0 0
      %2413 = vmatpush1.bf16.msra.mxu0 0
      %2414 = vmatprep.subr.bf16.mxu0 0
      %2415 = vmatpush1.bf16.msra.mxu0 0
      %2416 = vmatprep.subr.bf16.mxu0 0
      %2417 = vmatpush1.bf16.msra.mxu0 0
      %2418 = vmatprep.subr.bf16.mxu0 0
      %2419 = vmatpush1.bf16.msra.mxu0 0
      %2420 = vmatprep.subr.bf16.mxu0 0
      %2421 = vmatpush1.bf16.msra.mxu0 %v2354
      %2422 = vmatprep.subr.bf16.mxu0 0
      %2423 = vmatpush2.bf16.msra.mxu0 0
      %2424 = vmatprep.subr.bf16.mxu0 0
      %2425 = vmatpush2.bf16.msra.mxu0 0
      %2426 = vmatprep.subr.bf16.mxu0 0
      %2427 = vmatpush2.bf16.msra.mxu0 0
      %2428 = vmatprep.subr.bf16.mxu0 0
      %2429 = vmatpush2.bf16.msra.mxu0 0
      %2430 = vmatprep.subr.bf16.mxu0 0
      %2431 = vmatpush2.bf16.msra.mxu0 0
      %2432 = vmatprep.subr.bf16.mxu0 0
      %2433 = vmatpush2.bf16.msra.mxu0 0
      %2434 = vmatprep.subr.bf16.mxu0 0
      %2435 = vmatpush2.bf16.msra.mxu0 0
      %2436 = vmatprep.subr.bf16.mxu0 0
      %2437 = vmatpush2.bf16.msra.mxu0 0
      %2438 = vmatprep.mubr.bf16.mxu0 0
      %2439 = vmatmul.mubr.bf16.gmra.mxu0 %v2363
      %v2440 = vpop.f32.mrf.mxu0
      %v2441 = vadd.f32 0.0, %v2440
      %v2442 = vpop.f32.mrf.mxu0
      %v2443 = vpop.f32.mrf.mxu0
      %v2444 = vadd.f32 0.0, %v2443
      %v2445 = vpop.f32.mrf.mxu0
      %2446 = vdwg.mxu0
      %2447 = vmatprep.subr.bf16.mxu0 0
      %2448 = vmatpush1.bf16.msra.mxu0 0
      %2449 = vmatprep.subr.bf16.mxu0 0
      %2450 = vmatpush1.bf16.msra.mxu0 0
      %2451 = vmatprep.subr.bf16.mxu0 0
      %2452 = vmatpush1.bf16.msra.mxu0 0
      %2453 = vmatprep.subr.bf16.mxu0 0
      %2454 = vmatpush1.bf16.msra.mxu0 0
      %2455 = vmatprep.subr.bf16.mxu0 0
      %2456 = vmatpush1.bf16.msra.mxu0 0
      %2457 = vmatprep.subr.bf16.mxu0 0
      %2458 = vmatpush1.bf16.msra.mxu0 0
      %2459 = vmatprep.subr.bf16.mxu0 0
      %2460 = vmatpush1.bf16.msra.mxu0 0
      %2461 = vmatprep.subr.bf16.mxu0 0
      %2462 = vmatpush1.bf16.msra.mxu0 %v2355
      %2463 = vmatprep.subr.bf16.mxu0 0
      %2464 = vmatpush2.bf16.msra.mxu0 0
      %2465 = vmatprep.subr.bf16.mxu0 0
      %2466 = vmatpush2.bf16.msra.mxu0 0
      %2467 = vmatprep.subr.bf16.mxu0 0
      %2468 = vmatpush2.bf16.msra.mxu0 0
      %2469 = vmatprep.subr.bf16.mxu0 0
      %2470 = vmatpush2.bf16.msra.mxu0 0
      %2471 = vmatprep.subr.bf16.mxu0 0
      %2472 = vmatpush2.bf16.msra.mxu0 0
      %2473 = vmatprep.subr.bf16.mxu0 0
      %2474 = vmatpush2.bf16.msra.mxu0 0
      %2475 = vmatprep.subr.bf16.mxu0 0
      %2476 = vmatpush2.bf16.msra.mxu0 0
      %2477 = vmatprep.subr.bf16.mxu0 0
      %2478 = vmatpush2.bf16.msra.mxu0 0
      %2479 = vmatprep.mubr.bf16.mxu0 0
      %2480 = vmatmul.mubr.bf16.gmra.mxu0 %v2363
      %v2481 = vpop.f32.mrf.mxu0
      %v2482 = vadd.f32 0.0, %v2481
      %v2483 = vpop.f32.mrf.mxu0
      %v2484 = vpop.f32.mrf.mxu0
      %v2485 = vadd.f32 0.0, %v2484
      %v2486 = vpop.f32.mrf.mxu0
      %2487 = vdwg.mxu0
      %2488 = vmatprep.subr.bf16.mxu0 0
      %2489 = vmatpush1.bf16.msra.mxu0 0
      %2490 = vmatprep.subr.bf16.mxu0 0
      %2491 = vmatpush1.bf16.msra.mxu0 0
      %2492 = vmatprep.subr.bf16.mxu0 0
      %2493 = vmatpush1.bf16.msra.mxu0 0
      %2494 = vmatprep.subr.bf16.mxu0 0
      %2495 = vmatpush1.bf16.msra.mxu0 0
      %2496 = vmatprep.subr.bf16.mxu0 0
      %2497 = vmatpush1.bf16.msra.mxu0 0
      %2498 = vmatprep.subr.bf16.mxu0 0
      %2499 = vmatpush1.bf16.msra.mxu0 0
      %2500 = vmatprep.subr.bf16.mxu0 0
      %2501 = vmatpush1.bf16.msra.mxu0 0
      %2502 = vmatprep.subr.bf16.mxu0 0
      %2503 = vmatpush1.bf16.msra.mxu0 %v2356
      %2504 = vmatprep.subr.bf16.mxu0 0
      %2505 = vmatpush2.bf16.msra.mxu0 0
      %2506 = vmatprep.subr.bf16.mxu0 0
      %2507 = vmatpush2.bf16.msra.mxu0 0
      %2508 = vmatprep.subr.bf16.mxu0 0
      %2509 = vmatpush2.bf16.msra.mxu0 0
      %2510 = vmatprep.subr.bf16.mxu0 0
      %2511 = vmatpush2.bf16.msra.mxu0 0
      %2512 = vmatprep.subr.bf16.mxu0 0
      %2513 = vmatpush2.bf16.msra.mxu0 0
      %2514 = vmatprep.subr.bf16.mxu0 0
      %2515 = vmatpush2.bf16.msra.mxu0 0
      %2516 = vmatprep.subr.bf16.mxu0 0
      %2517 = vmatpush2.bf16.msra.mxu0 0
      %2518 = vmatprep.subr.bf16.mxu0 0
      %2519 = vmatpush2.bf16.msra.mxu0 0
      %2520 = vmatprep.mubr.bf16.mxu0 0
      %2521 = vmatmul.mubr.bf16.gmra.mxu0 %v2363
      %v2522 = vpop.f32.mrf.mxu0
      %v2523 = vadd.f32 0.0, %v2522
      %v2524 = vpop.f32.mrf.mxu0
      %v2525 = vpop.f32.mrf.mxu0
      %v2526 = vadd.f32 0.0, %v2525
      %v2527 = vpop.f32.mrf.mxu0
      %2528 = vdwg.mxu0
      %v2529 = vadd.f32 %v2027, %v2031
      %v2530 = vadd.f32 %v2163, %v2167
      %v2531 = vadd.f32 %v2028, %v2032
      %v2532 = vadd.f32 %v2164, %v2168
      %v2533 = vadd.f32 %v2029, %v2033
      %v2534 = vadd.f32 %v2165, %v2169
      %v2535 = vadd.f32 %v2030, %v2034
      %v2536 = vadd.f32 %v2166, %v2170
      %v2537 = vpack.c.bf16 %v2530, %v2529
      %v2538 = vpack.c.bf16 %v2532, %v2531
      %v2539 = vpack.c.bf16 %v2534, %v2533
      %v2540 = vpack.c.bf16 %v2536, %v2535
      %v2543 = vunpack.c.l.b16 %v2175
      %v2544 = vunpack.c.l.b16 %v2176
      %v2545 = vpack.c.b16 %v2544, %v2543
      %v2547 = vsel %vm834, %v2545, 0
      %2549 = vmatprep.subr.bf16.mxu0 0
      %2550 = vmatpush1.bf16.msra.mxu0 0
      %2551 = vmatprep.subr.bf16.mxu0 0
      %2552 = vmatpush1.bf16.msra.mxu0 0
      %2553 = vmatprep.subr.bf16.mxu0 0
      %2554 = vmatpush1.bf16.msra.mxu0 0
      %2555 = vmatprep.subr.bf16.mxu0 0
      %2556 = vmatpush1.bf16.msra.mxu0 0
      %2557 = vmatprep.subr.bf16.mxu0 0
      %2558 = vmatpush1.bf16.msra.mxu0 0
      %2559 = vmatprep.subr.bf16.mxu0 0
      %2560 = vmatpush1.bf16.msra.mxu0 0
      %2561 = vmatprep.subr.bf16.mxu0 0
      %2562 = vmatpush1.bf16.msra.mxu0 0
      %2563 = vmatprep.subr.bf16.mxu0 0
      %2564 = vmatpush1.bf16.msra.mxu0 %v2537
      %2565 = vmatprep.subr.bf16.mxu0 0
      %2566 = vmatpush2.bf16.msra.mxu0 0
      %2567 = vmatprep.subr.bf16.mxu0 0
      %2568 = vmatpush2.bf16.msra.mxu0 0
      %2569 = vmatprep.subr.bf16.mxu0 0
      %2570 = vmatpush2.bf16.msra.mxu0 0
      %2571 = vmatprep.subr.bf16.mxu0 0
      %2572 = vmatpush2.bf16.msra.mxu0 0
      %2573 = vmatprep.subr.bf16.mxu0 0
      %2574 = vmatpush2.bf16.msra.mxu0 0
      %2575 = vmatprep.subr.bf16.mxu0 0
      %2576 = vmatpush2.bf16.msra.mxu0 0
      %2577 = vmatprep.subr.bf16.mxu0 0
      %2578 = vmatpush2.bf16.msra.mxu0 0
      %2579 = vmatprep.subr.bf16.mxu0 0
      %2580 = vmatpush2.bf16.msra.mxu0 0
      %2581 = vmatprep.mubr.bf16.mxu0 0
      %2582 = vmatmul.mubr.bf16.gmra.mxu0 %v2547
      %v2583 = vpop.f32.mrf.mxu0
      %v2584 = vadd.f32 0.0, %v2583
      %v2585 = vpop.f32.mrf.mxu0
      %v2586 = vpop.f32.mrf.mxu0
      %v2587 = vadd.f32 0.0, %v2586
      %v2588 = vpop.f32.mrf.mxu0
      %2589 = vdwg.mxu0
      %2590 = vmatprep.subr.bf16.mxu0 0
      %2591 = vmatpush1.bf16.msra.mxu0 0
      %2592 = vmatprep.subr.bf16.mxu0 0
      %2593 = vmatpush1.bf16.msra.mxu0 0
      %2594 = vmatprep.subr.bf16.mxu0 0
      %2595 = vmatpush1.bf16.msra.mxu0 0
      %2596 = vmatprep.subr.bf16.mxu0 0
      %2597 = vmatpush1.bf16.msra.mxu0 0
      %2598 = vmatprep.subr.bf16.mxu0 0
      %2599 = vmatpush1.bf16.msra.mxu0 0
      %2600 = vmatprep.subr.bf16.mxu0 0
      %2601 = vmatpush1.bf16.msra.mxu0 0
      %2602 = vmatprep.subr.bf16.mxu0 0
      %2603 = vmatpush1.bf16.msra.mxu0 0
      %2604 = vmatprep.subr.bf16.mxu0 0
      %2605 = vmatpush1.bf16.msra.mxu0 %v2538
      %2606 = vmatprep.subr.bf16.mxu0 0
      %2607 = vmatpush2.bf16.msra.mxu0 0
      %2608 = vmatprep.subr.bf16.mxu0 0
      %2609 = vmatpush2.bf16.msra.mxu0 0
      %2610 = vmatprep.subr.bf16.mxu0 0
      %2611 = vmatpush2.bf16.msra.mxu0 0
      %2612 = vmatprep.subr.bf16.mxu0 0
      %2613 = vmatpush2.bf16.msra.mxu0 0
      %2614 = vmatprep.subr.bf16.mxu0 0
      %2615 = vmatpush2.bf16.msra.mxu0 0
      %2616 = vmatprep.subr.bf16.mxu0 0
      %2617 = vmatpush2.bf16.msra.mxu0 0
      %2618 = vmatprep.subr.bf16.mxu0 0
      %2619 = vmatpush2.bf16.msra.mxu0 0
      %2620 = vmatprep.subr.bf16.mxu0 0
      %2621 = vmatpush2.bf16.msra.mxu0 0
      %2622 = vmatprep.mubr.bf16.mxu0 0
      %2623 = vmatmul.mubr.bf16.gmra.mxu0 %v2547
      %v2624 = vpop.f32.mrf.mxu0
      %v2625 = vadd.f32 0.0, %v2624
      %v2626 = vpop.f32.mrf.mxu0
      %v2627 = vpop.f32.mrf.mxu0
      %v2628 = vadd.f32 0.0, %v2627
      %v2629 = vpop.f32.mrf.mxu0
      %2630 = vdwg.mxu0
      %2631 = vmatprep.subr.bf16.mxu0 0
      %2632 = vmatpush1.bf16.msra.mxu0 0
      %2633 = vmatprep.subr.bf16.mxu0 0
      %2634 = vmatpush1.bf16.msra.mxu0 0
      %2635 = vmatprep.subr.bf16.mxu0 0
      %2636 = vmatpush1.bf16.msra.mxu0 0
      %2637 = vmatprep.subr.bf16.mxu0 0
      %2638 = vmatpush1.bf16.msra.mxu0 0
      %2639 = vmatprep.subr.bf16.mxu0 0
      %2640 = vmatpush1.bf16.msra.mxu0 0
      %2641 = vmatprep.subr.bf16.mxu0 0
      %2642 = vmatpush1.bf16.msra.mxu0 0
      %2643 = vmatprep.subr.bf16.mxu0 0
      %2644 = vmatpush1.bf16.msra.mxu0 0
      %2645 = vmatprep.subr.bf16.mxu0 0
      %2646 = vmatpush1.bf16.msra.mxu0 %v2539
      %2647 = vmatprep.subr.bf16.mxu0 0
      %2648 = vmatpush2.bf16.msra.mxu0 0
      %2649 = vmatprep.subr.bf16.mxu0 0
      %2650 = vmatpush2.bf16.msra.mxu0 0
      %2651 = vmatprep.subr.bf16.mxu0 0
      %2652 = vmatpush2.bf16.msra.mxu0 0
      %2653 = vmatprep.subr.bf16.mxu0 0
      %2654 = vmatpush2.bf16.msra.mxu0 0
      %2655 = vmatprep.subr.bf16.mxu0 0
      %2656 = vmatpush2.bf16.msra.mxu0 0
      %2657 = vmatprep.subr.bf16.mxu0 0
      %2658 = vmatpush2.bf16.msra.mxu0 0
      %2659 = vmatprep.subr.bf16.mxu0 0
      %2660 = vmatpush2.bf16.msra.mxu0 0
      %2661 = vmatprep.subr.bf16.mxu0 0
      %2662 = vmatpush2.bf16.msra.mxu0 0
      %2663 = vmatprep.mubr.bf16.mxu0 0
      %2664 = vmatmul.mubr.bf16.gmra.mxu0 %v2547
      %v2665 = vpop.f32.mrf.mxu0
      %v2666 = vadd.f32 0.0, %v2665
      %v2667 = vpop.f32.mrf.mxu0
      %v2668 = vpop.f32.mrf.mxu0
      %v2669 = vadd.f32 0.0, %v2668
      %v2670 = vpop.f32.mrf.mxu0
      %2671 = vdwg.mxu0
      %2672 = vmatprep.subr.bf16.mxu0 0
      %2673 = vmatpush1.bf16.msra.mxu0 0
      %2674 = vmatprep.subr.bf16.mxu0 0
      %2675 = vmatpush1.bf16.msra.mxu0 0
      %2676 = vmatprep.subr.bf16.mxu0 0
      %2677 = vmatpush1.bf16.msra.mxu0 0
      %2678 = vmatprep.subr.bf16.mxu0 0
      %2679 = vmatpush1.bf16.msra.mxu0 0
      %2680 = vmatprep.subr.bf16.mxu0 0
      %2681 = vmatpush1.bf16.msra.mxu0 0
      %2682 = vmatprep.subr.bf16.mxu0 0
      %2683 = vmatpush1.bf16.msra.mxu0 0
      %2684 = vmatprep.subr.bf16.mxu0 0
      %2685 = vmatpush1.bf16.msra.mxu0 0
      %2686 = vmatprep.subr.bf16.mxu0 0
      %2687 = vmatpush1.bf16.msra.mxu0 %v2540
      %2688 = vmatprep.subr.bf16.mxu0 0
      %2689 = vmatpush2.bf16.msra.mxu0 0
      %2690 = vmatprep.subr.bf16.mxu0 0
      %2691 = vmatpush2.bf16.msra.mxu0 0
      %2692 = vmatprep.subr.bf16.mxu0 0
      %2693 = vmatpush2.bf16.msra.mxu0 0
      %2694 = vmatprep.subr.bf16.mxu0 0
      %2695 = vmatpush2.bf16.msra.mxu0 0
      %2696 = vmatprep.subr.bf16.mxu0 0
      %2697 = vmatpush2.bf16.msra.mxu0 0
      %2698 = vmatprep.subr.bf16.mxu0 0
      %2699 = vmatpush2.bf16.msra.mxu0 0
      %2700 = vmatprep.subr.bf16.mxu0 0
      %2701 = vmatpush2.bf16.msra.mxu0 0
      %2702 = vmatprep.subr.bf16.mxu0 0
      %2703 = vmatpush2.bf16.msra.mxu0 0
      %2704 = vmatprep.mubr.bf16.mxu0 0
      %2705 = vmatmul.mubr.bf16.gmra.mxu0 %v2547
      %v2706 = vpop.f32.mrf.mxu0
      %v2707 = vadd.f32 0.0, %v2706
      %v2708 = vpop.f32.mrf.mxu0
      %v2709 = vpop.f32.mrf.mxu0
      %v2710 = vadd.f32 0.0, %v2709
      %v2711 = vpop.f32.mrf.mxu0
      %2712 = vdwg.mxu0
      %v2713 = vsub.f32 %v2224, %v2400
      %v2714 = vsub.f32 %v2227, %v2403
      %v2715 = vsub.f32 %v2265, %v2441
      %v2716 = vsub.f32 %v2268, %v2444
      %v2717 = vsub.f32 %v2306, %v2482
      %v2718 = vsub.f32 %v2309, %v2485
      %v2719 = vsub.f32 %v2347, %v2523
      %v2720 = vsub.f32 %v2350, %v2526
      %v2721 = vsub.f32 %v2584, %v2224
      %v2722 = vsub.f32 %v2587, %v2227
      %v2723 = vsub.f32 %v2625, %v2265
      %v2724 = vsub.f32 %v2628, %v2268
      %v2725 = vsub.f32 %v2666, %v2306
      %v2726 = vsub.f32 %v2669, %v2309
      %v2727 = vsub.f32 %v2707, %v2347
      %v2728 = vsub.f32 %v2710, %v2350
      %v2729 = vsub.f32 %v2721, %v2400
      %v2730 = vsub.f32 %v2722, %v2403
      %v2731 = vsub.f32 %v2723, %v2441
      %v2732 = vsub.f32 %v2724, %v2444
      %v2733 = vsub.f32 %v2725, %v2482
      %v2734 = vsub.f32 %v2726, %v2485
      %v2735 = vsub.f32 %v2727, %v2523
      %v2736 = vsub.f32 %v2728, %v2526
      %v2737 = vpack.c.bf16 %v2714, %v2713
      %v2738 = vpack.c.bf16 %v2716, %v2715
      %v2739 = vpack.c.bf16 %v2718, %v2717
      %v2740 = vpack.c.bf16 %v2720, %v2719
      %v2741 = vld [vmem:[%s12] sm:$0xf]
      %v2742 = vld [vmem:[%s12 + $0x4] sm:$0xf]
      %v2743 = vpack.c.bf16 %v2730, %v2729
      %v2744 = vpack.c.bf16 %v2732, %v2731
      %v2745 = vpack.c.bf16 %v2734, %v2733
      %v2746 = vpack.c.bf16 %v2736, %v2735
      %v2747 = vld [vmem:[%s13] sm:$0xf]
      %v2748 = vld [vmem:[%s13 + $0x4] sm:$0xf]
      %v2751 = vunpack.c.l.b16 %v2747
      %v2752 = vunpack.c.l.b16 %v2748
      %v2753 = vpack.c.b16 %v2752, %v2751
      %v2756 = vsel %vm834, %v2743, 0
      %v2759 = vsel %vm834, %v2744, 0
      %v2762 = vsel %vm834, %v2745, 0
      %v2765 = vsel %vm834, %v2746, 0
      %2767 = vmatprep.subr.bf16.mxu0 0
      %2768 = vmatpush1.bf16.msra.mxu0 0
      %2769 = vmatprep.subr.bf16.mxu0 0
      %2770 = vmatpush1.bf16.msra.mxu0 0
      %2771 = vmatprep.subr.bf16.mxu0 0
      %2772 = vmatpush1.bf16.msra.mxu0 0
      %2773 = vmatprep.subr.bf16.mxu0 0
      %2774 = vmatpush1.bf16.msra.mxu0 0
      %2775 = vmatprep.subr.bf16.mxu0 0
      %2776 = vmatpush1.bf16.msra.mxu0 0
      %2777 = vmatprep.subr.bf16.mxu0 0
      %2778 = vmatpush1.bf16.msra.mxu0 0
      %2779 = vmatprep.subr.bf16.mxu0 0
      %2780 = vmatpush1.bf16.msra.mxu0 0
      %2781 = vmatprep.subr.bf16.mxu0 0
      %2782 = vmatpush1.bf16.msra.mxu0 %v2753
      %2783 = vmatprep.subr.bf16.mxu0 0
      %2784 = vmatpush2.bf16.msra.mxu0 0
      %2785 = vmatprep.subr.bf16.mxu0 0
      %2786 = vmatpush2.bf16.msra.mxu0 0
      %2787 = vmatprep.subr.bf16.mxu0 0
      %2788 = vmatpush2.bf16.msra.mxu0 0
      %2789 = vmatprep.subr.bf16.mxu0 0
      %2790 = vmatpush2.bf16.msra.mxu0 0
      %2791 = vmatprep.subr.bf16.mxu0 0
      %2792 = vmatpush2.bf16.msra.mxu0 0
      %2793 = vmatprep.subr.bf16.mxu0 0
      %2794 = vmatpush2.bf16.msra.mxu0 0
      %2795 = vmatprep.subr.bf16.mxu0 0
      %2796 = vmatpush2.bf16.msra.mxu0 0
      %2797 = vmatprep.subr.bf16.mxu0 0
      %2798 = vmatpush2.bf16.msra.mxu0 0
      %2799 = vmatprep.mubr.bf16.mxu0 0
      %2800 = vmatmul.mubr.bf16.gmra.mxu0 %v2756
      %v2801 = vpop.f32.mrf.mxu0
      %v2802 = vadd.f32 0.0, %v2801
      %v2803 = vpop.f32.mrf.mxu0
      %v2804 = vpop.f32.mrf.mxu0
      %v2805 = vadd.f32 0.0, %v2804
      %v2806 = vpop.f32.mrf.mxu0
      %2807 = vmatprep.mubr.bf16.mxu0 0
      %2808 = vmatmul.mubr.bf16.gmra.mxu0 %v2759
      %v2809 = vpop.f32.mrf.mxu0
      %v2810 = vadd.f32 0.0, %v2809
      %v2811 = vpop.f32.mrf.mxu0
      %v2812 = vpop.f32.mrf.mxu0
      %v2813 = vadd.f32 0.0, %v2812
      %v2814 = vpop.f32.mrf.mxu0
      %2815 = vmatprep.mubr.bf16.mxu0 0
      %2816 = vmatmul.mubr.bf16.gmra.mxu0 %v2762
      %v2817 = vpop.f32.mrf.mxu0
      %v2818 = vadd.f32 0.0, %v2817
      %v2819 = vpop.f32.mrf.mxu0
      %v2820 = vpop.f32.mrf.mxu0
      %v2821 = vadd.f32 0.0, %v2820
      %v2822 = vpop.f32.mrf.mxu0
      %2823 = vmatprep.mubr.bf16.mxu0 0
      %2824 = vmatmul.mubr.bf16.gmra.mxu0 %v2765
      %v2825 = vpop.f32.mrf.mxu0
      %v2826 = vadd.f32 0.0, %v2825
      %v2827 = vpop.f32.mrf.mxu0
      %v2828 = vpop.f32.mrf.mxu0
      %v2829 = vadd.f32 0.0, %v2828
      %v2830 = vpop.f32.mrf.mxu0
      %2831 = vdwg.mxu0
      %v2834 = vunpack.c.l.b16 %v2741
      %v2835 = vunpack.c.l.b16 %v2742
      %v2836 = vpack.c.b16 %v2835, %v2834
      %v2839 = vsel %vm834, %v2737, 0
      %v2842 = vsel %vm834, %v2738, 0
      %v2845 = vsel %vm834, %v2739, 0
      %v2848 = vsel %vm834, %v2740, 0
      %2850 = vmatprep.subr.bf16.mxu0 0
      %2851 = vmatpush1.bf16.msra.mxu0 0
      %2852 = vmatprep.subr.bf16.mxu0 0
      %2853 = vmatpush1.bf16.msra.mxu0 0
      %2854 = vmatprep.subr.bf16.mxu0 0
      %2855 = vmatpush1.bf16.msra.mxu0 0
      %2856 = vmatprep.subr.bf16.mxu0 0
      %2857 = vmatpush1.bf16.msra.mxu0 0
      %2858 = vmatprep.subr.bf16.mxu0 0
      %2859 = vmatpush1.bf16.msra.mxu0 0
      %2860 = vmatprep.subr.bf16.mxu0 0
      %2861 = vmatpush1.bf16.msra.mxu0 0
      %2862 = vmatprep.subr.bf16.mxu0 0
      %2863 = vmatpush1.bf16.msra.mxu0 0
      %2864 = vmatprep.subr.bf16.mxu0 0
      %2865 = vmatpush1.bf16.msra.mxu0 %v2836
      %2866 = vmatprep.subr.bf16.mxu0 0
      %2867 = vmatpush2.bf16.msra.mxu0 0
      %2868 = vmatprep.subr.bf16.mxu0 0
      %2869 = vmatpush2.bf16.msra.mxu0 0
      %2870 = vmatprep.subr.bf16.mxu0 0
      %2871 = vmatpush2.bf16.msra.mxu0 0
      %2872 = vmatprep.subr.bf16.mxu0 0
      %2873 = vmatpush2.bf16.msra.mxu0 0
      %2874 = vmatprep.subr.bf16.mxu0 0
      %2875 = vmatpush2.bf16.msra.mxu0 0
      %2876 = vmatprep.subr.bf16.mxu0 0
      %2877 = vmatpush2.bf16.msra.mxu0 0
      %2878 = vmatprep.subr.bf16.mxu0 0
      %2879 = vmatpush2.bf16.msra.mxu0 0
      %2880 = vmatprep.subr.bf16.mxu0 0
      %2881 = vmatpush2.bf16.msra.mxu0 0
      %2882 = vmatprep.mubr.bf16.mxu0 0
      %2883 = vmatmul.mubr.bf16.gmra.mxu0 %v2839
      %v2884 = vpop.f32.mrf.mxu0
      %v2885 = vadd.f32 %v2802, %v2884
      %v2886 = vpop.f32.mrf.mxu0
      %v2887 = vpop.f32.mrf.mxu0
      %v2888 = vadd.f32 %v2805, %v2887
      %v2889 = vpop.f32.mrf.mxu0
      %2890 = vmatprep.mubr.bf16.mxu0 0
      %2891 = vmatmul.mubr.bf16.gmra.mxu0 %v2842
      %v2892 = vpop.f32.mrf.mxu0
      %v2893 = vadd.f32 %v2810, %v2892
      %v2894 = vpop.f32.mrf.mxu0
      %v2895 = vpop.f32.mrf.mxu0
      %v2896 = vadd.f32 %v2813, %v2895
      %v2897 = vpop.f32.mrf.mxu0
      %2898 = vmatprep.mubr.bf16.mxu0 0
      %2899 = vmatmul.mubr.bf16.gmra.mxu0 %v2845
      %v2900 = vpop.f32.mrf.mxu0
      %v2901 = vadd.f32 %v2818, %v2900
      %v2902 = vpop.f32.mrf.mxu0
      %v2903 = vpop.f32.mrf.mxu0
      %v2904 = vadd.f32 %v2821, %v2903
      %v2905 = vpop.f32.mrf.mxu0
      %2906 = vmatprep.mubr.bf16.mxu0 0
      %2907 = vmatmul.mubr.bf16.gmra.mxu0 %v2848
      %v2908 = vpop.f32.mrf.mxu0
      %v2909 = vadd.f32 %v2826, %v2908
      %v2910 = vpop.f32.mrf.mxu0
      %v2911 = vpop.f32.mrf.mxu0
      %v2912 = vadd.f32 %v2829, %v2911
      %v2913 = vpop.f32.mrf.mxu0
      %2914 = vdwg.mxu0
      %v2915 = vsub.f32 %v598, %v632
      %v2916 = vsub.f32 %v599, %v633
      %v2917 = vsub.f32 %v600, %v634
      %v2918 = vsub.f32 %v601, %v635
      %v2919 = vsub.f32 %v602, %v636
      %v2920 = vsub.f32 %v603, %v637
      %v2921 = vsub.f32 %v604, %v638
      %v2922 = vsub.f32 %v605, %v639
      %v2923 = vsub.f32 %v2915, %v2885
      %v2924 = vsub.f32 %v2916, %v2888
      %v2925 = vsub.f32 %v2917, %v2893
      %v2926 = vsub.f32 %v2918, %v2896
      %v2927 = vsub.f32 %v2919, %v2901
      %v2928 = vsub.f32 %v2920, %v2904
      %v2929 = vsub.f32 %v2921, %v2909
      %v2930 = vsub.f32 %v2922, %v2912
      %2931 = vst.msk [vmem:[%s596] sm:$0xff] %vm660, %v2923
      %2932 = vst.msk [vmem:[%s596 + $0x8] sm:$0xff] %vm660, %v2924
      %2933 = vst.msk [vmem:[%s596 + $0x10] sm:$0xff] %vm660, %v2925
      %2934 = vst.msk [vmem:[%s596 + $0x18] sm:$0xff] %vm660, %v2926
      %2935 = vst.msk [vmem:[%s596 + $0x20] sm:$0xff] %vm660, %v2927
      %2936 = vst.msk [vmem:[%s596 + $0x28] sm:$0xff] %vm660, %v2928
      %2937 = vst.msk [vmem:[%s596 + $0x30] sm:$0xff] %vm660, %v2929
      %2938 = vst.msk [vmem:[%s596 + $0x38] sm:$0xff] %vm660, %v2930
      %p2939 = scmp.lt.s32.totalorder %s30, 1
      %s2940 = scalar_select %p2939, %s30, 1
      %s2941 = smul.addr %s2940, 8
      %s2942 = smul.addr %s2941, 8
      %s2943 = scalar_lea.vmem %s18, %s2942
      // Predicated region
      $region93: #{tpu_custom_call.1} parent=91 // pred_check
        %p2944 = pneg %p436
      $region94: #{tpu_custom_call.1} parent=91 // pred_check_branch
        %2946 = sbr.rel (%p2944) target = $region96
      $region95: #{tpu_custom_call.1} parent=91 // pred_region
        _
      $region96: #{tpu_custom_call.1} parent=91 // pred_fallthru
        _
    $region92: #{tpu_custom_call.1} parent=5 // pred_fallthru
      _
    %p2947 = scmp.le.s32.totalorder 2, %s25
    // Predicated region
    $region97: #{tpu_custom_call.1} parent=5 // pred_check
      %p2948 = pneg %p2947
    $region98: #{tpu_custom_call.1} parent=5 // pred_check_branch
      %2950 = sbr.rel (%p2948) target = $region100
    $region99: #{tpu_custom_call.1} parent=5 // pred_region
      %s2951 = ssub.s32 %s25, 2
      // Predicated region
      $region101: #{tpu_custom_call.1} parent=99 // pred_check
        %p2952 = pneg %p442
      $region102: #{tpu_custom_call.1} parent=99 // pred_check_branch
        %2954 = sbr.rel (%p2952) target = $region104
      $region103: #{tpu_custom_call.1} parent=99 // pred_region
        %p2955 = scmp.lt.s32.totalorder %s31, 1
        %s2956 = scalar_select %p2955, %s31, 1
        %s2957 = smul.addr %s2956, 8
        %s2958 = smul.addr %s2957, 8
        %s2959 = scalar_lea.vmem %s18, %s2958
      $region104: #{tpu_custom_call.1} parent=99 // pred_fallthru
        _
    $region100: #{tpu_custom_call.1} parent=5 // pred_fallthru
      _
  $region6: #{tpu_custom_call.1} parent=0 // loop_footer
    %s29 = sadd.s32 1, %s25
  $region7: #{tpu_custom_call.1} parent=0 // loop_footer_branch
    %24 = sbr.rel target = $region3
  $region8: #{tpu_custom_call.1} parent=0 // loop_exit
    _

</llo_original>
